<compile_context>
chip_gen: v6e
topology: v6e:2x2x1
jax: 0.10.0
libtpu: 0.0.40
codegen_flags: <defaults>
</compile_context>

<pallas_src>
from functools import partial

import jax
import jax.numpy as jnp
from jax.experimental import pallas as pl
from jax.experimental.pallas import tpu as pltpu

# ----- problem sizes (small but consistent with the module's semantics) -----
B = 8                 # batch size
D_CLS = 768           # ViT hidden dim (module hard-codes features[:, -768:])
N_LAYERS = 2          # number of layers whose CLS features are concatenated
F = N_LAYERS * D_CLS  # total feature dim
C = 128               # head output classes (stand-in for 1000-way ImageNet head)
NUM_PROMPTS = 3       # prompt tokens
FITNESS_LAMBDA = 0.4
POPSIZE = 4           # small stand-in for CMA-ES popsize=27
P = POPSIZE + 1       # candidates evaluated per forward (+ previous best)
IMG_SHAPE = (B, 3, 16, 16)   # NCHW, as in PyTorch


# ----------------------------- Pallas kernel --------------------------------
def _foa_kernel(base_ref, pmix_ref, tstd_ref, tmean_ref, w_ref, b_ref,
                shiftlog_ref, out_ref, bmean_ref, loss_ref, cls_buf):
    """Single invocation: evaluates every candidate prompt.

    base_ref:    [B, F]      backbone projection of the images (shared)
    pmix_ref:    [P, F]      per-candidate prompt mixing
    tstd_ref:    [1, F]      train std   (train_info[0])
    tmean_ref:   [1, F]      train mean  (train_info[1])
    w_ref:       [D_CLS, C]  head weight (f32)
    b_ref:       [1, C]      head bias
    shiftlog_ref:[1, C]      shift_vector @ W  (hoisted, candidate-invariant)
    out_ref:     [P*B, C]    shifted logits for all candidates
    bmean_ref:   [P, D_CLS]  batch_mean[-768:] per candidate
    loss_ref:    [P, 1]      total loss per candidate
    cls_buf:     [P*B, D_CLS] VMEM scratch (staged CLS features)
    """
    n_cand, feat_dim = pmix_ref.shape
    n_batch = base_ref.shape[0]
    d_cls = w_ref.shape[0]
    cls_off = feat_dim - d_cls

    base = base_ref[...]                      # [B, F]
    tstd = tstd_ref[...]                      # [1, F]
    tmean = tmean_ref[...]                    # [1, F]

    inv_n = 1.0 / n_batch
    inv_nm1 = 1.0 / (n_batch - 1)

    disc_losses = []
    # Small unrolled loop: keeps only one [B, F] tile live at a time.
    for p in range(n_cand):
        # fused backbone-stub epilogue: features = tanh(base + prompt_mix)
        feat = jnp.tanh(base + pmix_ref[p:p + 1, :])          # [B, F]

        # torch.std_mean(features, dim=0): mean + unbiased std (ddof=1),
        # one-pass variance: var = (sum(x^2) - n*mean^2) / (n - 1)
        s1 = jnp.sum(feat, axis=0, keepdims=True)             # [1, F]
        s2 = jnp.sum(feat * feat, axis=0, keepdims=True)      # [1, F]
        mean = s1 * inv_n
        var = (s2 - float(n_batch) * mean * mean) * inv_nm1
        std = jnp.sqrt(jnp.maximum(var, 0.0))

        # MSELoss(reduction='none').sum() -> discrepancy loss, Eqn. (5)
        std_mse = jnp.sum((std - tstd) ** 2)
        mean_mse = jnp.sum((mean - tmean) ** 2)
        disc_losses.append(
            FITNESS_LAMBDA * (std_mse + mean_mse) * (n_batch / 64.0))

        # stage cls_features = features[:, -768:] for one batched head matmul
        cls_buf[p * n_batch:(p + 1) * n_batch, :] = feat[:, cls_off:]
        # caller only consumes batch_mean[-768:]
        bmean_ref[p:p + 1, :] = mean[:, cls_off:]

    # ONE MXU matmul for all candidates: [P*B, 768] @ [768, C], f32 accumulate.
    logits = jnp.dot(cls_buf[...], w_ref[...],
                     preferred_element_type=jnp.float32) + b_ref[...]  # [P*B, C]

    # softmax_entropy(logits) (temperature=1), numerically stable; exact divide.
    m = jnp.max(logits, axis=1, keepdims=True)
    z = logits - m
    ez = jnp.exp(z)
    s = jnp.sum(ez, axis=1, keepdims=True)                    # [P*B, 1]
    ent = jnp.log(s) - jnp.sum(ez * z, axis=1, keepdims=True) / s  # [P*B, 1]

    for p in range(n_cand):
        ent_p = jnp.sum(ent[p * n_batch:(p + 1) * n_batch, :])
        loss_ref[p:p + 1, :] = jnp.reshape(disc_losses[p] + ent_p, (1, 1))

    # activation shifting, Eqn. (7):
    #   head(cls + shift) = cls@W + b + shift@W ; shift@W hoisted (zeros if None)
    out_ref[...] = logits + shiftlog_ref[...]


@jax.jit
def foa_loss_pallas(base, pmix, train_std, train_mean, w_head, b_head, shift):
    """base: [B, F]; pmix: [P, F]; shift: [1, D_CLS] (zeros when None)."""
    n_cand = pmix.shape[0]
    shift_logits = shift @ w_head                      # [1, C], candidate-invariant

    vmem = pl.BlockSpec(memory_space=pltpu.MemorySpace.VMEM)
    out, bmean, loss = pl.pallas_call(
        _foa_kernel,
        out_shape=(
            jax.ShapeDtypeStruct((n_cand * B, C), jnp.float32),   # shifted logits
            jax.ShapeDtypeStruct((n_cand, D_CLS), jnp.float32),   # batch_mean[-768:]
            jax.ShapeDtypeStruct((n_cand, 1), jnp.float32),       # total loss
        ),
        in_specs=[vmem] * 7,
        out_specs=(vmem, vmem, vmem),
        scratch_shapes=[pltpu.VMEM((n_cand * B, D_CLS), jnp.float32)],
    )(base, pmix, train_std, train_mean, w_head, b_head, shift_logits)
    return out.reshape(n_cand, B, C), loss[:, 0], bmean


# ------------------------ plain-JAX reference (check) -----------------------
def foa_loss_ref(features, train_std, train_mean, w, b, shift):
    mean = features.mean(0, keepdims=True)
    var = ((features - mean) ** 2).sum(0, keepdims=True) / (features.shape[0] - 1)
    std = jnp.sqrt(var)
    disc = (FITNESS_LAMBDA * (((std - train_std) ** 2).sum()
                              + ((mean - train_mean) ** 2).sum())
            * features.shape[0] / 64.0)
    cls = features[:, -D_CLS:]
    logits = cls @ w + b
    ent = -(jax.nn.softmax(logits, 1) * jax.nn.log_softmax(logits, 1)).sum(1).sum()
    out = (cls + shift) @ w + b
    return out, disc + ent, mean[0, -D_CLS:]


# --------------------- fully-jitted per-batch FOA step ----------------------
@partial(jax.jit, static_argnames=("has_hist",))
def foa_step(images, key, params, best_prompts, hist_stat, has_hist):
    """One FOA.forward: sampling + backbone stub + kernel + selection + EMA."""
    # shift direction, Eqn. (8) (shift_vector is None on the first call -> zeros)
    if has_hist:
        shift = (params["train_mean"][0, -D_CLS:] - hist_stat).reshape(1, D_CLS)
    else:
        shift = jnp.zeros((1, D_CLS), jnp.float32)

    # TODO(synk): CMA-ES ask()/tell() (external `cma` library) has no Pallas/JAX
    # equivalent; candidates are deterministic Gaussian samples + previous best.
    cand = 0.1 * jax.random.normal(key, (POPSIZE, NUM_PROMPTS, D_CLS), jnp.float32)
    prompts_all = jnp.concatenate([cand, best_prompts[None]], axis=0)  # [P, ..]

    # TODO(synk): PromptViT.layers_cls_features_with_prompts is a full ViT; it is
    # stubbed as a linear projection + prompt mixing; the tanh epilogue is fused
    # into the Pallas kernel (base / pmix are passed, not the [P,B,F] features).
    x_flat = images.reshape(images.shape[0], -1)                           # [B, 3*16*16]
    base = x_flat @ params["w_img"]                                        # [B, F]
    pmix = prompts_all.reshape(prompts_all.shape[0], -1) @ params["w_prompt"]  # [P, F]

    outs, losses, bmeans = foa_loss_pallas(
        base, pmix, params["train_std"], params["train_mean"],
        params["w_head"], params["b_head"], shift)

    # best-candidate selection stays on device (no per-candidate host sync)
    best_idx = jnp.argmin(losses)
    best_out = outs[best_idx]
    best_loss = losses[best_idx]
    new_best_prompts = prompts_all[best_idx]

    # Eqn. (9): update overall test statistics from per-candidate batch means
    bm = bmeans.mean(0)
    new_hist = (0.9 * hist_stat + 0.1 * bm) if has_hist else bm
    return best_out, best_loss, new_best_prompts, new_hist


def foa_forward(images, params, state):
    has_hist = state["hist_stat"] is not None
    hist = state["hist_stat"] if has_hist else jnp.zeros((D_CLS,), jnp.float32)
    key = jax.random.PRNGKey(100 + state["step"])
    best_out, best_loss, best_prompts, new_hist = foa_step(
        images, key, params, state["best_prompts"], hist, has_hist)
    state["best_prompts"] = best_prompts
    state["hist_stat"] = new_hist
    state["step"] += 1
    return best_out, best_loss


# --------------------------------- main --------------------------------------
if __name__ == "__main__":
    key = jax.random.PRNGKey(0)
    k_img, k_wi, k_wp, k_wh, k_bh, k_ts, k_tm, k_p = jax.random.split(key, 8)

    images = jax.random.normal(k_img, IMG_SHAPE, jnp.float32)
    img_dim = IMG_SHAPE[1] * IMG_SHAPE[2] * IMG_SHAPE[3]

    params = {
        "w_img": 0.05 * jax.random.normal(k_wi, (img_dim, F), jnp.float32),
        "w_prompt": 0.05 * jax.random.normal(k_wp, (NUM_PROMPTS * D_CLS, F), jnp.float32),
        # vit.head: nn.Linear(768, C); stored transposed -> [768, C]
        "w_head": 0.02 * jax.random.normal(k_wh, (D_CLS, C), jnp.float32),
        "b_head": 0.01 * jax.random.normal(k_bh, (1, C), jnp.float32),
        # self.train_info = torch.std_mean(train_features, dim=0)
        "train_std": 0.5 + jnp.abs(jax.random.normal(k_ts, (1, F), jnp.float32)) * 0.2,
        "train_mean": 0.1 * jax.random.normal(k_tm, (1, F), jnp.float32),
    }

    state = {
        "hist_stat": None,
        "best_prompts": jnp.zeros((NUM_PROMPTS, D_CLS), jnp.float32),
        "step": 0,
    }

    # ---- correctness of the batched Pallas hot path vs plain-JAX reference ----
    test_prompts = 0.1 * jax.random.normal(k_p, (P, NUM_PROMPTS, D_CLS), jnp.float32)
    base = images.reshape(B, -1) @ params["w_img"]                         # [B, F]
    pmix = test_prompts.reshape(P, -1) @ params["w_prompt"]                # [P, F]
    feats_all = jnp.tanh(base[None, :, :] + pmix[:, None, :])              # [P, B, F]
    shift0 = 0.05 * jnp.ones((1, D_CLS), jnp.float32)

    out_k, loss_k, bmean_k = foa_loss_pallas(
        base, pmix, params["train_std"], params["train_mean"],
        params["w_head"], params["b_head"], shift0)
    jax.block_until_ready((out_k, loss_k, bmean_k))

    for i in range(P):
        out_r, loss_r, bmean_r = foa_loss_ref(
            feats_all[i], params["train_std"], params["train_mean"],
            params["w_head"], params["b_head"], shift0)
        assert jnp.allclose(out_k[i], out_r, rtol=5e-3, atol=5e-3), "logits mismatch"
        assert jnp.allclose(bmean_k[i], bmean_r, rtol=1e-4, atol=1e-4), "mean mismatch"
        assert abs(float(loss_k[i]) - float(loss_r)) <= 1e-2 + 1e-3 * abs(float(loss_r)), \
            "loss mismatch"

    # ---- two FOA.forward calls (second exercises a non-None shift_vector) ----
    best_out1, best_loss1 = foa_forward(images, params, state)
    best_out2, best_loss2 = foa_forward(images, params, state)
    jax.block_until_ready((best_out1, best_loss1, best_out2, best_loss2))

    print("KERNEL_OK")
</pallas_src>

<mosaic_0001>
module attributes {stable_mosaic.version = 11 : i64} {
  func.func @_foa_kernel(%arg0: memref<8x1536xf32, #tpu.memory_space<vmem>>, %arg1: memref<5x1536xf32, #tpu.memory_space<vmem>>, %arg2: memref<1x1536xf32, #tpu.memory_space<vmem>>, %arg3: memref<1x1536xf32, #tpu.memory_space<vmem>>, %arg4: memref<768x128xf32, #tpu.memory_space<vmem>>, %arg5: memref<1x128xf32, #tpu.memory_space<vmem>>, %arg6: memref<1x128xf32, #tpu.memory_space<vmem>>, %arg7: memref<40x128xf32, #tpu.memory_space<vmem>>, %arg8: memref<5x768xf32, #tpu.memory_space<vmem>>, %arg9: memref<5x1xf32, #tpu.memory_space<vmem>>, %arg10: memref<40x768xf32, #tpu.memory_space<vmem>>) attributes {dimension_semantics = [], scalar_prefetch = 0 : i64, scratch_operands = 1 : i64, tpu.core_type = #tpu.core_type<tc>} {
    %c0 = arith.constant 0 : index
    %c0_0 = arith.constant 0 : index
    %0 = vector.load %arg0[%c0, %c0_0] : memref<8x1536xf32, #tpu.memory_space<vmem>>, vector<8x1536xf32>
    %c0_1 = arith.constant 0 : index
    %c0_2 = arith.constant 0 : index
    %1 = vector.load %arg2[%c0_1, %c0_2] : memref<1x1536xf32, #tpu.memory_space<vmem>>, vector<1x1536xf32>
    %c0_3 = arith.constant 0 : index
    %c0_4 = arith.constant 0 : index
    %2 = vector.load %arg3[%c0_3, %c0_4] : memref<1x1536xf32, #tpu.memory_space<vmem>>, vector<1x1536xf32>
    %c0_5 = arith.constant 0 : index
    %c0_6 = arith.constant 0 : index
    %3 = vector.load %arg1[%c0_5, %c0_6] : memref<5x1536xf32, #tpu.memory_space<vmem>>, vector<1x1536xf32>
    %4 = vector.broadcast %3 : vector<1x1536xf32> to vector<8x1536xf32>
    %5 = arith.addf %0, %4 : vector<8x1536xf32>
    %6 = math.tanh %5 : vector<8x1536xf32>
    %cst = arith.constant dense<0.000000e+00> : vector<1536xf32>
    %7 = vector.multi_reduction <add>, %6, %cst [0] : vector<8x1536xf32> to vector<1536xf32>
    %8 = vector.shape_cast %7 : vector<1536xf32> to vector<1x1536xf32>
    %9 = arith.mulf %6, %6 : vector<8x1536xf32>
    %cst_7 = arith.constant dense<0.000000e+00> : vector<1536xf32>
    %10 = vector.multi_reduction <add>, %9, %cst_7 [0] : vector<8x1536xf32> to vector<1536xf32>
    %11 = vector.shape_cast %10 : vector<1536xf32> to vector<1x1536xf32>
    %cst_8 = arith.constant 1.250000e-01 : f32
    %12 = vector.broadcast %cst_8 : f32 to vector<1x1536xf32>
    %13 = arith.mulf %8, %12 : vector<1x1536xf32>
    %cst_9 = arith.constant 8.000000e+00 : f32
    %14 = vector.broadcast %cst_9 : f32 to vector<1x1536xf32>
    %15 = arith.mulf %14, %13 : vector<1x1536xf32>
    %16 = arith.mulf %15, %13 : vector<1x1536xf32>
    %17 = arith.subf %11, %16 : vector<1x1536xf32>
    %cst_10 = arith.constant 0.142857149 : f32
    %18 = vector.broadcast %cst_10 : f32 to vector<1x1536xf32>
    %19 = arith.mulf %17, %18 : vector<1x1536xf32>
    %cst_11 = arith.constant 0.000000e+00 : f32
    %20 = vector.broadcast %cst_11 : f32 to vector<1x1536xf32>
    %21 = arith.maximumf %19, %20 : vector<1x1536xf32>
    %22 = math.sqrt %21 : vector<1x1536xf32>
    %23 = arith.subf %22, %1 : vector<1x1536xf32>
    %24 = arith.mulf %23, %23 : vector<1x1536xf32>
    %25 = vector.shape_cast %24 : vector<1x1536xf32> to vector<1x1x1536xf32>
    %cst_12 = arith.constant dense<0.000000e+00> : vector<1xf32>
    %26 = vector.multi_reduction <add>, %25, %cst_12 [1, 2] : vector<1x1x1536xf32> to vector<1xf32>
    %27 = vector.shape_cast %26 : vector<1xf32> to vector<1x1x1xf32>
    %28 = vector.extract %27[0, 0, 0] : f32 from vector<1x1x1xf32>
    %29 = arith.subf %13, %2 : vector<1x1536xf32>
    %30 = arith.mulf %29, %29 : vector<1x1536xf32>
    %31 = vector.shape_cast %30 : vector<1x1536xf32> to vector<1x1x1536xf32>
    %cst_13 = arith.constant dense<0.000000e+00> : vector<1xf32>
    %32 = vector.multi_reduction <add>, %31, %cst_13 [1, 2] : vector<1x1x1536xf32> to vector<1xf32>
    %33 = vector.shape_cast %32 : vector<1xf32> to vector<1x1x1xf32>
    %34 = vector.extract %33[0, 0, 0] : f32 from vector<1x1x1xf32>
    %35 = arith.addf %28, %34 : f32
    %cst_14 = arith.constant 4.000000e-01 : f32
    %36 = arith.mulf %cst_14, %35 : f32
    %cst_15 = arith.constant 1.250000e-01 : f32
    %37 = arith.mulf %36, %cst_15 : f32
    %38 = vector.extract_strided_slice %6 {offsets = [0, 768], sizes = [8, 768], strides = [1, 1]} : vector<8x1536xf32> to vector<8x768xf32>
    %c0_16 = arith.constant 0 : index
    %c0_17 = arith.constant 0 : index
    %39 = vector.load %arg10[%c0_16, %c0_17] : memref<40x768xf32, #tpu.memory_space<vmem>>, vector<8x768xf32>
    tpu.vector_store %arg10[%c0_16, %c0_17], %38 {strides = array<i32>} : memref<40x768xf32, #tpu.memory_space<vmem>>, vector<8x768xf32>,
    %40 = vector.extract_strided_slice %13 {offsets = [0, 768], sizes = [1, 768], strides = [1, 1]} : vector<1x1536xf32> to vector<1x768xf32>
    %c0_18 = arith.constant 0 : index
    %c0_19 = arith.constant 0 : index
    %41 = vector.load %arg8[%c0_18, %c0_19] : memref<5x768xf32, #tpu.memory_space<vmem>>, vector<1x768xf32>
    tpu.vector_store %arg8[%c0_18, %c0_19], %40 {strides = array<i32>} : memref<5x768xf32, #tpu.memory_space<vmem>>, vector<1x768xf32>,
    %c1 = arith.constant 1 : index
    %c0_20 = arith.constant 0 : index
    %42 = vector.load %arg1[%c1, %c0_20] : memref<5x1536xf32, #tpu.memory_space<vmem>>, vector<1x1536xf32>
    %43 = vector.broadcast %42 : vector<1x1536xf32> to vector<8x1536xf32>
    %44 = arith.addf %0, %43 : vector<8x1536xf32>
    %45 = math.tanh %44 : vector<8x1536xf32>
    %cst_21 = arith.constant dense<0.000000e+00> : vector<1536xf32>
    %46 = vector.multi_reduction <add>, %45, %cst_21 [0] : vector<8x1536xf32> to vector<1536xf32>
    %47 = vector.shape_cast %46 : vector<1536xf32> to vector<1x1536xf32>
    %48 = arith.mulf %45, %45 : vector<8x1536xf32>
    %cst_22 = arith.constant dense<0.000000e+00> : vector<1536xf32>
    %49 = vector.multi_reduction <add>, %48, %cst_22 [0] : vector<8x1536xf32> to vector<1536xf32>
    %50 = vector.shape_cast %49 : vector<1536xf32> to vector<1x1536xf32>
    %cst_23 = arith.constant 1.250000e-01 : f32
    %51 = vector.broadcast %cst_23 : f32 to vector<1x1536xf32>
    %52 = arith.mulf %47, %51 : vector<1x1536xf32>
    %cst_24 = arith.constant 8.000000e+00 : f32
    %53 = vector.broadcast %cst_24 : f32 to vector<1x1536xf32>
    %54 = arith.mulf %53, %52 : vector<1x1536xf32>
    %55 = arith.mulf %54, %52 : vector<1x1536xf32>
    %56 = arith.subf %50, %55 : vector<1x1536xf32>
    %cst_25 = arith.constant 0.142857149 : f32
    %57 = vector.broadcast %cst_25 : f32 to vector<1x1536xf32>
    %58 = arith.mulf %56, %57 : vector<1x1536xf32>
    %cst_26 = arith.constant 0.000000e+00 : f32
    %59 = vector.broadcast %cst_26 : f32 to vector<1x1536xf32>
    %60 = arith.maximumf %58, %59 : vector<1x1536xf32>
    %61 = math.sqrt %60 : vector<1x1536xf32>
    %62 = arith.subf %61, %1 : vector<1x1536xf32>
    %63 = arith.mulf %62, %62 : vector<1x1536xf32>
    %64 = vector.shape_cast %63 : vector<1x1536xf32> to vector<1x1x1536xf32>
    %cst_27 = arith.constant dense<0.000000e+00> : vector<1xf32>
    %65 = vector.multi_reduction <add>, %64, %cst_27 [1, 2] : vector<1x1x1536xf32> to vector<1xf32>
    %66 = vector.shape_cast %65 : vector<1xf32> to vector<1x1x1xf32>
    %67 = vector.extract %66[0, 0, 0] : f32 from vector<1x1x1xf32>
    %68 = arith.subf %52, %2 : vector<1x1536xf32>
    %69 = arith.mulf %68, %68 : vector<1x1536xf32>
    %70 = vector.shape_cast %69 : vector<1x1536xf32> to vector<1x1x1536xf32>
    %cst_28 = arith.constant dense<0.000000e+00> : vector<1xf32>
    %71 = vector.multi_reduction <add>, %70, %cst_28 [1, 2] : vector<1x1x1536xf32> to vector<1xf32>
    %72 = vector.shape_cast %71 : vector<1xf32> to vector<1x1x1xf32>
    %73 = vector.extract %72[0, 0, 0] : f32 from vector<1x1x1xf32>
    %74 = arith.addf %67, %73 : f32
    %cst_29 = arith.constant 4.000000e-01 : f32
    %75 = arith.mulf %cst_29, %74 : f32
    %cst_30 = arith.constant 1.250000e-01 : f32
    %76 = arith.mulf %75, %cst_30 : f32
    %77 = vector.extract_strided_slice %45 {offsets = [0, 768], sizes = [8, 768], strides = [1, 1]} : vector<8x1536xf32> to vector<8x768xf32>
    %c8 = arith.constant 8 : index
    %c0_31 = arith.constant 0 : index
    %78 = vector.load %arg10[%c8, %c0_31] : memref<40x768xf32, #tpu.memory_space<vmem>>, vector<8x768xf32>
    tpu.vector_store %arg10[%c8, %c0_31], %77 {strides = array<i32>} : memref<40x768xf32, #tpu.memory_space<vmem>>, vector<8x768xf32>,
    %79 = vector.extract_strided_slice %52 {offsets = [0, 768], sizes = [1, 768], strides = [1, 1]} : vector<1x1536xf32> to vector<1x768xf32>
    %c1_32 = arith.constant 1 : index
    %c0_33 = arith.constant 0 : index
    %80 = vector.load %arg8[%c1_32, %c0_33] : memref<5x768xf32, #tpu.memory_space<vmem>>, vector<1x768xf32>
    tpu.vector_store %arg8[%c1_32, %c0_33], %79 {strides = array<i32>} : memref<5x768xf32, #tpu.memory_space<vmem>>, vector<1x768xf32>,
    %c2 = arith.constant 2 : index
    %c0_34 = arith.constant 0 : index
    %81 = vector.load %arg1[%c2, %c0_34] : memref<5x1536xf32, #tpu.memory_space<vmem>>, vector<1x1536xf32>
    %82 = vector.broadcast %81 : vector<1x1536xf32> to vector<8x1536xf32>
    %83 = arith.addf %0, %82 : vector<8x1536xf32>
    %84 = math.tanh %83 : vector<8x1536xf32>
    %cst_35 = arith.constant dense<0.000000e+00> : vector<1536xf32>
    %85 = vector.multi_reduction <add>, %84, %cst_35 [0] : vector<8x1536xf32> to vector<1536xf32>
    %86 = vector.shape_cast %85 : vector<1536xf32> to vector<1x1536xf32>
    %87 = arith.mulf %84, %84 : vector<8x1536xf32>
    %cst_36 = arith.constant dense<0.000000e+00> : vector<1536xf32>
    %88 = vector.multi_reduction <add>, %87, %cst_36 [0] : vector<8x1536xf32> to vector<1536xf32>
    %89 = vector.shape_cast %88 : vector<1536xf32> to vector<1x1536xf32>
    %cst_37 = arith.constant 1.250000e-01 : f32
    %90 = vector.broadcast %cst_37 : f32 to vector<1x1536xf32>
    %91 = arith.mulf %86, %90 : vector<1x1536xf32>
    %cst_38 = arith.constant 8.000000e+00 : f32
    %92 = vector.broadcast %cst_38 : f32 to vector<1x1536xf32>
    %93 = arith.mulf %92, %91 : vector<1x1536xf32>
    %94 = arith.mulf %93, %91 : vector<1x1536xf32>
    %95 = arith.subf %89, %94 : vector<1x1536xf32>
    %cst_39 = arith.constant 0.142857149 : f32
    %96 = vector.broadcast %cst_39 : f32 to vector<1x1536xf32>
    %97 = arith.mulf %95, %96 : vector<1x1536xf32>
    %cst_40 = arith.constant 0.000000e+00 : f32
    %98 = vector.broadcast %cst_40 : f32 to vector<1x1536xf32>
    %99 = arith.maximumf %97, %98 : vector<1x1536xf32>
    %100 = math.sqrt %99 : vector<1x1536xf32>
    %101 = arith.subf %100, %1 : vector<1x1536xf32>
    %102 = arith.mulf %101, %101 : vector<1x1536xf32>
    %103 = vector.shape_cast %102 : vector<1x1536xf32> to vector<1x1x1536xf32>
    %cst_41 = arith.constant dense<0.000000e+00> : vector<1xf32>
    %104 = vector.multi_reduction <add>, %103, %cst_41 [1, 2] : vector<1x1x1536xf32> to vector<1xf32>
    %105 = vector.shape_cast %104 : vector<1xf32> to vector<1x1x1xf32>
    %106 = vector.extract %105[0, 0, 0] : f32 from vector<1x1x1xf32>
    %107 = arith.subf %91, %2 : vector<1x1536xf32>
    %108 = arith.mulf %107, %107 : vector<1x1536xf32>
    %109 = vector.shape_cast %108 : vector<1x1536xf32> to vector<1x1x1536xf32>
    %cst_42 = arith.constant dense<0.000000e+00> : vector<1xf32>
    %110 = vector.multi_reduction <add>, %109, %cst_42 [1, 2] : vector<1x1x1536xf32> to vector<1xf32>
    %111 = vector.shape_cast %110 : vector<1xf32> to vector<1x1x1xf32>
    %112 = vector.extract %111[0, 0, 0] : f32 from vector<1x1x1xf32>
    %113 = arith.addf %106, %112 : f32
    %cst_43 = arith.constant 4.000000e-01 : f32
    %114 = arith.mulf %cst_43, %113 : f32
    %cst_44 = arith.constant 1.250000e-01 : f32
    %115 = arith.mulf %114, %cst_44 : f32
    %116 = vector.extract_strided_slice %84 {offsets = [0, 768], sizes = [8, 768], strides = [1, 1]} : vector<8x1536xf32> to vector<8x768xf32>
    %c16 = arith.constant 16 : index
    %c0_45 = arith.constant 0 : index
    %117 = vector.load %arg10[%c16, %c0_45] : memref<40x768xf32, #tpu.memory_space<vmem>>, vector<8x768xf32>
    tpu.vector_store %arg10[%c16, %c0_45], %116 {strides = array<i32>} : memref<40x768xf32, #tpu.memory_space<vmem>>, vector<8x768xf32>,
    %118 = vector.extract_strided_slice %91 {offsets = [0, 768], sizes = [1, 768], strides = [1, 1]} : vector<1x1536xf32> to vector<1x768xf32>
    %c2_46 = arith.constant 2 : index
    %c0_47 = arith.constant 0 : index
    %119 = vector.load %arg8[%c2_46, %c0_47] : memref<5x768xf32, #tpu.memory_space<vmem>>, vector<1x768xf32>
    tpu.vector_store %arg8[%c2_46, %c0_47], %118 {strides = array<i32>} : memref<5x768xf32, #tpu.memory_space<vmem>>, vector<1x768xf32>,
    %c3 = arith.constant 3 : index
    %c0_48 = arith.constant 0 : index
    %120 = vector.load %arg1[%c3, %c0_48] : memref<5x1536xf32, #tpu.memory_space<vmem>>, vector<1x1536xf32>
    %121 = vector.broadcast %120 : vector<1x1536xf32> to vector<8x1536xf32>
    %122 = arith.addf %0, %121 : vector<8x1536xf32>
    %123 = math.tanh %122 : vector<8x1536xf32>
    %cst_49 = arith.constant dense<0.000000e+00> : vector<1536xf32>
    %124 = vector.multi_reduction <add>, %123, %cst_49 [0] : vector<8x1536xf32> to vector<1536xf32>
    %125 = vector.shape_cast %124 : vector<1536xf32> to vector<1x1536xf32>
    %126 = arith.mulf %123, %123 : vector<8x1536xf32>
    %cst_50 = arith.constant dense<0.000000e+00> : vector<1536xf32>
    %127 = vector.multi_reduction <add>, %126, %cst_50 [0] : vector<8x1536xf32> to vector<1536xf32>
    %128 = vector.shape_cast %127 : vector<1536xf32> to vector<1x1536xf32>
    %cst_51 = arith.constant 1.250000e-01 : f32
    %129 = vector.broadcast %cst_51 : f32 to vector<1x1536xf32>
    %130 = arith.mulf %125, %129 : vector<1x1536xf32>
    %cst_52 = arith.constant 8.000000e+00 : f32
    %131 = vector.broadcast %cst_52 : f32 to vector<1x1536xf32>
    %132 = arith.mulf %131, %130 : vector<1x1536xf32>
    %133 = arith.mulf %132, %130 : vector<1x1536xf32>
    %134 = arith.subf %128, %133 : vector<1x1536xf32>
    %cst_53 = arith.constant 0.142857149 : f32
    %135 = vector.broadcast %cst_53 : f32 to vector<1x1536xf32>
    %136 = arith.mulf %134, %135 : vector<1x1536xf32>
    %cst_54 = arith.constant 0.000000e+00 : f32
    %137 = vector.broadcast %cst_54 : f32 to vector<1x1536xf32>
    %138 = arith.maximumf %136, %137 : vector<1x1536xf32>
    %139 = math.sqrt %138 : vector<1x1536xf32>
    %140 = arith.subf %139, %1 : vector<1x1536xf32>
    %141 = arith.mulf %140, %140 : vector<1x1536xf32>
    %142 = vector.shape_cast %141 : vector<1x1536xf32> to vector<1x1x1536xf32>
    %cst_55 = arith.constant dense<0.000000e+00> : vector<1xf32>
    %143 = vector.multi_reduction <add>, %142, %cst_55 [1, 2] : vector<1x1x1536xf32> to vector<1xf32>
    %144 = vector.shape_cast %143 : vector<1xf32> to vector<1x1x1xf32>
    %145 = vector.extract %144[0, 0, 0] : f32 from vector<1x1x1xf32>
    %146 = arith.subf %130, %2 : vector<1x1536xf32>
    %147 = arith.mulf %146, %146 : vector<1x1536xf32>
    %148 = vector.shape_cast %147 : vector<1x1536xf32> to vector<1x1x1536xf32>
    %cst_56 = arith.constant dense<0.000000e+00> : vector<1xf32>
    %149 = vector.multi_reduction <add>, %148, %cst_56 [1, 2] : vector<1x1x1536xf32> to vector<1xf32>
    %150 = vector.shape_cast %149 : vector<1xf32> to vector<1x1x1xf32>
    %151 = vector.extract %150[0, 0, 0] : f32 from vector<1x1x1xf32>
    %152 = arith.addf %145, %151 : f32
    %cst_57 = arith.constant 4.000000e-01 : f32
    %153 = arith.mulf %cst_57, %152 : f32
    %cst_58 = arith.constant 1.250000e-01 : f32
    %154 = arith.mulf %153, %cst_58 : f32
    %155 = vector.extract_strided_slice %123 {offsets = [0, 768], sizes = [8, 768], strides = [1, 1]} : vector<8x1536xf32> to vector<8x768xf32>
    %c24 = arith.constant 24 : index
    %c0_59 = arith.constant 0 : index
    %156 = vector.load %arg10[%c24, %c0_59] : memref<40x768xf32, #tpu.memory_space<vmem>>, vector<8x768xf32>
    tpu.vector_store %arg10[%c24, %c0_59], %155 {strides = array<i32>} : memref<40x768xf32, #tpu.memory_space<vmem>>, vector<8x768xf32>,
    %157 = vector.extract_strided_slice %130 {offsets = [0, 768], sizes = [1, 768], strides = [1, 1]} : vector<1x1536xf32> to vector<1x768xf32>
    %c3_60 = arith.constant 3 : index
    %c0_61 = arith.constant 0 : index
    %158 = vector.load %arg8[%c3_60, %c0_61] : memref<5x768xf32, #tpu.memory_space<vmem>>, vector<1x768xf32>
    tpu.vector_store %arg8[%c3_60, %c0_61], %157 {strides = array<i32>} : memref<5x768xf32, #tpu.memory_space<vmem>>, vector<1x768xf32>,
    %c4 = arith.constant 4 : index
    %c0_62 = arith.constant 0 : index
    %159 = vector.load %arg1[%c4, %c0_62] : memref<5x1536xf32, #tpu.memory_space<vmem>>, vector<1x1536xf32>
    %160 = vector.broadcast %159 : vector<1x1536xf32> to vector<8x1536xf32>
    %161 = arith.addf %0, %160 : vector<8x1536xf32>
    %162 = math.tanh %161 : vector<8x1536xf32>
    %cst_63 = arith.constant dense<0.000000e+00> : vector<1536xf32>
    %163 = vector.multi_reduction <add>, %162, %cst_63 [0] : vector<8x1536xf32> to vector<1536xf32>
    %164 = vector.shape_cast %163 : vector<1536xf32> to vector<1x1536xf32>
    %165 = arith.mulf %162, %162 : vector<8x1536xf32>
    %cst_64 = arith.constant dense<0.000000e+00> : vector<1536xf32>
    %166 = vector.multi_reduction <add>, %165, %cst_64 [0] : vector<8x1536xf32> to vector<1536xf32>
    %167 = vector.shape_cast %166 : vector<1536xf32> to vector<1x1536xf32>
    %cst_65 = arith.constant 1.250000e-01 : f32
    %168 = vector.broadcast %cst_65 : f32 to vector<1x1536xf32>
    %169 = arith.mulf %164, %168 : vector<1x1536xf32>
    %cst_66 = arith.constant 8.000000e+00 : f32
    %170 = vector.broadcast %cst_66 : f32 to vector<1x1536xf32>
    %171 = arith.mulf %170, %169 : vector<1x1536xf32>
    %172 = arith.mulf %171, %169 : vector<1x1536xf32>
    %173 = arith.subf %167, %172 : vector<1x1536xf32>
    %cst_67 = arith.constant 0.142857149 : f32
    %174 = vector.broadcast %cst_67 : f32 to vector<1x1536xf32>
    %175 = arith.mulf %173, %174 : vector<1x1536xf32>
    %cst_68 = arith.constant 0.000000e+00 : f32
    %176 = vector.broadcast %cst_68 : f32 to vector<1x1536xf32>
    %177 = arith.maximumf %175, %176 : vector<1x1536xf32>
    %178 = math.sqrt %177 : vector<1x1536xf32>
    %179 = arith.subf %178, %1 : vector<1x1536xf32>
    %180 = arith.mulf %179, %179 : vector<1x1536xf32>
    %181 = vector.shape_cast %180 : vector<1x1536xf32> to vector<1x1x1536xf32>
    %cst_69 = arith.constant dense<0.000000e+00> : vector<1xf32>
    %182 = vector.multi_reduction <add>, %181, %cst_69 [1, 2] : vector<1x1x1536xf32> to vector<1xf32>
    %183 = vector.shape_cast %182 : vector<1xf32> to vector<1x1x1xf32>
    %184 = vector.extract %183[0, 0, 0] : f32 from vector<1x1x1xf32>
    %185 = arith.subf %169, %2 : vector<1x1536xf32>
    %186 = arith.mulf %185, %185 : vector<1x1536xf32>
    %187 = vector.shape_cast %186 : vector<1x1536xf32> to vector<1x1x1536xf32>
    %cst_70 = arith.constant dense<0.000000e+00> : vector<1xf32>
    %188 = vector.multi_reduction <add>, %187, %cst_70 [1, 2] : vector<1x1x1536xf32> to vector<1xf32>
    %189 = vector.shape_cast %188 : vector<1xf32> to vector<1x1x1xf32>
    %190 = vector.extract %189[0, 0, 0] : f32 from vector<1x1x1xf32>
    %191 = arith.addf %184, %190 : f32
    %cst_71 = arith.constant 4.000000e-01 : f32
    %192 = arith.mulf %cst_71, %191 : f32
    %cst_72 = arith.constant 1.250000e-01 : f32
    %193 = arith.mulf %192, %cst_72 : f32
    %194 = vector.extract_strided_slice %162 {offsets = [0, 768], sizes = [8, 768], strides = [1, 1]} : vector<8x1536xf32> to vector<8x768xf32>
    %c32 = arith.constant 32 : index
    %c0_73 = arith.constant 0 : index
    %195 = vector.load %arg10[%c32, %c0_73] : memref<40x768xf32, #tpu.memory_space<vmem>>, vector<8x768xf32>
    tpu.vector_store %arg10[%c32, %c0_73], %194 {strides = array<i32>} : memref<40x768xf32, #tpu.memory_space<vmem>>, vector<8x768xf32>,
    %196 = vector.extract_strided_slice %169 {offsets = [0, 768], sizes = [1, 768], strides = [1, 1]} : vector<1x1536xf32> to vector<1x768xf32>
    %c4_74 = arith.constant 4 : index
    %c0_75 = arith.constant 0 : index
    %197 = vector.load %arg8[%c4_74, %c0_75] : memref<5x768xf32, #tpu.memory_space<vmem>>, vector<1x768xf32>
    tpu.vector_store %arg8[%c4_74, %c0_75], %196 {strides = array<i32>} : memref<5x768xf32, #tpu.memory_space<vmem>>, vector<1x768xf32>,
    %c0_76 = arith.constant 0 : index
    %c0_77 = arith.constant 0 : index
    %198 = vector.load %arg10[%c0_76, %c0_77] : memref<40x768xf32, #tpu.memory_space<vmem>>, vector<40x768xf32>
    %c0_78 = arith.constant 0 : index
    %c0_79 = arith.constant 0 : index
    %199 = vector.load %arg4[%c0_78, %c0_79] : memref<768x128xf32, #tpu.memory_space<vmem>>, vector<768x128xf32>
    %cst_80 = arith.constant dense<0.000000e+00> : vector<40x128xf32>
    %200 = tpu.matmul %198, %199, %cst_80 {dimension_numbers = #tpu.dot_dimension_numbers<[1], [0], [0], [1], [0, 0, 1, 1], [], []>} : vector<40x768xf32>, vector<768x128xf32>, vector<40x128xf32> -> vector<40x128xf32>
    %c0_81 = arith.constant 0 : index
    %c0_82 = arith.constant 0 : index
    %201 = vector.load %arg5[%c0_81, %c0_82] : memref<1x128xf32, #tpu.memory_space<vmem>>, vector<1x128xf32>
    %202 = vector.broadcast %201 : vector<1x128xf32> to vector<40x128xf32>
    %203 = arith.addf %200, %202 : vector<40x128xf32>
    %cst_83 = arith.constant dense<0xFF800000> : vector<40xf32>
    %204 = vector.multi_reduction <maximumf>, %203, %cst_83 [1] : vector<40x128xf32> to vector<40xf32>
    %205 = vector.shape_cast %204 : vector<40xf32> to vector<40x1xf32>
    %206 = vector.broadcast %205 : vector<40x1xf32> to vector<40x128xf32>
    %207 = arith.subf %203, %206 : vector<40x128xf32>
    %208 = math.exp %207 : vector<40x128xf32>
    %cst_84 = arith.constant dense<0.000000e+00> : vector<40xf32>
    %209 = vector.multi_reduction <add>, %208, %cst_84 [1] : vector<40x128xf32> to vector<40xf32>
    %210 = vector.shape_cast %209 : vector<40xf32> to vector<40x1xf32>
    %211 = math.log %210 : vector<40x1xf32>
    %212 = arith.mulf %208, %207 : vector<40x128xf32>
    %cst_85 = arith.constant dense<0.000000e+00> : vector<40xf32>
    %213 = vector.multi_reduction <add>, %212, %cst_85 [1] : vector<40x128xf32> to vector<40xf32>
    %214 = vector.shape_cast %213 : vector<40xf32> to vector<40x1xf32>
    %215 = arith.divf %214, %210 : vector<40x1xf32>
    %216 = arith.subf %211, %215 : vector<40x1xf32>
    %217 = vector.extract_strided_slice %216 {offsets = [0, 0], sizes = [8, 1], strides = [1, 1]} : vector<40x1xf32> to vector<8x1xf32>
    %218 = vector.shape_cast %217 : vector<8x1xf32> to vector<1x8x1xf32>
    %cst_86 = arith.constant dense<0.000000e+00> : vector<1xf32>
    %219 = vector.multi_reduction <add>, %218, %cst_86 [1, 2] : vector<1x8x1xf32> to vector<1xf32>
    %220 = vector.shape_cast %219 : vector<1xf32> to vector<1x1x1xf32>
    %221 = vector.extract %220[0, 0, 0] : f32 from vector<1x1x1xf32>
    %222 = arith.addf %37, %221 : f32
    %223 = vector.broadcast %222 : f32 to vector<1x1xf32>
    %c0_87 = arith.constant 0 : index
    %c0_88 = arith.constant 0 : index
    %224 = vector.load %arg9[%c0_87, %c0_88] : memref<5x1xf32, #tpu.memory_space<vmem>>, vector<1x1xf32>
    tpu.vector_store %arg9[%c0_87, %c0_88], %223 {strides = array<i32>} : memref<5x1xf32, #tpu.memory_space<vmem>>, vector<1x1xf32>,
    %225 = vector.extract_strided_slice %216 {offsets = [8, 0], sizes = [8, 1], strides = [1, 1]} : vector<40x1xf32> to vector<8x1xf32>
    %226 = vector.shape_cast %225 : vector<8x1xf32> to vector<1x8x1xf32>
    %cst_89 = arith.constant dense<0.000000e+00> : vector<1xf32>
    %227 = vector.multi_reduction <add>, %226, %cst_89 [1, 2] : vector<1x8x1xf32> to vector<1xf32>
    %228 = vector.shape_cast %227 : vector<1xf32> to vector<1x1x1xf32>
    %229 = vector.extract %228[0, 0, 0] : f32 from vector<1x1x1xf32>
    %230 = arith.addf %76, %229 : f32
    %231 = vector.broadcast %230 : f32 to vector<1x1xf32>
    %c1_90 = arith.constant 1 : index
    %c0_91 = arith.constant 0 : index
    %232 = vector.load %arg9[%c1_90, %c0_91] : memref<5x1xf32, #tpu.memory_space<vmem>>, vector<1x1xf32>
    tpu.vector_store %arg9[%c1_90, %c0_91], %231 {strides = array<i32>} : memref<5x1xf32, #tpu.memory_space<vmem>>, vector<1x1xf32>,
    %233 = vector.extract_strided_slice %216 {offsets = [16, 0], sizes = [8, 1], strides = [1, 1]} : vector<40x1xf32> to vector<8x1xf32>
    %234 = vector.shape_cast %233 : vector<8x1xf32> to vector<1x8x1xf32>
    %cst_92 = arith.constant dense<0.000000e+00> : vector<1xf32>
    %235 = vector.multi_reduction <add>, %234, %cst_92 [1, 2] : vector<1x8x1xf32> to vector<1xf32>
    %236 = vector.shape_cast %235 : vector<1xf32> to vector<1x1x1xf32>
    %237 = vector.extract %236[0, 0, 0] : f32 from vector<1x1x1xf32>
    %238 = arith.addf %115, %237 : f32
    %239 = vector.broadcast %238 : f32 to vector<1x1xf32>
    %c2_93 = arith.constant 2 : index
    %c0_94 = arith.constant 0 : index
    %240 = vector.load %arg9[%c2_93, %c0_94] : memref<5x1xf32, #tpu.memory_space<vmem>>, vector<1x1xf32>
    tpu.vector_store %arg9[%c2_93, %c0_94], %239 {strides = array<i32>} : memref<5x1xf32, #tpu.memory_space<vmem>>, vector<1x1xf32>,
    %241 = vector.extract_strided_slice %216 {offsets = [24, 0], sizes = [8, 1], strides = [1, 1]} : vector<40x1xf32> to vector<8x1xf32>
    %242 = vector.shape_cast %241 : vector<8x1xf32> to vector<1x8x1xf32>
    %cst_95 = arith.constant dense<0.000000e+00> : vector<1xf32>
    %243 = vector.multi_reduction <add>, %242, %cst_95 [1, 2] : vector<1x8x1xf32> to vector<1xf32>
    %244 = vector.shape_cast %243 : vector<1xf32> to vector<1x1x1xf32>
    %245 = vector.extract %244[0, 0, 0] : f32 from vector<1x1x1xf32>
    %246 = arith.addf %154, %245 : f32
    %247 = vector.broadcast %246 : f32 to vector<1x1xf32>
    %c3_96 = arith.constant 3 : index
    %c0_97 = arith.constant 0 : index
    %248 = vector.load %arg9[%c3_96, %c0_97] : memref<5x1xf32, #tpu.memory_space<vmem>>, vector<1x1xf32>
    tpu.vector_store %arg9[%c3_96, %c0_97], %247 {strides = array<i32>} : memref<5x1xf32, #tpu.memory_space<vmem>>, vector<1x1xf32>,
    %249 = vector.extract_strided_slice %216 {offsets = [32, 0], sizes = [8, 1], strides = [1, 1]} : vector<40x1xf32> to vector<8x1xf32>
    %250 = vector.shape_cast %249 : vector<8x1xf32> to vector<1x8x1xf32>
    %cst_98 = arith.constant dense<0.000000e+00> : vector<1xf32>
    %251 = vector.multi_reduction <add>, %250, %cst_98 [1, 2] : vector<1x8x1xf32> to vector<1xf32>
    %252 = vector.shape_cast %251 : vector<1xf32> to vector<1x1x1xf32>
    %253 = vector.extract %252[0, 0, 0] : f32 from vector<1x1x1xf32>
    %254 = arith.addf %193, %253 : f32
    %255 = vector.broadcast %254 : f32 to vector<1x1xf32>
    %c4_99 = arith.constant 4 : index
    %c0_100 = arith.constant 0 : index
    %256 = vector.load %arg9[%c4_99, %c0_100] : memref<5x1xf32, #tpu.memory_space<vmem>>, vector<1x1xf32>
    tpu.vector_store %arg9[%c4_99, %c0_100], %255 {strides = array<i32>} : memref<5x1xf32, #tpu.memory_space<vmem>>, vector<1x1xf32>,
    %c0_101 = arith.constant 0 : index
    %c0_102 = arith.constant 0 : index
    %257 = vector.load %arg6[%c0_101, %c0_102] : memref<1x128xf32, #tpu.memory_space<vmem>>, vector<1x128xf32>
    %258 = vector.broadcast %257 : vector<1x128xf32> to vector<40x128xf32>
    %259 = arith.addf %203, %258 : vector<40x128xf32>
    %c0_103 = arith.constant 0 : index
    %c0_104 = arith.constant 0 : index
    %260 = vector.load %arg7[%c0_103, %c0_104] : memref<40x128xf32, #tpu.memory_space<vmem>>, vector<40x128xf32>
    tpu.vector_store %arg7[%c0_103, %c0_104], %259 {strides = array<i32>} : memref<40x128xf32, #tpu.memory_space<vmem>>, vector<40x128xf32>,
    return
  }
}

</mosaic_0001>

<llo_original>
// kernel: foa_loss_pallas.1
$region0: #{foa_loss_pallas.1}
  #allocation0 [shape = 'u32[]', space=smem, size = 0x4, offset = 0x4, fixed_abs, tag = 'smem constant byte address 0x4 - core index']
  #allocation1 [shape = 'u32[144,128]{1,0:T(1,128)}', space=vmem, size = 0x12000, scoped, tag = 'internal scratch']
  #allocation2 [shape = 'f32[40,768]{1,0:T(8,128)}', space=vmem, size = 0x1e000, scoped, tag = 'scratch operand']
  %s0 = inlined_call_operand.hbm [shape: f32[8,1536], index: 0, kind: input, shape index: {}]
  %s1 = inlined_call_operand.hbm [shape: f32[5,1536], index: 1, kind: input, shape index: {}]
  %s2 = inlined_call_operand.vmem [shape: f32[1,1536], index: 2, kind: input, shape index: {}]
  %s3 = inlined_call_operand.vmem [shape: f32[1,1536], index: 3, kind: input, shape index: {}]
  %s4 = inlined_call_operand.vmem [shape: f32[768,128], index: 4, kind: input, shape index: {}]
  %s5 = inlined_call_operand.vmem [shape: f32[1,128], index: 5, kind: input, shape index: {}]
  %s6 = inlined_call_operand.vmem [shape: f32[1,128], index: 6, kind: input, shape index: {}]
  %s7 = inlined_call_operand.hbm [shape: f32[40,128], index: 7, kind: output, shape index: {0}]
  %s8 = inlined_call_operand.hbm [shape: f32[5,768], index: 8, kind: output, shape index: {1}]
  %s9 = inlined_call_operand.vmem [shape: f32[5,1], index: 9, kind: output, shape index: {2}]
  %10 = xla_tuple %s7, %s8, %s9
  %s11 = sld [smem:[#allocation0]]
  $region62: #{foa_loss_pallas.1} parent=0
    _
  %s13 = ssub.s32 1, %s11
  %s14 = scalar_select 0, %s13, %s11
  $region1: #{foa_loss_pallas.1} parent=0
    #allocation3 [shape = 'u8[49152]{0}', space=vmem, size = 0xc000, scoped, tag = 'input window, operand 0, single buffered']
    #allocation4 [shape = 's32[1]{0}', space=sflag, size = 0x4, scoped, tag = 'scoped memory for foa_loss_pallas.1']
    #allocation5 [shape = 's32[1]{0}', space=sflag, size = 0x4, scoped, tag = 'scoped memory for foa_loss_pallas.1']
    #allocation6 [shape = 'u8[49152]{0}', space=vmem, size = 0xc000, scoped, tag = 'input window, operand 1, single buffered']
    #allocation7 [shape = 's32[1]{0}', space=sflag, size = 0x4, scoped, tag = 'scoped memory for foa_loss_pallas.1']
    #allocation8 [shape = 'u8[20480]{0}', space=vmem, size = 0x5000, scoped, tag = 'output window, operand 0, single buffered']
    #allocation9 [shape = 'u8[24576]{0}', space=vmem, size = 0x6000, scoped, tag = 'output window, operand 1, single buffered']
    #allocation10 [shape = 's32[1]{0}', space=sflag, size = 0x4, scoped, tag = 'scoped memory for foa_loss_pallas.1']
    %15 = vsyncpa [#allocation4], 0
    %16 = vsyncpa [#allocation7], 0
    %17 = vsyncpa [#allocation5], 0
    %18 = vsyncpa [#allocation10], 0
    // Predicated region
    $region2: #{foa_loss_pallas.1} parent=1 // pred_check
      _
    $region3: #{foa_loss_pallas.1} parent=1 // pred_check_branch
      %20 = sbr.rel (0) target = $region5
    $region4: #{foa_loss_pallas.1} parent=1 // pred_region
      %s22 = ssub.s32 1536, 1536
      %23 = vsyncadd [#allocation4], %s22
      %s25 = sshll.u32 [#allocation3], 4
      %s26 = int_to_ptr.vmem [resolvable:$true] %s25
      %28 = dma.hbm_to_vmem [thread:$0]  %s0, 1536, %s26, [#allocation4]
    $region5: #{foa_loss_pallas.1} parent=1 // pred_fallthru
      _
    // Predicated region
    $region6: #{foa_loss_pallas.1} parent=1 // pred_check
      _
    $region7: #{foa_loss_pallas.1} parent=1 // pred_check_branch
      %30 = sbr.rel (0) target = $region9
    $region8: #{foa_loss_pallas.1} parent=1 // pred_region
      %s32 = ssub.s32 1536, 1536
      %33 = vsyncadd [#allocation7], %s32
      %s35 = sshll.u32 [#allocation6], 4
      %s36 = int_to_ptr.vmem [resolvable:$true] %s35
      %38 = dma.hbm_to_vmem [thread:$0]  %s1, 1536, %s36, [#allocation7]
    $region9: #{foa_loss_pallas.1} parent=1 // pred_fallthru
      _
    // Predicated region
    $region10: #{foa_loss_pallas.1} parent=1 // pred_check
      _
    $region11: #{foa_loss_pallas.1} parent=1 // pred_check_branch
      %40 = sbr.rel (0) target = $region13
    $region12: #{foa_loss_pallas.1} parent=1 // pred_region
      _
    $region13: #{foa_loss_pallas.1} parent=1 // pred_fallthru
      _
    // Predicated region
    $region14: #{foa_loss_pallas.1} parent=1 // pred_check
      _
    $region15: #{foa_loss_pallas.1} parent=1 // pred_check_branch
      %42 = sbr.rel (0) target = $region17
    $region16: #{foa_loss_pallas.1} parent=1 // pred_region
      _
    $region17: #{foa_loss_pallas.1} parent=1 // pred_fallthru
      _
    // Predicated region
    $region18: #{foa_loss_pallas.1} parent=1 // pred_check
      _
    $region19: #{foa_loss_pallas.1} parent=1 // pred_check_branch
      %44 = sbr.rel (0) target = $region21
    $region20: #{foa_loss_pallas.1} parent=1 // pred_region
      _
    $region21: #{foa_loss_pallas.1} parent=1 // pred_fallthru
      _
    // Predicated region
    $region22: #{foa_loss_pallas.1} parent=1 // pred_check
      _
    $region23: #{foa_loss_pallas.1} parent=1 // pred_check_branch
      %46 = sbr.rel (0) target = $region25
    $region24: #{foa_loss_pallas.1} parent=1 // pred_region
      _
    $region25: #{foa_loss_pallas.1} parent=1 // pred_fallthru
      _
    // Predicated region
    $region26: #{foa_loss_pallas.1} parent=1 // pred_check
      _
    $region27: #{foa_loss_pallas.1} parent=1 // pred_check_branch
      %48 = sbr.rel (0) target = $region29
    $region28: #{foa_loss_pallas.1} parent=1 // pred_region
      _
    $region29: #{foa_loss_pallas.1} parent=1 // pred_fallthru
      _
    // Predicated region
    $region30: #{foa_loss_pallas.1} parent=1 // pred_check
      _
    $region31: #{foa_loss_pallas.1} parent=1 // pred_check_branch
      %50 = sbr.rel (0) target = $region33
    $region32: #{foa_loss_pallas.1} parent=1 // pred_region
      %51 = dma.done [#allocation4], 1536
    $region33: #{foa_loss_pallas.1} parent=1 // pred_fallthru
      _
    // Predicated region
    $region34: #{foa_loss_pallas.1} parent=1 // pred_check
      _
    $region35: #{foa_loss_pallas.1} parent=1 // pred_check_branch
      %53 = sbr.rel (0) target = $region37
    $region36: #{foa_loss_pallas.1} parent=1 // pred_region
      %54 = dma.done [#allocation7], 1536
    $region37: #{foa_loss_pallas.1} parent=1 // pred_fallthru
      _
    %v55 = vld [vmem:[#allocation3] sm:$0xff]
    %v56 = vld [vmem:[#allocation3 + $0x8] sm:$0xff]
    %v57 = vld [vmem:[#allocation3 + $0x10] sm:$0xff]
    %v58 = vld [vmem:[#allocation3 + $0x18] sm:$0xff]
    %v59 = vld [vmem:[#allocation3 + $0x20] sm:$0xff]
    %v60 = vld [vmem:[#allocation3 + $0x28] sm:$0xff]
    %v61 = vld [vmem:[#allocation3 + $0x30] sm:$0xff]
    %v62 = vld [vmem:[#allocation3 + $0x38] sm:$0xff]
    %v63 = vld [vmem:[#allocation3 + $0x40] sm:$0xff]
    %v64 = vld [vmem:[#allocation3 + $0x48] sm:$0xff]
    %v65 = vld [vmem:[#allocation3 + $0x50] sm:$0xff]
    %v66 = vld [vmem:[#allocation3 + $0x58] sm:$0xff]
    %v67 = vld [vmem:[%s2] sm:$0xff]
    %v68 = vld [vmem:[%s2 + $0x8] sm:$0xf]
    %v69 = vld [vmem:[%s3] sm:$0xff]
    %v70 = vld [vmem:[%s3 + $0x8] sm:$0xf]
    %v71 = vld [vmem:[#allocation6] ss:$8 sm:$0xf]
    %v72 = vld [vmem:[#allocation6] ss:$8 sm:$0xf0]
    %v73 = vor.u32 %v71, %v72
    %s74 = scalar_lea.vmem [#allocation6], 64
    %v75 = vld [vmem:[%s74] ss:$8 sm:$0xf]
    %v78 = vlaneseq
    %v79 = vshrl.u32 %v78, 7
    %v80 = vsub.s32 0, %v79
    %v81 = vrot.slane %v73, %v80
    %v82 = vlaneseq
    %v83 = vshrl.u32 %v82, 7
    %v84 = vsub.s32 1, %v83
    %v85 = vrot.slane %v73, %v84
    %v86 = vlaneseq
    %v87 = vshrl.u32 %v86, 7
    %v88 = vsub.s32 2, %v87
    %v89 = vrot.slane %v73, %v88
    %v90 = vlaneseq
    %v91 = vshrl.u32 %v90, 7
    %v92 = vsub.s32 3, %v91
    %v93 = vrot.slane %v73, %v92
    %v94 = vlaneseq
    %v95 = vshrl.u32 %v94, 7
    %v96 = vsub.s32 4, %v95
    %v97 = vrot.slane %v73, %v96
    %v98 = vlaneseq
    %v99 = vshrl.u32 %v98, 7
    %v100 = vsub.s32 5, %v99
    %v101 = vrot.slane %v73, %v100
    %v102 = vlaneseq
    %v103 = vshrl.u32 %v102, 7
    %v104 = vsub.s32 6, %v103
    %v105 = vrot.slane %v73, %v104
    %v106 = vlaneseq
    %v107 = vshrl.u32 %v106, 7
    %v108 = vsub.s32 7, %v107
    %v109 = vrot.slane %v73, %v108
    %v110 = vlaneseq
    %v111 = vshrl.u32 %v110, 7
    %v112 = vsub.s32 0, %v111
    %v113 = vrot.slane %v75, %v112
    %v114 = vlaneseq
    %v115 = vshrl.u32 %v114, 7
    %v116 = vsub.s32 1, %v115
    %v117 = vrot.slane %v75, %v116
    %v118 = vlaneseq
    %v119 = vshrl.u32 %v118, 7
    %v120 = vsub.s32 2, %v119
    %v121 = vrot.slane %v75, %v120
    %v122 = vlaneseq
    %v123 = vshrl.u32 %v122, 7
    %v124 = vsub.s32 3, %v123
    %v125 = vrot.slane %v75, %v124
    %v138 = vadd.f32 %v55, %v81
    %v139 = vadd.f32 %v56, %v85
    %v140 = vadd.f32 %v57, %v89
    %v141 = vadd.f32 %v58, %v93
    %v142 = vadd.f32 %v59, %v97
    %v143 = vadd.f32 %v60, %v101
    %v144 = vadd.f32 %v61, %v105
    %v145 = vadd.f32 %v62, %v109
    %v146 = vadd.f32 %v63, %v113
    %v147 = vadd.f32 %v64, %v117
    %v148 = vadd.f32 %v65, %v121
    %v149 = vadd.f32 %v66, %v125
    %v150 = vtanh.pop %v138
    %v151 = vtanh.pop %v139
    %v152 = vtanh.pop %v140
    %v153 = vtanh.pop %v141
    %v154 = vtanh.pop %v142
    %v155 = vtanh.pop %v143
    %v156 = vtanh.pop %v144
    %v157 = vtanh.pop %v145
    %v158 = vtanh.pop %v146
    %v159 = vtanh.pop %v147
    %v160 = vtanh.pop %v148
    %v161 = vtanh.pop %v149
    %v162 = vrot.slane %v150, 4
    %v163 = vadd.f32 %v150, %v162
    %v164 = vrot.slane %v163, 2
    %v165 = vadd.f32 %v163, %v164
    %v166 = vrot.slane %v165, 1
    %v167 = vadd.f32 %v165, %v166
    %v168 = vrot.slane %v151, 4
    %v169 = vadd.f32 %v151, %v168
    %v170 = vrot.slane %v169, 2
    %v171 = vadd.f32 %v169, %v170
    %v172 = vrot.slane %v171, 1
    %v173 = vadd.f32 %v171, %v172
    %v174 = vrot.slane %v152, 4
    %v175 = vadd.f32 %v152, %v174
    %v176 = vrot.slane %v175, 2
    %v177 = vadd.f32 %v175, %v176
    %v178 = vrot.slane %v177, 1
    %v179 = vadd.f32 %v177, %v178
    %v180 = vrot.slane %v153, 4
    %v181 = vadd.f32 %v153, %v180
    %v182 = vrot.slane %v181, 2
    %v183 = vadd.f32 %v181, %v182
    %v184 = vrot.slane %v183, 1
    %v185 = vadd.f32 %v183, %v184
    %v186 = vrot.slane %v154, 4
    %v187 = vadd.f32 %v154, %v186
    %v188 = vrot.slane %v187, 2
    %v189 = vadd.f32 %v187, %v188
    %v190 = vrot.slane %v189, 1
    %v191 = vadd.f32 %v189, %v190
    %v192 = vrot.slane %v155, 4
    %v193 = vadd.f32 %v155, %v192
    %v194 = vrot.slane %v193, 2
    %v195 = vadd.f32 %v193, %v194
    %v196 = vrot.slane %v195, 1
    %v197 = vadd.f32 %v195, %v196
    %v198 = vrot.slane %v156, 4
    %v199 = vadd.f32 %v156, %v198
    %v200 = vrot.slane %v199, 2
    %v201 = vadd.f32 %v199, %v200
    %v202 = vrot.slane %v201, 1
    %v203 = vadd.f32 %v201, %v202
    %v204 = vrot.slane %v157, 4
    %v205 = vadd.f32 %v157, %v204
    %v206 = vrot.slane %v205, 2
    %v207 = vadd.f32 %v205, %v206
    %v208 = vrot.slane %v207, 1
    %v209 = vadd.f32 %v207, %v208
    %v210 = vrot.slane %v158, 4
    %v211 = vadd.f32 %v158, %v210
    %v212 = vrot.slane %v211, 2
    %v213 = vadd.f32 %v211, %v212
    %v214 = vrot.slane %v213, 1
    %v215 = vadd.f32 %v213, %v214
    %v216 = vrot.slane %v159, 4
    %v217 = vadd.f32 %v159, %v216
    %v218 = vrot.slane %v217, 2
    %v219 = vadd.f32 %v217, %v218
    %v220 = vrot.slane %v219, 1
    %v221 = vadd.f32 %v219, %v220
    %v222 = vrot.slane %v160, 4
    %v223 = vadd.f32 %v160, %v222
    %v224 = vrot.slane %v223, 2
    %v225 = vadd.f32 %v223, %v224
    %v226 = vrot.slane %v225, 1
    %v227 = vadd.f32 %v225, %v226
    %v228 = vrot.slane %v161, 4
    %v229 = vadd.f32 %v161, %v228
    %v230 = vrot.slane %v229, 2
    %v231 = vadd.f32 %v229, %v230
    %v232 = vrot.slane %v231, 1
    %v233 = vadd.f32 %v231, %v232
    %v234 = vmul.f32 %v150, %v150
    %v235 = vmul.f32 %v151, %v151
    %v236 = vmul.f32 %v152, %v152
    %v237 = vmul.f32 %v153, %v153
    %v238 = vmul.f32 %v154, %v154
    %v239 = vmul.f32 %v155, %v155
    %v240 = vmul.f32 %v156, %v156
    %v241 = vmul.f32 %v157, %v157
    %v242 = vmul.f32 %v158, %v158
    %v243 = vmul.f32 %v159, %v159
    %v244 = vmul.f32 %v160, %v160
    %v245 = vmul.f32 %v161, %v161
    %v246 = vrot.slane %v234, 4
    %v247 = vadd.f32 %v234, %v246
    %v248 = vrot.slane %v247, 2
    %v249 = vadd.f32 %v247, %v248
    %v250 = vrot.slane %v249, 1
    %v251 = vadd.f32 %v249, %v250
    %v252 = vrot.slane %v235, 4
    %v253 = vadd.f32 %v235, %v252
    %v254 = vrot.slane %v253, 2
    %v255 = vadd.f32 %v253, %v254
    %v256 = vrot.slane %v255, 1
    %v257 = vadd.f32 %v255, %v256
    %v258 = vrot.slane %v236, 4
    %v259 = vadd.f32 %v236, %v258
    %v260 = vrot.slane %v259, 2
    %v261 = vadd.f32 %v259, %v260
    %v262 = vrot.slane %v261, 1
    %v263 = vadd.f32 %v261, %v262
    %v264 = vrot.slane %v237, 4
    %v265 = vadd.f32 %v237, %v264
    %v266 = vrot.slane %v265, 2
    %v267 = vadd.f32 %v265, %v266
    %v268 = vrot.slane %v267, 1
    %v269 = vadd.f32 %v267, %v268
    %v270 = vrot.slane %v238, 4
    %v271 = vadd.f32 %v238, %v270
    %v272 = vrot.slane %v271, 2
    %v273 = vadd.f32 %v271, %v272
    %v274 = vrot.slane %v273, 1
    %v275 = vadd.f32 %v273, %v274
    %v276 = vrot.slane %v239, 4
    %v277 = vadd.f32 %v239, %v276
    %v278 = vrot.slane %v277, 2
    %v279 = vadd.f32 %v277, %v278
    %v280 = vrot.slane %v279, 1
    %v281 = vadd.f32 %v279, %v280
    %v282 = vrot.slane %v240, 4
    %v283 = vadd.f32 %v240, %v282
    %v284 = vrot.slane %v283, 2
    %v285 = vadd.f32 %v283, %v284
    %v286 = vrot.slane %v285, 1
    %v287 = vadd.f32 %v285, %v286
    %v288 = vrot.slane %v241, 4
    %v289 = vadd.f32 %v241, %v288
    %v290 = vrot.slane %v289, 2
    %v291 = vadd.f32 %v289, %v290
    %v292 = vrot.slane %v291, 1
    %v293 = vadd.f32 %v291, %v292
    %v294 = vrot.slane %v242, 4
    %v295 = vadd.f32 %v242, %v294
    %v296 = vrot.slane %v295, 2
    %v297 = vadd.f32 %v295, %v296
    %v298 = vrot.slane %v297, 1
    %v299 = vadd.f32 %v297, %v298
    %v300 = vrot.slane %v243, 4
    %v301 = vadd.f32 %v243, %v300
    %v302 = vrot.slane %v301, 2
    %v303 = vadd.f32 %v301, %v302
    %v304 = vrot.slane %v303, 1
    %v305 = vadd.f32 %v303, %v304
    %v306 = vrot.slane %v244, 4
    %v307 = vadd.f32 %v244, %v306
    %v308 = vrot.slane %v307, 2
    %v309 = vadd.f32 %v307, %v308
    %v310 = vrot.slane %v309, 1
    %v311 = vadd.f32 %v309, %v310
    %v312 = vrot.slane %v245, 4
    %v313 = vadd.f32 %v245, %v312
    %v314 = vrot.slane %v313, 2
    %v315 = vadd.f32 %v313, %v314
    %v316 = vrot.slane %v315, 1
    %v317 = vadd.f32 %v315, %v316
    %v318 = vmul.f32 %v167, 0.125
    %v319 = vmul.f32 %v173, 0.125
    %v320 = vmul.f32 %v179, 0.125
    %v321 = vmul.f32 %v185, 0.125
    %v322 = vmul.f32 %v191, 0.125
    %v323 = vmul.f32 %v197, 0.125
    %v324 = vmul.f32 %v203, 0.125
    %v325 = vmul.f32 %v209, 0.125
    %v326 = vmul.f32 %v215, 0.125
    %v327 = vmul.f32 %v221, 0.125
    %v328 = vmul.f32 %v227, 0.125
    %v329 = vmul.f32 %v233, 0.125
    %v330 = vmul.f32 %v318, 8.0
    %v331 = vmul.f32 %v319, 8.0
    %v332 = vmul.f32 %v320, 8.0
    %v333 = vmul.f32 %v321, 8.0
    %v334 = vmul.f32 %v322, 8.0
    %v335 = vmul.f32 %v323, 8.0
    %v336 = vmul.f32 %v324, 8.0
    %v337 = vmul.f32 %v325, 8.0
    %v338 = vmul.f32 %v326, 8.0
    %v339 = vmul.f32 %v327, 8.0
    %v340 = vmul.f32 %v328, 8.0
    %v341 = vmul.f32 %v329, 8.0
    %v342 = vmul.f32 %v330, %v318
    %v343 = vmul.f32 %v331, %v319
    %v344 = vmul.f32 %v332, %v320
    %v345 = vmul.f32 %v333, %v321
    %v346 = vmul.f32 %v334, %v322
    %v347 = vmul.f32 %v335, %v323
    %v348 = vmul.f32 %v336, %v324
    %v349 = vmul.f32 %v337, %v325
    %v350 = vmul.f32 %v338, %v326
    %v351 = vmul.f32 %v339, %v327
    %v352 = vmul.f32 %v340, %v328
    %v353 = vmul.f32 %v341, %v329
    %v354 = vsub.f32 %v251, %v342
    %v355 = vsub.f32 %v257, %v343
    %v356 = vsub.f32 %v263, %v344
    %v357 = vsub.f32 %v269, %v345
    %v358 = vsub.f32 %v275, %v346
    %v359 = vsub.f32 %v281, %v347
    %v360 = vsub.f32 %v287, %v348
    %v361 = vsub.f32 %v293, %v349
    %v362 = vsub.f32 %v299, %v350
    %v363 = vsub.f32 %v305, %v351
    %v364 = vsub.f32 %v311, %v352
    %v365 = vsub.f32 %v317, %v353
    %v366 = vmul.f32 %v354, 0.14285715
    %v367 = vmul.f32 %v355, 0.14285715
    %v368 = vmul.f32 %v356, 0.14285715
    %v369 = vmul.f32 %v357, 0.14285715
    %v370 = vmul.f32 %v358, 0.14285715
    %v371 = vmul.f32 %v359, 0.14285715
    %v372 = vmul.f32 %v360, 0.14285715
    %v373 = vmul.f32 %v361, 0.14285715
    %v374 = vmul.f32 %v362, 0.14285715
    %v375 = vmul.f32 %v363, 0.14285715
    %v376 = vmul.f32 %v364, 0.14285715
    %v377 = vmul.f32 %v365, 0.14285715
    %v378 = vmax.f32 %v366, 0.0
    %v379 = vmax.f32 %v367, 0.0
    %v380 = vmax.f32 %v368, 0.0
    %v381 = vmax.f32 %v369, 0.0
    %v382 = vmax.f32 %v370, 0.0
    %v383 = vmax.f32 %v371, 0.0
    %v384 = vmax.f32 %v372, 0.0
    %v385 = vmax.f32 %v373, 0.0
    %v386 = vmax.f32 %v374, 0.0
    %v387 = vmax.f32 %v375, 0.0
    %v388 = vmax.f32 %v376, 0.0
    %v389 = vmax.f32 %v377, 0.0
    %v390 = vrsqrt.pop %v378
    %v391 = vmul.f32 %v378, %v390
    %vm392 = vcmp.eq.f32.partialorder %v378, inf
    %v393 = vsel %vm392, %v378, %v391
    %vm394 = vcmp.eq.f32.partialorder %v378, 0.0
    %v395 = vand.u32 %v378, 2147483648
    %v396 = vsel %vm394, %v395, %v393
    %v397 = vrsqrt.pop %v379
    %v398 = vmul.f32 %v379, %v397
    %vm399 = vcmp.eq.f32.partialorder %v379, inf
    %v400 = vsel %vm399, %v379, %v398
    %vm401 = vcmp.eq.f32.partialorder %v379, 0.0
    %v402 = vand.u32 %v379, 2147483648
    %v403 = vsel %vm401, %v402, %v400
    %v404 = vrsqrt.pop %v380
    %v405 = vmul.f32 %v380, %v404
    %vm406 = vcmp.eq.f32.partialorder %v380, inf
    %v407 = vsel %vm406, %v380, %v405
    %vm408 = vcmp.eq.f32.partialorder %v380, 0.0
    %v409 = vand.u32 %v380, 2147483648
    %v410 = vsel %vm408, %v409, %v407
    %v411 = vrsqrt.pop %v381
    %v412 = vmul.f32 %v381, %v411
    %vm413 = vcmp.eq.f32.partialorder %v381, inf
    %v414 = vsel %vm413, %v381, %v412
    %vm415 = vcmp.eq.f32.partialorder %v381, 0.0
    %v416 = vand.u32 %v381, 2147483648
    %v417 = vsel %vm415, %v416, %v414
    %v418 = vrsqrt.pop %v382
    %v419 = vmul.f32 %v382, %v418
    %vm420 = vcmp.eq.f32.partialorder %v382, inf
    %v421 = vsel %vm420, %v382, %v419
    %vm422 = vcmp.eq.f32.partialorder %v382, 0.0
    %v423 = vand.u32 %v382, 2147483648
    %v424 = vsel %vm422, %v423, %v421
    %v425 = vrsqrt.pop %v383
    %v426 = vmul.f32 %v383, %v425
    %vm427 = vcmp.eq.f32.partialorder %v383, inf
    %v428 = vsel %vm427, %v383, %v426
    %vm429 = vcmp.eq.f32.partialorder %v383, 0.0
    %v430 = vand.u32 %v383, 2147483648
    %v431 = vsel %vm429, %v430, %v428
    %v432 = vrsqrt.pop %v384
    %v433 = vmul.f32 %v384, %v432
    %vm434 = vcmp.eq.f32.partialorder %v384, inf
    %v435 = vsel %vm434, %v384, %v433
    %vm436 = vcmp.eq.f32.partialorder %v384, 0.0
    %v437 = vand.u32 %v384, 2147483648
    %v438 = vsel %vm436, %v437, %v435
    %v439 = vrsqrt.pop %v385
    %v440 = vmul.f32 %v385, %v439
    %vm441 = vcmp.eq.f32.partialorder %v385, inf
    %v442 = vsel %vm441, %v385, %v440
    %vm443 = vcmp.eq.f32.partialorder %v385, 0.0
    %v444 = vand.u32 %v385, 2147483648
    %v445 = vsel %vm443, %v444, %v442
    %v446 = vrsqrt.pop %v386
    %v447 = vmul.f32 %v386, %v446
    %vm448 = vcmp.eq.f32.partialorder %v386, inf
    %v449 = vsel %vm448, %v386, %v447
    %vm450 = vcmp.eq.f32.partialorder %v386, 0.0
    %v451 = vand.u32 %v386, 2147483648
    %v452 = vsel %vm450, %v451, %v449
    %v453 = vrsqrt.pop %v387
    %v454 = vmul.f32 %v387, %v453
    %vm455 = vcmp.eq.f32.partialorder %v387, inf
    %v456 = vsel %vm455, %v387, %v454
    %vm457 = vcmp.eq.f32.partialorder %v387, 0.0
    %v458 = vand.u32 %v387, 2147483648
    %v459 = vsel %vm457, %v458, %v456
    %v460 = vrsqrt.pop %v388
    %v461 = vmul.f32 %v388, %v460
    %vm462 = vcmp.eq.f32.partialorder %v388, inf
    %v463 = vsel %vm462, %v388, %v461
    %vm464 = vcmp.eq.f32.partialorder %v388, 0.0
    %v465 = vand.u32 %v388, 2147483648
    %v466 = vsel %vm464, %v465, %v463
    %v467 = vrsqrt.pop %v389
    %v468 = vmul.f32 %v389, %v467
    %vm469 = vcmp.eq.f32.partialorder %v389, inf
    %v470 = vsel %vm469, %v389, %v468
    %vm471 = vcmp.eq.f32.partialorder %v389, 0.0
    %v472 = vand.u32 %v389, 2147483648
    %v473 = vsel %vm471, %v472, %v470
    %v476 = vlaneseq
    %v477 = vshrl.u32 %v476, 7
    %v478 = vsub.s32 0, %v477
    %v479 = vrot.slane %v67, %v478
    %v480 = vlaneseq
    %v481 = vshrl.u32 %v480, 7
    %v482 = vsub.s32 1, %v481
    %v483 = vrot.slane %v67, %v482
    %v484 = vlaneseq
    %v485 = vshrl.u32 %v484, 7
    %v486 = vsub.s32 2, %v485
    %v487 = vrot.slane %v67, %v486
    %v488 = vlaneseq
    %v489 = vshrl.u32 %v488, 7
    %v490 = vsub.s32 3, %v489
    %v491 = vrot.slane %v67, %v490
    %v492 = vlaneseq
    %v493 = vshrl.u32 %v492, 7
    %v494 = vsub.s32 4, %v493
    %v495 = vrot.slane %v67, %v494
    %v496 = vlaneseq
    %v497 = vshrl.u32 %v496, 7
    %v498 = vsub.s32 5, %v497
    %v499 = vrot.slane %v67, %v498
    %v500 = vlaneseq
    %v501 = vshrl.u32 %v500, 7
    %v502 = vsub.s32 6, %v501
    %v503 = vrot.slane %v67, %v502
    %v504 = vlaneseq
    %v505 = vshrl.u32 %v504, 7
    %v506 = vsub.s32 7, %v505
    %v507 = vrot.slane %v67, %v506
    %v508 = vlaneseq
    %v509 = vshrl.u32 %v508, 7
    %v510 = vsub.s32 0, %v509
    %v511 = vrot.slane %v68, %v510
    %v512 = vlaneseq
    %v513 = vshrl.u32 %v512, 7
    %v514 = vsub.s32 1, %v513
    %v515 = vrot.slane %v68, %v514
    %v516 = vlaneseq
    %v517 = vshrl.u32 %v516, 7
    %v518 = vsub.s32 2, %v517
    %v519 = vrot.slane %v68, %v518
    %v520 = vlaneseq
    %v521 = vshrl.u32 %v520, 7
    %v522 = vsub.s32 3, %v521
    %v523 = vrot.slane %v68, %v522
    %v536 = vsub.f32 %v396, %v479
    %v537 = vsub.f32 %v403, %v483
    %v538 = vsub.f32 %v410, %v487
    %v539 = vsub.f32 %v417, %v491
    %v540 = vsub.f32 %v424, %v495
    %v541 = vsub.f32 %v431, %v499
    %v542 = vsub.f32 %v438, %v503
    %v543 = vsub.f32 %v445, %v507
    %v544 = vsub.f32 %v452, %v511
    %v545 = vsub.f32 %v459, %v515
    %v546 = vsub.f32 %v466, %v519
    %v547 = vsub.f32 %v473, %v523
    %v548 = vmul.f32 %v536, %v536
    %v549 = vmul.f32 %v537, %v537
    %v550 = vmul.f32 %v538, %v538
    %v551 = vmul.f32 %v539, %v539
    %v552 = vmul.f32 %v540, %v540
    %v553 = vmul.f32 %v541, %v541
    %v554 = vmul.f32 %v542, %v542
    %v555 = vmul.f32 %v543, %v543
    %v556 = vmul.f32 %v544, %v544
    %v557 = vmul.f32 %v545, %v545
    %v558 = vmul.f32 %v546, %v546
    %v559 = vmul.f32 %v547, %v547
    %vm560 = vcmask 1040384
    %v561 = vsel %vm560, %v548, 0.0
    %v562 = vsel %vm560, %v549, 0.0
    %v563 = vadd.f32 %v561, %v562
    %v564 = vsel %vm560, %v550, 0.0
    %v565 = vadd.f32 %v563, %v564
    %v566 = vsel %vm560, %v551, 0.0
    %v567 = vadd.f32 %v565, %v566
    %v568 = vsel %vm560, %v552, 0.0
    %v569 = vadd.f32 %v567, %v568
    %v570 = vsel %vm560, %v553, 0.0
    %v571 = vadd.f32 %v569, %v570
    %v572 = vsel %vm560, %v554, 0.0
    %v573 = vadd.f32 %v571, %v572
    %v574 = vsel %vm560, %v555, 0.0
    %v575 = vadd.f32 %v573, %v574
    %v576 = vsel %vm560, %v556, 0.0
    %v577 = vadd.f32 %v575, %v576
    %v578 = vsel %vm560, %v557, 0.0
    %v579 = vadd.f32 %v577, %v578
    %v580 = vsel %vm560, %v558, 0.0
    %v581 = vadd.f32 %v579, %v580
    %v582 = vsel %vm560, %v559, 0.0
    %v583 = vadd.f32 %v581, %v582
    %584 = vadd.xlane.f32.xlu0 %v583
    %v585 = vpop.xlane.xlu0 %584
    %v586 = vrot.slane %v585, 4
    %v587 = vadd.f32 %v585, %v586
    %v588 = vrot.slane %v587, 2
    %v589 = vadd.f32 %v587, %v588
    %v590 = vrot.slane %v589, 1
    %v591 = vadd.f32 %v589, %v590
    %s592 = vtos %v591
    %v595 = vlaneseq
    %v596 = vshrl.u32 %v595, 7
    %v597 = vsub.s32 0, %v596
    %v598 = vrot.slane %v69, %v597
    %v599 = vlaneseq
    %v600 = vshrl.u32 %v599, 7
    %v601 = vsub.s32 1, %v600
    %v602 = vrot.slane %v69, %v601
    %v603 = vlaneseq
    %v604 = vshrl.u32 %v603, 7
    %v605 = vsub.s32 2, %v604
    %v606 = vrot.slane %v69, %v605
    %v607 = vlaneseq
    %v608 = vshrl.u32 %v607, 7
    %v609 = vsub.s32 3, %v608
    %v610 = vrot.slane %v69, %v609
    %v611 = vlaneseq
    %v612 = vshrl.u32 %v611, 7
    %v613 = vsub.s32 4, %v612
    %v614 = vrot.slane %v69, %v613
    %v615 = vlaneseq
    %v616 = vshrl.u32 %v615, 7
    %v617 = vsub.s32 5, %v616
    %v618 = vrot.slane %v69, %v617
    %v619 = vlaneseq
    %v620 = vshrl.u32 %v619, 7
    %v621 = vsub.s32 6, %v620
    %v622 = vrot.slane %v69, %v621
    %v623 = vlaneseq
    %v624 = vshrl.u32 %v623, 7
    %v625 = vsub.s32 7, %v624
    %v626 = vrot.slane %v69, %v625
    %v627 = vlaneseq
    %v628 = vshrl.u32 %v627, 7
    %v629 = vsub.s32 0, %v628
    %v630 = vrot.slane %v70, %v629
    %v631 = vlaneseq
    %v632 = vshrl.u32 %v631, 7
    %v633 = vsub.s32 1, %v632
    %v634 = vrot.slane %v70, %v633
    %v635 = vlaneseq
    %v636 = vshrl.u32 %v635, 7
    %v637 = vsub.s32 2, %v636
    %v638 = vrot.slane %v70, %v637
    %v639 = vlaneseq
    %v640 = vshrl.u32 %v639, 7
    %v641 = vsub.s32 3, %v640
    %v642 = vrot.slane %v70, %v641
    %v655 = vsub.f32 %v318, %v598
    %v656 = vsub.f32 %v319, %v602
    %v657 = vsub.f32 %v320, %v606
    %v658 = vsub.f32 %v321, %v610
    %v659 = vsub.f32 %v322, %v614
    %v660 = vsub.f32 %v323, %v618
    %v661 = vsub.f32 %v324, %v622
    %v662 = vsub.f32 %v325, %v626
    %v663 = vsub.f32 %v326, %v630
    %v664 = vsub.f32 %v327, %v634
    %v665 = vsub.f32 %v328, %v638
    %v666 = vsub.f32 %v329, %v642
    %v667 = vmul.f32 %v655, %v655
    %v668 = vmul.f32 %v656, %v656
    %v669 = vmul.f32 %v657, %v657
    %v670 = vmul.f32 %v658, %v658
    %v671 = vmul.f32 %v659, %v659
    %v672 = vmul.f32 %v660, %v660
    %v673 = vmul.f32 %v661, %v661
    %v674 = vmul.f32 %v662, %v662
    %v675 = vmul.f32 %v663, %v663
    %v676 = vmul.f32 %v664, %v664
    %v677 = vmul.f32 %v665, %v665
    %v678 = vmul.f32 %v666, %v666
    %v679 = vsel %vm560, %v667, 0.0
    %v680 = vsel %vm560, %v668, 0.0
    %v681 = vadd.f32 %v679, %v680
    %v682 = vsel %vm560, %v669, 0.0
    %v683 = vadd.f32 %v681, %v682
    %v684 = vsel %vm560, %v670, 0.0
    %v685 = vadd.f32 %v683, %v684
    %v686 = vsel %vm560, %v671, 0.0
    %v687 = vadd.f32 %v685, %v686
    %v688 = vsel %vm560, %v672, 0.0
    %v689 = vadd.f32 %v687, %v688
    %v690 = vsel %vm560, %v673, 0.0
    %v691 = vadd.f32 %v689, %v690
    %v692 = vsel %vm560, %v674, 0.0
    %v693 = vadd.f32 %v691, %v692
    %v694 = vsel %vm560, %v675, 0.0
    %v695 = vadd.f32 %v693, %v694
    %v696 = vsel %vm560, %v676, 0.0
    %v697 = vadd.f32 %v695, %v696
    %v698 = vsel %vm560, %v677, 0.0
    %v699 = vadd.f32 %v697, %v698
    %v700 = vsel %vm560, %v678, 0.0
    %v701 = vadd.f32 %v699, %v700
    %702 = vadd.xlane.f32.xlu0 %v701
    %v703 = vpop.xlane.xlu0 %702
    %v704 = vrot.slane %v703, 4
    %v705 = vadd.f32 %v703, %v704
    %v706 = vrot.slane %v705, 2
    %v707 = vadd.f32 %v705, %v706
    %v708 = vrot.slane %v707, 1
    %v709 = vadd.f32 %v707, %v708
    %s710 = vtos %v709
    %s711 = sadd.f32 %s592, %s710
    %s712 = smul.f32 %s711, 0.4
    %s713 = smul.f32 %s712, 0.125
    %714 = vst [vmem:[#allocation2] sm:$0xff] %v156
    %715 = vst [vmem:[#allocation2 + $0x8] sm:$0xff] %v157
    %716 = vst [vmem:[#allocation2 + $0x10] sm:$0xff] %v158
    %717 = vst [vmem:[#allocation2 + $0x18] sm:$0xff] %v159
    %718 = vst [vmem:[#allocation2 + $0x20] sm:$0xff] %v160
    %719 = vst [vmem:[#allocation2 + $0x28] sm:$0xff] %v161
    %v726 = vcombine.low %v324, %v325
    %v727 = vcombine.low %v326, %v327
    %v728 = vcombine.low %v328, %v329
    %v730 = vunpack.c.l.s4 1966171168
    %v731 = vunpack.c.0.s8 %v730
    %v732 = vlaneseq
    %v733 = vshrl.u32 %v732, 7
    %v734 = vsub.s32 %v731, %v733
    %v735 = vrot.slane %v726, %v734
    %v737 = vunpack.c.l.s4 1966171168
    %v738 = vunpack.c.0.s8 %v737
    %v739 = vlaneseq
    %v740 = vshrl.u32 %v739, 7
    %v741 = vsub.s32 %v738, %v740
    %v742 = vrot.slane %v727, %v741
    %v744 = vunpack.c.l.s4 1966171168
    %v745 = vunpack.c.0.s8 %v744
    %v746 = vlaneseq
    %v747 = vshrl.u32 %v746, 7
    %v748 = vsub.s32 %v745, %v747
    %v749 = vrot.slane %v728, %v748
    %v750 = vcombine.low %v735, %v742
    %v752 = vunpack.c.l.s4 1966171168
    %v753 = vunpack.c.0.s8 %v752
    %v754 = vlaneseq
    %v755 = vshrl.u32 %v754, 7
    %v756 = vsub.s32 %v753, %v755
    %v757 = vrot.slane %v750, %v756
    %v759 = vunpack.c.l.s4 1966171168
    %v760 = vunpack.c.0.s8 %v759
    %v761 = vlaneseq
    %v762 = vshrl.u32 %v761, 7
    %v763 = vsub.s32 %v760, %v762
    %v764 = vrot.slane %v749, %v763
    %v765 = vcombine.low %v757, %v764
    %v767 = vlaneseq
    %vm768 = vcmp.ge.s32.totalorder %v767, 0
    %vm769 = vcmp.lt.s32.totalorder %v767, 768
    %vm770 = vmand %vm768, %vm769
    %771 = vst.msk [vmem:[#allocation9] ss:$8 sm:$0xf] %vm770, %v765
    %772 = vst.msk [vmem:[#allocation9] ss:$8 sm:$0x30] %vm770, %v765
    %s773 = scalar_lea.vmem [#allocation6], 1
    %v774 = vld [vmem:[%s773] ss:$8 sm:$0xf]
    %v775 = vld [vmem:[%s773] ss:$8 sm:$0xf0]
    %v776 = vor.u32 %v774, %v775
    %s777 = scalar_lea.vmem [#allocation6], 65
    %v778 = vld [vmem:[%s777] ss:$8 sm:$0xf]
    %v781 = vlaneseq
    %v782 = vshrl.u32 %v781, 7
    %v783 = vsub.s32 0, %v782
    %v784 = vrot.slane %v776, %v783
    %v785 = vlaneseq
    %v786 = vshrl.u32 %v785, 7
    %v787 = vsub.s32 1, %v786
    %v788 = vrot.slane %v776, %v787
    %v789 = vlaneseq
    %v790 = vshrl.u32 %v789, 7
    %v791 = vsub.s32 2, %v790
    %v792 = vrot.slane %v776, %v791
    %v793 = vlaneseq
    %v794 = vshrl.u32 %v793, 7
    %v795 = vsub.s32 3, %v794
    %v796 = vrot.slane %v776, %v795
    %v797 = vlaneseq
    %v798 = vshrl.u32 %v797, 7
    %v799 = vsub.s32 4, %v798
    %v800 = vrot.slane %v776, %v799
    %v801 = vlaneseq
    %v802 = vshrl.u32 %v801, 7
    %v803 = vsub.s32 5, %v802
    %v804 = vrot.slane %v776, %v803
    %v805 = vlaneseq
    %v806 = vshrl.u32 %v805, 7
    %v807 = vsub.s32 6, %v806
    %v808 = vrot.slane %v776, %v807
    %v809 = vlaneseq
    %v810 = vshrl.u32 %v809, 7
    %v811 = vsub.s32 7, %v810
    %v812 = vrot.slane %v776, %v811
    %v813 = vlaneseq
    %v814 = vshrl.u32 %v813, 7
    %v815 = vsub.s32 0, %v814
    %v816 = vrot.slane %v778, %v815
    %v817 = vlaneseq
    %v818 = vshrl.u32 %v817, 7
    %v819 = vsub.s32 1, %v818
    %v820 = vrot.slane %v778, %v819
    %v821 = vlaneseq
    %v822 = vshrl.u32 %v821, 7
    %v823 = vsub.s32 2, %v822
    %v824 = vrot.slane %v778, %v823
    %v825 = vlaneseq
    %v826 = vshrl.u32 %v825, 7
    %v827 = vsub.s32 3, %v826
    %v828 = vrot.slane %v778, %v827
    %v841 = vadd.f32 %v55, %v784
    %v842 = vadd.f32 %v56, %v788
    %v843 = vadd.f32 %v57, %v792
    %v844 = vadd.f32 %v58, %v796
    %v845 = vadd.f32 %v59, %v800
    %v846 = vadd.f32 %v60, %v804
    %v847 = vadd.f32 %v61, %v808
    %v848 = vadd.f32 %v62, %v812
    %v849 = vadd.f32 %v63, %v816
    %v850 = vadd.f32 %v64, %v820
    %v851 = vadd.f32 %v65, %v824
    %v852 = vadd.f32 %v66, %v828
    %v853 = vtanh.pop %v841
    %v854 = vtanh.pop %v842
    %v855 = vtanh.pop %v843
    %v856 = vtanh.pop %v844
    %v857 = vtanh.pop %v845
    %v858 = vtanh.pop %v846
    %v859 = vtanh.pop %v847
    %v860 = vtanh.pop %v848
    %v861 = vtanh.pop %v849
    %v862 = vtanh.pop %v850
    %v863 = vtanh.pop %v851
    %v864 = vtanh.pop %v852
    %v865 = vrot.slane %v853, 4
    %v866 = vadd.f32 %v853, %v865
    %v867 = vrot.slane %v866, 2
    %v868 = vadd.f32 %v866, %v867
    %v869 = vrot.slane %v868, 1
    %v870 = vadd.f32 %v868, %v869
    %v871 = vrot.slane %v854, 4
    %v872 = vadd.f32 %v854, %v871
    %v873 = vrot.slane %v872, 2
    %v874 = vadd.f32 %v872, %v873
    %v875 = vrot.slane %v874, 1
    %v876 = vadd.f32 %v874, %v875
    %v877 = vrot.slane %v855, 4
    %v878 = vadd.f32 %v855, %v877
    %v879 = vrot.slane %v878, 2
    %v880 = vadd.f32 %v878, %v879
    %v881 = vrot.slane %v880, 1
    %v882 = vadd.f32 %v880, %v881
    %v883 = vrot.slane %v856, 4
    %v884 = vadd.f32 %v856, %v883
    %v885 = vrot.slane %v884, 2
    %v886 = vadd.f32 %v884, %v885
    %v887 = vrot.slane %v886, 1
    %v888 = vadd.f32 %v886, %v887
    %v889 = vrot.slane %v857, 4
    %v890 = vadd.f32 %v857, %v889
    %v891 = vrot.slane %v890, 2
    %v892 = vadd.f32 %v890, %v891
    %v893 = vrot.slane %v892, 1
    %v894 = vadd.f32 %v892, %v893
    %v895 = vrot.slane %v858, 4
    %v896 = vadd.f32 %v858, %v895
    %v897 = vrot.slane %v896, 2
    %v898 = vadd.f32 %v896, %v897
    %v899 = vrot.slane %v898, 1
    %v900 = vadd.f32 %v898, %v899
    %v901 = vrot.slane %v859, 4
    %v902 = vadd.f32 %v859, %v901
    %v903 = vrot.slane %v902, 2
    %v904 = vadd.f32 %v902, %v903
    %v905 = vrot.slane %v904, 1
    %v906 = vadd.f32 %v904, %v905
    %v907 = vrot.slane %v860, 4
    %v908 = vadd.f32 %v860, %v907
    %v909 = vrot.slane %v908, 2
    %v910 = vadd.f32 %v908, %v909
    %v911 = vrot.slane %v910, 1
    %v912 = vadd.f32 %v910, %v911
    %v913 = vrot.slane %v861, 4
    %v914 = vadd.f32 %v861, %v913
    %v915 = vrot.slane %v914, 2
    %v916 = vadd.f32 %v914, %v915
    %v917 = vrot.slane %v916, 1
    %v918 = vadd.f32 %v916, %v917
    %v919 = vrot.slane %v862, 4
    %v920 = vadd.f32 %v862, %v919
    %v921 = vrot.slane %v920, 2
    %v922 = vadd.f32 %v920, %v921
    %v923 = vrot.slane %v922, 1
    %v924 = vadd.f32 %v922, %v923
    %v925 = vrot.slane %v863, 4
    %v926 = vadd.f32 %v863, %v925
    %v927 = vrot.slane %v926, 2
    %v928 = vadd.f32 %v926, %v927
    %v929 = vrot.slane %v928, 1
    %v930 = vadd.f32 %v928, %v929
    %v931 = vrot.slane %v864, 4
    %v932 = vadd.f32 %v864, %v931
    %v933 = vrot.slane %v932, 2
    %v934 = vadd.f32 %v932, %v933
    %v935 = vrot.slane %v934, 1
    %v936 = vadd.f32 %v934, %v935
    %v937 = vmul.f32 %v853, %v853
    %v938 = vmul.f32 %v854, %v854
    %v939 = vmul.f32 %v855, %v855
    %v940 = vmul.f32 %v856, %v856
    %v941 = vmul.f32 %v857, %v857
    %v942 = vmul.f32 %v858, %v858
    %v943 = vmul.f32 %v859, %v859
    %v944 = vmul.f32 %v860, %v860
    %v945 = vmul.f32 %v861, %v861
    %v946 = vmul.f32 %v862, %v862
    %v947 = vmul.f32 %v863, %v863
    %v948 = vmul.f32 %v864, %v864
    %v949 = vrot.slane %v937, 4
    %v950 = vadd.f32 %v937, %v949
    %v951 = vrot.slane %v950, 2
    %v952 = vadd.f32 %v950, %v951
    %v953 = vrot.slane %v952, 1
    %v954 = vadd.f32 %v952, %v953
    %v955 = vrot.slane %v938, 4
    %v956 = vadd.f32 %v938, %v955
    %v957 = vrot.slane %v956, 2
    %v958 = vadd.f32 %v956, %v957
    %v959 = vrot.slane %v958, 1
    %v960 = vadd.f32 %v958, %v959
    %v961 = vrot.slane %v939, 4
    %v962 = vadd.f32 %v939, %v961
    %v963 = vrot.slane %v962, 2
    %v964 = vadd.f32 %v962, %v963
    %v965 = vrot.slane %v964, 1
    %v966 = vadd.f32 %v964, %v965
    %v967 = vrot.slane %v940, 4
    %v968 = vadd.f32 %v940, %v967
    %v969 = vrot.slane %v968, 2
    %v970 = vadd.f32 %v968, %v969
    %v971 = vrot.slane %v970, 1
    %v972 = vadd.f32 %v970, %v971
    %v973 = vrot.slane %v941, 4
    %v974 = vadd.f32 %v941, %v973
    %v975 = vrot.slane %v974, 2
    %v976 = vadd.f32 %v974, %v975
    %v977 = vrot.slane %v976, 1
    %v978 = vadd.f32 %v976, %v977
    %v979 = vrot.slane %v942, 4
    %v980 = vadd.f32 %v942, %v979
    %v981 = vrot.slane %v980, 2
    %v982 = vadd.f32 %v980, %v981
    %v983 = vrot.slane %v982, 1
    %v984 = vadd.f32 %v982, %v983
    %v985 = vrot.slane %v943, 4
    %v986 = vadd.f32 %v943, %v985
    %v987 = vrot.slane %v986, 2
    %v988 = vadd.f32 %v986, %v987
    %v989 = vrot.slane %v988, 1
    %v990 = vadd.f32 %v988, %v989
    %v991 = vrot.slane %v944, 4
    %v992 = vadd.f32 %v944, %v991
    %v993 = vrot.slane %v992, 2
    %v994 = vadd.f32 %v992, %v993
    %v995 = vrot.slane %v994, 1
    %v996 = vadd.f32 %v994, %v995
    %v997 = vrot.slane %v945, 4
    %v998 = vadd.f32 %v945, %v997
    %v999 = vrot.slane %v998, 2
    %v1000 = vadd.f32 %v998, %v999
    %v1001 = vrot.slane %v1000, 1
    %v1002 = vadd.f32 %v1000, %v1001
    %v1003 = vrot.slane %v946, 4
    %v1004 = vadd.f32 %v946, %v1003
    %v1005 = vrot.slane %v1004, 2
    %v1006 = vadd.f32 %v1004, %v1005
    %v1007 = vrot.slane %v1006, 1
    %v1008 = vadd.f32 %v1006, %v1007
    %v1009 = vrot.slane %v947, 4
    %v1010 = vadd.f32 %v947, %v1009
    %v1011 = vrot.slane %v1010, 2
    %v1012 = vadd.f32 %v1010, %v1011
    %v1013 = vrot.slane %v1012, 1
    %v1014 = vadd.f32 %v1012, %v1013
    %v1015 = vrot.slane %v948, 4
    %v1016 = vadd.f32 %v948, %v1015
    %v1017 = vrot.slane %v1016, 2
    %v1018 = vadd.f32 %v1016, %v1017
    %v1019 = vrot.slane %v1018, 1
    %v1020 = vadd.f32 %v1018, %v1019
    %v1021 = vmul.f32 %v870, 0.125
    %v1022 = vmul.f32 %v876, 0.125
    %v1023 = vmul.f32 %v882, 0.125
    %v1024 = vmul.f32 %v888, 0.125
    %v1025 = vmul.f32 %v894, 0.125
    %v1026 = vmul.f32 %v900, 0.125
    %v1027 = vmul.f32 %v906, 0.125
    %v1028 = vmul.f32 %v912, 0.125
    %v1029 = vmul.f32 %v918, 0.125
    %v1030 = vmul.f32 %v924, 0.125
    %v1031 = vmul.f32 %v930, 0.125
    %v1032 = vmul.f32 %v936, 0.125
    %v1033 = vmul.f32 %v1021, 8.0
    %v1034 = vmul.f32 %v1022, 8.0
    %v1035 = vmul.f32 %v1023, 8.0
    %v1036 = vmul.f32 %v1024, 8.0
    %v1037 = vmul.f32 %v1025, 8.0
    %v1038 = vmul.f32 %v1026, 8.0
    %v1039 = vmul.f32 %v1027, 8.0
    %v1040 = vmul.f32 %v1028, 8.0
    %v1041 = vmul.f32 %v1029, 8.0
    %v1042 = vmul.f32 %v1030, 8.0
    %v1043 = vmul.f32 %v1031, 8.0
    %v1044 = vmul.f32 %v1032, 8.0
    %v1045 = vmul.f32 %v1033, %v1021
    %v1046 = vmul.f32 %v1034, %v1022
    %v1047 = vmul.f32 %v1035, %v1023
    %v1048 = vmul.f32 %v1036, %v1024
    %v1049 = vmul.f32 %v1037, %v1025
    %v1050 = vmul.f32 %v1038, %v1026
    %v1051 = vmul.f32 %v1039, %v1027
    %v1052 = vmul.f32 %v1040, %v1028
    %v1053 = vmul.f32 %v1041, %v1029
    %v1054 = vmul.f32 %v1042, %v1030
    %v1055 = vmul.f32 %v1043, %v1031
    %v1056 = vmul.f32 %v1044, %v1032
    %v1057 = vsub.f32 %v954, %v1045
    %v1058 = vsub.f32 %v960, %v1046
    %v1059 = vsub.f32 %v966, %v1047
    %v1060 = vsub.f32 %v972, %v1048
    %v1061 = vsub.f32 %v978, %v1049
    %v1062 = vsub.f32 %v984, %v1050
    %v1063 = vsub.f32 %v990, %v1051
    %v1064 = vsub.f32 %v996, %v1052
    %v1065 = vsub.f32 %v1002, %v1053
    %v1066 = vsub.f32 %v1008, %v1054
    %v1067 = vsub.f32 %v1014, %v1055
    %v1068 = vsub.f32 %v1020, %v1056
    %v1069 = vmul.f32 %v1057, 0.14285715
    %v1070 = vmul.f32 %v1058, 0.14285715
    %v1071 = vmul.f32 %v1059, 0.14285715
    %v1072 = vmul.f32 %v1060, 0.14285715
    %v1073 = vmul.f32 %v1061, 0.14285715
    %v1074 = vmul.f32 %v1062, 0.14285715
    %v1075 = vmul.f32 %v1063, 0.14285715
    %v1076 = vmul.f32 %v1064, 0.14285715
    %v1077 = vmul.f32 %v1065, 0.14285715
    %v1078 = vmul.f32 %v1066, 0.14285715
    %v1079 = vmul.f32 %v1067, 0.14285715
    %v1080 = vmul.f32 %v1068, 0.14285715
    %v1081 = vmax.f32 %v1069, 0.0
    %v1082 = vmax.f32 %v1070, 0.0
    %v1083 = vmax.f32 %v1071, 0.0
    %v1084 = vmax.f32 %v1072, 0.0
    %v1085 = vmax.f32 %v1073, 0.0
    %v1086 = vmax.f32 %v1074, 0.0
    %v1087 = vmax.f32 %v1075, 0.0
    %v1088 = vmax.f32 %v1076, 0.0
    %v1089 = vmax.f32 %v1077, 0.0
    %v1090 = vmax.f32 %v1078, 0.0
    %v1091 = vmax.f32 %v1079, 0.0
    %v1092 = vmax.f32 %v1080, 0.0
    %v1093 = vrsqrt.pop %v1081
    %v1094 = vmul.f32 %v1081, %v1093
    %vm1095 = vcmp.eq.f32.partialorder %v1081, inf
    %v1096 = vsel %vm1095, %v1081, %v1094
    %vm1097 = vcmp.eq.f32.partialorder %v1081, 0.0
    %v1098 = vand.u32 %v1081, 2147483648
    %v1099 = vsel %vm1097, %v1098, %v1096
    %v1100 = vrsqrt.pop %v1082
    %v1101 = vmul.f32 %v1082, %v1100
    %vm1102 = vcmp.eq.f32.partialorder %v1082, inf
    %v1103 = vsel %vm1102, %v1082, %v1101
    %vm1104 = vcmp.eq.f32.partialorder %v1082, 0.0
    %v1105 = vand.u32 %v1082, 2147483648
    %v1106 = vsel %vm1104, %v1105, %v1103
    %v1107 = vrsqrt.pop %v1083
    %v1108 = vmul.f32 %v1083, %v1107
    %vm1109 = vcmp.eq.f32.partialorder %v1083, inf
    %v1110 = vsel %vm1109, %v1083, %v1108
    %vm1111 = vcmp.eq.f32.partialorder %v1083, 0.0
    %v1112 = vand.u32 %v1083, 2147483648
    %v1113 = vsel %vm1111, %v1112, %v1110
    %v1114 = vrsqrt.pop %v1084
    %v1115 = vmul.f32 %v1084, %v1114
    %vm1116 = vcmp.eq.f32.partialorder %v1084, inf
    %v1117 = vsel %vm1116, %v1084, %v1115
    %vm1118 = vcmp.eq.f32.partialorder %v1084, 0.0
    %v1119 = vand.u32 %v1084, 2147483648
    %v1120 = vsel %vm1118, %v1119, %v1117
    %v1121 = vrsqrt.pop %v1085
    %v1122 = vmul.f32 %v1085, %v1121
    %vm1123 = vcmp.eq.f32.partialorder %v1085, inf
    %v1124 = vsel %vm1123, %v1085, %v1122
    %vm1125 = vcmp.eq.f32.partialorder %v1085, 0.0
    %v1126 = vand.u32 %v1085, 2147483648
    %v1127 = vsel %vm1125, %v1126, %v1124
    %v1128 = vrsqrt.pop %v1086
    %v1129 = vmul.f32 %v1086, %v1128
    %vm1130 = vcmp.eq.f32.partialorder %v1086, inf
    %v1131 = vsel %vm1130, %v1086, %v1129
    %vm1132 = vcmp.eq.f32.partialorder %v1086, 0.0
    %v1133 = vand.u32 %v1086, 2147483648
    %v1134 = vsel %vm1132, %v1133, %v1131
    %v1135 = vrsqrt.pop %v1087
    %v1136 = vmul.f32 %v1087, %v1135
    %vm1137 = vcmp.eq.f32.partialorder %v1087, inf
    %v1138 = vsel %vm1137, %v1087, %v1136
    %vm1139 = vcmp.eq.f32.partialorder %v1087, 0.0
    %v1140 = vand.u32 %v1087, 2147483648
    %v1141 = vsel %vm1139, %v1140, %v1138
    %v1142 = vrsqrt.pop %v1088
    %v1143 = vmul.f32 %v1088, %v1142
    %vm1144 = vcmp.eq.f32.partialorder %v1088, inf
    %v1145 = vsel %vm1144, %v1088, %v1143
    %vm1146 = vcmp.eq.f32.partialorder %v1088, 0.0
    %v1147 = vand.u32 %v1088, 2147483648
    %v1148 = vsel %vm1146, %v1147, %v1145
    %v1149 = vrsqrt.pop %v1089
    %v1150 = vmul.f32 %v1089, %v1149
    %vm1151 = vcmp.eq.f32.partialorder %v1089, inf
    %v1152 = vsel %vm1151, %v1089, %v1150
    %vm1153 = vcmp.eq.f32.partialorder %v1089, 0.0
    %v1154 = vand.u32 %v1089, 2147483648
    %v1155 = vsel %vm1153, %v1154, %v1152
    %v1156 = vrsqrt.pop %v1090
    %v1157 = vmul.f32 %v1090, %v1156
    %vm1158 = vcmp.eq.f32.partialorder %v1090, inf
    %v1159 = vsel %vm1158, %v1090, %v1157
    %vm1160 = vcmp.eq.f32.partialorder %v1090, 0.0
    %v1161 = vand.u32 %v1090, 2147483648
    %v1162 = vsel %vm1160, %v1161, %v1159
    %v1163 = vrsqrt.pop %v1091
    %v1164 = vmul.f32 %v1091, %v1163
    %vm1165 = vcmp.eq.f32.partialorder %v1091, inf
    %v1166 = vsel %vm1165, %v1091, %v1164
    %vm1167 = vcmp.eq.f32.partialorder %v1091, 0.0
    %v1168 = vand.u32 %v1091, 2147483648
    %v1169 = vsel %vm1167, %v1168, %v1166
    %v1170 = vrsqrt.pop %v1092
    %v1171 = vmul.f32 %v1092, %v1170
    %vm1172 = vcmp.eq.f32.partialorder %v1092, inf
    %v1173 = vsel %vm1172, %v1092, %v1171
    %vm1174 = vcmp.eq.f32.partialorder %v1092, 0.0
    %v1175 = vand.u32 %v1092, 2147483648
    %v1176 = vsel %vm1174, %v1175, %v1173
    %v1177 = vsub.f32 %v1099, %v479
    %v1178 = vsub.f32 %v1106, %v483
    %v1179 = vsub.f32 %v1113, %v487
    %v1180 = vsub.f32 %v1120, %v491
    %v1181 = vsub.f32 %v1127, %v495
    %v1182 = vsub.f32 %v1134, %v499
    %v1183 = vsub.f32 %v1141, %v503
    %v1184 = vsub.f32 %v1148, %v507
    %v1185 = vsub.f32 %v1155, %v511
    %v1186 = vsub.f32 %v1162, %v515
    %v1187 = vsub.f32 %v1169, %v519
    %v1188 = vsub.f32 %v1176, %v523
    %v1189 = vmul.f32 %v1177, %v1177
    %v1190 = vmul.f32 %v1178, %v1178
    %v1191 = vmul.f32 %v1179, %v1179
    %v1192 = vmul.f32 %v1180, %v1180
    %v1193 = vmul.f32 %v1181, %v1181
    %v1194 = vmul.f32 %v1182, %v1182
    %v1195 = vmul.f32 %v1183, %v1183
    %v1196 = vmul.f32 %v1184, %v1184
    %v1197 = vmul.f32 %v1185, %v1185
    %v1198 = vmul.f32 %v1186, %v1186
    %v1199 = vmul.f32 %v1187, %v1187
    %v1200 = vmul.f32 %v1188, %v1188
    %v1201 = vsel %vm560, %v1189, 0.0
    %v1202 = vsel %vm560, %v1190, 0.0
    %v1203 = vadd.f32 %v1201, %v1202
    %v1204 = vsel %vm560, %v1191, 0.0
    %v1205 = vadd.f32 %v1203, %v1204
    %v1206 = vsel %vm560, %v1192, 0.0
    %v1207 = vadd.f32 %v1205, %v1206
    %v1208 = vsel %vm560, %v1193, 0.0
    %v1209 = vadd.f32 %v1207, %v1208
    %v1210 = vsel %vm560, %v1194, 0.0
    %v1211 = vadd.f32 %v1209, %v1210
    %v1212 = vsel %vm560, %v1195, 0.0
    %v1213 = vadd.f32 %v1211, %v1212
    %v1214 = vsel %vm560, %v1196, 0.0
    %v1215 = vadd.f32 %v1213, %v1214
    %v1216 = vsel %vm560, %v1197, 0.0
    %v1217 = vadd.f32 %v1215, %v1216
    %v1218 = vsel %vm560, %v1198, 0.0
    %v1219 = vadd.f32 %v1217, %v1218
    %v1220 = vsel %vm560, %v1199, 0.0
    %v1221 = vadd.f32 %v1219, %v1220
    %v1222 = vsel %vm560, %v1200, 0.0
    %v1223 = vadd.f32 %v1221, %v1222
    %1224 = vadd.xlane.f32.xlu0 %v1223
    %v1225 = vpop.xlane.xlu0 %1224
    %v1226 = vrot.slane %v1225, 4
    %v1227 = vadd.f32 %v1225, %v1226
    %v1228 = vrot.slane %v1227, 2
    %v1229 = vadd.f32 %v1227, %v1228
    %v1230 = vrot.slane %v1229, 1
    %v1231 = vadd.f32 %v1229, %v1230
    %s1232 = vtos %v1231
    %v1233 = vsub.f32 %v1021, %v598
    %v1234 = vsub.f32 %v1022, %v602
    %v1235 = vsub.f32 %v1023, %v606
    %v1236 = vsub.f32 %v1024, %v610
    %v1237 = vsub.f32 %v1025, %v614
    %v1238 = vsub.f32 %v1026, %v618
    %v1239 = vsub.f32 %v1027, %v622
    %v1240 = vsub.f32 %v1028, %v626
    %v1241 = vsub.f32 %v1029, %v630
    %v1242 = vsub.f32 %v1030, %v634
    %v1243 = vsub.f32 %v1031, %v638
    %v1244 = vsub.f32 %v1032, %v642
    %v1245 = vmul.f32 %v1233, %v1233
    %v1246 = vmul.f32 %v1234, %v1234
    %v1247 = vmul.f32 %v1235, %v1235
    %v1248 = vmul.f32 %v1236, %v1236
    %v1249 = vmul.f32 %v1237, %v1237
    %v1250 = vmul.f32 %v1238, %v1238
    %v1251 = vmul.f32 %v1239, %v1239
    %v1252 = vmul.f32 %v1240, %v1240
    %v1253 = vmul.f32 %v1241, %v1241
    %v1254 = vmul.f32 %v1242, %v1242
    %v1255 = vmul.f32 %v1243, %v1243
    %v1256 = vmul.f32 %v1244, %v1244
    %v1257 = vsel %vm560, %v1245, 0.0
    %v1258 = vsel %vm560, %v1246, 0.0
    %v1259 = vadd.f32 %v1257, %v1258
    %v1260 = vsel %vm560, %v1247, 0.0
    %v1261 = vadd.f32 %v1259, %v1260
    %v1262 = vsel %vm560, %v1248, 0.0
    %v1263 = vadd.f32 %v1261, %v1262
    %v1264 = vsel %vm560, %v1249, 0.0
    %v1265 = vadd.f32 %v1263, %v1264
    %v1266 = vsel %vm560, %v1250, 0.0
    %v1267 = vadd.f32 %v1265, %v1266
    %v1268 = vsel %vm560, %v1251, 0.0
    %v1269 = vadd.f32 %v1267, %v1268
    %v1270 = vsel %vm560, %v1252, 0.0
    %v1271 = vadd.f32 %v1269, %v1270
    %v1272 = vsel %vm560, %v1253, 0.0
    %v1273 = vadd.f32 %v1271, %v1272
    %v1274 = vsel %vm560, %v1254, 0.0
    %v1275 = vadd.f32 %v1273, %v1274
    %v1276 = vsel %vm560, %v1255, 0.0
    %v1277 = vadd.f32 %v1275, %v1276
    %v1278 = vsel %vm560, %v1256, 0.0
    %v1279 = vadd.f32 %v1277, %v1278
    %1280 = vadd.xlane.f32.xlu0 %v1279
    %v1281 = vpop.xlane.xlu0 %1280
    %v1282 = vrot.slane %v1281, 4
    %v1283 = vadd.f32 %v1281, %v1282
    %v1284 = vrot.slane %v1283, 2
    %v1285 = vadd.f32 %v1283, %v1284
    %v1286 = vrot.slane %v1285, 1
    %v1287 = vadd.f32 %v1285, %v1286
    %s1288 = vtos %v1287
    %s1289 = sadd.f32 %s1232, %s1288
    %s1290 = smul.f32 %s1289, 0.4
    %s1291 = smul.f32 %s1290, 0.125
    %1292 = vst [vmem:[#allocation2 + $0x30] sm:$0xff] %v859
    %1293 = vst [vmem:[#allocation2 + $0x38] sm:$0xff] %v860
    %1294 = vst [vmem:[#allocation2 + $0x40] sm:$0xff] %v861
    %1295 = vst [vmem:[#allocation2 + $0x48] sm:$0xff] %v862
    %1296 = vst [vmem:[#allocation2 + $0x50] sm:$0xff] %v863
    %1297 = vst [vmem:[#allocation2 + $0x58] sm:$0xff] %v864
    %v1304 = vcombine.low %v1027, %v1028
    %v1305 = vcombine.low %v1029, %v1030
    %v1306 = vcombine.low %v1031, %v1032
    %v1308 = vunpack.c.l.s4 1966171168
    %v1309 = vunpack.c.0.s8 %v1308
    %v1310 = vlaneseq
    %v1311 = vshrl.u32 %v1310, 7
    %v1312 = vsub.s32 %v1309, %v1311
    %v1313 = vrot.slane %v1304, %v1312
    %v1315 = vunpack.c.l.s4 1966171168
    %v1316 = vunpack.c.0.s8 %v1315
    %v1317 = vlaneseq
    %v1318 = vshrl.u32 %v1317, 7
    %v1319 = vsub.s32 %v1316, %v1318
    %v1320 = vrot.slane %v1305, %v1319
    %v1322 = vunpack.c.l.s4 1966171168
    %v1323 = vunpack.c.0.s8 %v1322
    %v1324 = vlaneseq
    %v1325 = vshrl.u32 %v1324, 7
    %v1326 = vsub.s32 %v1323, %v1325
    %v1327 = vrot.slane %v1306, %v1326
    %v1328 = vcombine.low %v1313, %v1320
    %v1330 = vunpack.c.l.s4 1966171168
    %v1331 = vunpack.c.0.s8 %v1330
    %v1332 = vlaneseq
    %v1333 = vshrl.u32 %v1332, 7
    %v1334 = vsub.s32 %v1331, %v1333
    %v1335 = vrot.slane %v1328, %v1334
    %v1337 = vunpack.c.l.s4 1966171168
    %v1338 = vunpack.c.0.s8 %v1337
    %v1339 = vlaneseq
    %v1340 = vshrl.u32 %v1339, 7
    %v1341 = vsub.s32 %v1338, %v1340
    %v1342 = vrot.slane %v1327, %v1341
    %v1343 = vcombine.low %v1335, %v1342
    %s1345 = scalar_lea.vmem [#allocation9], 1
    %1346 = vst.msk [vmem:[%s1345] ss:$8 sm:$0xf] %vm770, %v1343
    %1347 = vst.msk [vmem:[%s1345] ss:$8 sm:$0x30] %vm770, %v1343
    %s1348 = scalar_lea.vmem [#allocation6], 2
    %v1349 = vld [vmem:[%s1348] ss:$8 sm:$0xf]
    %v1350 = vld [vmem:[%s1348] ss:$8 sm:$0xf0]
    %v1351 = vor.u32 %v1349, %v1350
    %s1352 = scalar_lea.vmem [#allocation6], 66
    %v1353 = vld [vmem:[%s1352] ss:$8 sm:$0xf]
    %v1356 = vlaneseq
    %v1357 = vshrl.u32 %v1356, 7
    %v1358 = vsub.s32 0, %v1357
    %v1359 = vrot.slane %v1351, %v1358
    %v1360 = vlaneseq
    %v1361 = vshrl.u32 %v1360, 7
    %v1362 = vsub.s32 1, %v1361
    %v1363 = vrot.slane %v1351, %v1362
    %v1364 = vlaneseq
    %v1365 = vshrl.u32 %v1364, 7
    %v1366 = vsub.s32 2, %v1365
    %v1367 = vrot.slane %v1351, %v1366
    %v1368 = vlaneseq
    %v1369 = vshrl.u32 %v1368, 7
    %v1370 = vsub.s32 3, %v1369
    %v1371 = vrot.slane %v1351, %v1370
    %v1372 = vlaneseq
    %v1373 = vshrl.u32 %v1372, 7
    %v1374 = vsub.s32 4, %v1373
    %v1375 = vrot.slane %v1351, %v1374
    %v1376 = vlaneseq
    %v1377 = vshrl.u32 %v1376, 7
    %v1378 = vsub.s32 5, %v1377
    %v1379 = vrot.slane %v1351, %v1378
    %v1380 = vlaneseq
    %v1381 = vshrl.u32 %v1380, 7
    %v1382 = vsub.s32 6, %v1381
    %v1383 = vrot.slane %v1351, %v1382
    %v1384 = vlaneseq
    %v1385 = vshrl.u32 %v1384, 7
    %v1386 = vsub.s32 7, %v1385
    %v1387 = vrot.slane %v1351, %v1386
    %v1388 = vlaneseq
    %v1389 = vshrl.u32 %v1388, 7
    %v1390 = vsub.s32 0, %v1389
    %v1391 = vrot.slane %v1353, %v1390
    %v1392 = vlaneseq
    %v1393 = vshrl.u32 %v1392, 7
    %v1394 = vsub.s32 1, %v1393
    %v1395 = vrot.slane %v1353, %v1394
    %v1396 = vlaneseq
    %v1397 = vshrl.u32 %v1396, 7
    %v1398 = vsub.s32 2, %v1397
    %v1399 = vrot.slane %v1353, %v1398
    %v1400 = vlaneseq
    %v1401 = vshrl.u32 %v1400, 7
    %v1402 = vsub.s32 3, %v1401
    %v1403 = vrot.slane %v1353, %v1402
    %v1416 = vadd.f32 %v55, %v1359
    %v1417 = vadd.f32 %v56, %v1363
    %v1418 = vadd.f32 %v57, %v1367
    %v1419 = vadd.f32 %v58, %v1371
    %v1420 = vadd.f32 %v59, %v1375
    %v1421 = vadd.f32 %v60, %v1379
    %v1422 = vadd.f32 %v61, %v1383
    %v1423 = vadd.f32 %v62, %v1387
    %v1424 = vadd.f32 %v63, %v1391
    %v1425 = vadd.f32 %v64, %v1395
    %v1426 = vadd.f32 %v65, %v1399
    %v1427 = vadd.f32 %v66, %v1403
    %v1428 = vtanh.pop %v1416
    %v1429 = vtanh.pop %v1417
    %v1430 = vtanh.pop %v1418
    %v1431 = vtanh.pop %v1419
    %v1432 = vtanh.pop %v1420
    %v1433 = vtanh.pop %v1421
    %v1434 = vtanh.pop %v1422
    %v1435 = vtanh.pop %v1423
    %v1436 = vtanh.pop %v1424
    %v1437 = vtanh.pop %v1425
    %v1438 = vtanh.pop %v1426
    %v1439 = vtanh.pop %v1427
    %v1440 = vrot.slane %v1428, 4
    %v1441 = vadd.f32 %v1428, %v1440
    %v1442 = vrot.slane %v1441, 2
    %v1443 = vadd.f32 %v1441, %v1442
    %v1444 = vrot.slane %v1443, 1
    %v1445 = vadd.f32 %v1443, %v1444
    %v1446 = vrot.slane %v1429, 4
    %v1447 = vadd.f32 %v1429, %v1446
    %v1448 = vrot.slane %v1447, 2
    %v1449 = vadd.f32 %v1447, %v1448
    %v1450 = vrot.slane %v1449, 1
    %v1451 = vadd.f32 %v1449, %v1450
    %v1452 = vrot.slane %v1430, 4
    %v1453 = vadd.f32 %v1430, %v1452
    %v1454 = vrot.slane %v1453, 2
    %v1455 = vadd.f32 %v1453, %v1454
    %v1456 = vrot.slane %v1455, 1
    %v1457 = vadd.f32 %v1455, %v1456
    %v1458 = vrot.slane %v1431, 4
    %v1459 = vadd.f32 %v1431, %v1458
    %v1460 = vrot.slane %v1459, 2
    %v1461 = vadd.f32 %v1459, %v1460
    %v1462 = vrot.slane %v1461, 1
    %v1463 = vadd.f32 %v1461, %v1462
    %v1464 = vrot.slane %v1432, 4
    %v1465 = vadd.f32 %v1432, %v1464
    %v1466 = vrot.slane %v1465, 2
    %v1467 = vadd.f32 %v1465, %v1466
    %v1468 = vrot.slane %v1467, 1
    %v1469 = vadd.f32 %v1467, %v1468
    %v1470 = vrot.slane %v1433, 4
    %v1471 = vadd.f32 %v1433, %v1470
    %v1472 = vrot.slane %v1471, 2
    %v1473 = vadd.f32 %v1471, %v1472
    %v1474 = vrot.slane %v1473, 1
    %v1475 = vadd.f32 %v1473, %v1474
    %v1476 = vrot.slane %v1434, 4
    %v1477 = vadd.f32 %v1434, %v1476
    %v1478 = vrot.slane %v1477, 2
    %v1479 = vadd.f32 %v1477, %v1478
    %v1480 = vrot.slane %v1479, 1
    %v1481 = vadd.f32 %v1479, %v1480
    %v1482 = vrot.slane %v1435, 4
    %v1483 = vadd.f32 %v1435, %v1482
    %v1484 = vrot.slane %v1483, 2
    %v1485 = vadd.f32 %v1483, %v1484
    %v1486 = vrot.slane %v1485, 1
    %v1487 = vadd.f32 %v1485, %v1486
    %v1488 = vrot.slane %v1436, 4
    %v1489 = vadd.f32 %v1436, %v1488
    %v1490 = vrot.slane %v1489, 2
    %v1491 = vadd.f32 %v1489, %v1490
    %v1492 = vrot.slane %v1491, 1
    %v1493 = vadd.f32 %v1491, %v1492
    %v1494 = vrot.slane %v1437, 4
    %v1495 = vadd.f32 %v1437, %v1494
    %v1496 = vrot.slane %v1495, 2
    %v1497 = vadd.f32 %v1495, %v1496
    %v1498 = vrot.slane %v1497, 1
    %v1499 = vadd.f32 %v1497, %v1498
    %v1500 = vrot.slane %v1438, 4
    %v1501 = vadd.f32 %v1438, %v1500
    %v1502 = vrot.slane %v1501, 2
    %v1503 = vadd.f32 %v1501, %v1502
    %v1504 = vrot.slane %v1503, 1
    %v1505 = vadd.f32 %v1503, %v1504
    %v1506 = vrot.slane %v1439, 4
    %v1507 = vadd.f32 %v1439, %v1506
    %v1508 = vrot.slane %v1507, 2
    %v1509 = vadd.f32 %v1507, %v1508
    %v1510 = vrot.slane %v1509, 1
    %v1511 = vadd.f32 %v1509, %v1510
    %v1512 = vmul.f32 %v1428, %v1428
    %v1513 = vmul.f32 %v1429, %v1429
    %v1514 = vmul.f32 %v1430, %v1430
    %v1515 = vmul.f32 %v1431, %v1431
    %v1516 = vmul.f32 %v1432, %v1432
    %v1517 = vmul.f32 %v1433, %v1433
    %v1518 = vmul.f32 %v1434, %v1434
    %v1519 = vmul.f32 %v1435, %v1435
    %v1520 = vmul.f32 %v1436, %v1436
    %v1521 = vmul.f32 %v1437, %v1437
    %v1522 = vmul.f32 %v1438, %v1438
    %v1523 = vmul.f32 %v1439, %v1439
    %v1524 = vrot.slane %v1512, 4
    %v1525 = vadd.f32 %v1512, %v1524
    %v1526 = vrot.slane %v1525, 2
    %v1527 = vadd.f32 %v1525, %v1526
    %v1528 = vrot.slane %v1527, 1
    %v1529 = vadd.f32 %v1527, %v1528
    %v1530 = vrot.slane %v1513, 4
    %v1531 = vadd.f32 %v1513, %v1530
    %v1532 = vrot.slane %v1531, 2
    %v1533 = vadd.f32 %v1531, %v1532
    %v1534 = vrot.slane %v1533, 1
    %v1535 = vadd.f32 %v1533, %v1534
    %v1536 = vrot.slane %v1514, 4
    %v1537 = vadd.f32 %v1514, %v1536
    %v1538 = vrot.slane %v1537, 2
    %v1539 = vadd.f32 %v1537, %v1538
    %v1540 = vrot.slane %v1539, 1
    %v1541 = vadd.f32 %v1539, %v1540
    %v1542 = vrot.slane %v1515, 4
    %v1543 = vadd.f32 %v1515, %v1542
    %v1544 = vrot.slane %v1543, 2
    %v1545 = vadd.f32 %v1543, %v1544
    %v1546 = vrot.slane %v1545, 1
    %v1547 = vadd.f32 %v1545, %v1546
    %v1548 = vrot.slane %v1516, 4
    %v1549 = vadd.f32 %v1516, %v1548
    %v1550 = vrot.slane %v1549, 2
    %v1551 = vadd.f32 %v1549, %v1550
    %v1552 = vrot.slane %v1551, 1
    %v1553 = vadd.f32 %v1551, %v1552
    %v1554 = vrot.slane %v1517, 4
    %v1555 = vadd.f32 %v1517, %v1554
    %v1556 = vrot.slane %v1555, 2
    %v1557 = vadd.f32 %v1555, %v1556
    %v1558 = vrot.slane %v1557, 1
    %v1559 = vadd.f32 %v1557, %v1558
    %v1560 = vrot.slane %v1518, 4
    %v1561 = vadd.f32 %v1518, %v1560
    %v1562 = vrot.slane %v1561, 2
    %v1563 = vadd.f32 %v1561, %v1562
    %v1564 = vrot.slane %v1563, 1
    %v1565 = vadd.f32 %v1563, %v1564
    %v1566 = vrot.slane %v1519, 4
    %v1567 = vadd.f32 %v1519, %v1566
    %v1568 = vrot.slane %v1567, 2
    %v1569 = vadd.f32 %v1567, %v1568
    %v1570 = vrot.slane %v1569, 1
    %v1571 = vadd.f32 %v1569, %v1570
    %v1572 = vrot.slane %v1520, 4
    %v1573 = vadd.f32 %v1520, %v1572
    %v1574 = vrot.slane %v1573, 2
    %v1575 = vadd.f32 %v1573, %v1574
    %v1576 = vrot.slane %v1575, 1
    %v1577 = vadd.f32 %v1575, %v1576
    %v1578 = vrot.slane %v1521, 4
    %v1579 = vadd.f32 %v1521, %v1578
    %v1580 = vrot.slane %v1579, 2
    %v1581 = vadd.f32 %v1579, %v1580
    %v1582 = vrot.slane %v1581, 1
    %v1583 = vadd.f32 %v1581, %v1582
    %v1584 = vrot.slane %v1522, 4
    %v1585 = vadd.f32 %v1522, %v1584
    %v1586 = vrot.slane %v1585, 2
    %v1587 = vadd.f32 %v1585, %v1586
    %v1588 = vrot.slane %v1587, 1
    %v1589 = vadd.f32 %v1587, %v1588
    %v1590 = vrot.slane %v1523, 4
    %v1591 = vadd.f32 %v1523, %v1590
    %v1592 = vrot.slane %v1591, 2
    %v1593 = vadd.f32 %v1591, %v1592
    %v1594 = vrot.slane %v1593, 1
    %v1595 = vadd.f32 %v1593, %v1594
    %v1596 = vmul.f32 %v1445, 0.125
    %v1597 = vmul.f32 %v1451, 0.125
    %v1598 = vmul.f32 %v1457, 0.125
    %v1599 = vmul.f32 %v1463, 0.125
    %v1600 = vmul.f32 %v1469, 0.125
    %v1601 = vmul.f32 %v1475, 0.125
    %v1602 = vmul.f32 %v1481, 0.125
    %v1603 = vmul.f32 %v1487, 0.125
    %v1604 = vmul.f32 %v1493, 0.125
    %v1605 = vmul.f32 %v1499, 0.125
    %v1606 = vmul.f32 %v1505, 0.125
    %v1607 = vmul.f32 %v1511, 0.125
    %v1608 = vmul.f32 %v1596, 8.0
    %v1609 = vmul.f32 %v1597, 8.0
    %v1610 = vmul.f32 %v1598, 8.0
    %v1611 = vmul.f32 %v1599, 8.0
    %v1612 = vmul.f32 %v1600, 8.0
    %v1613 = vmul.f32 %v1601, 8.0
    %v1614 = vmul.f32 %v1602, 8.0
    %v1615 = vmul.f32 %v1603, 8.0
    %v1616 = vmul.f32 %v1604, 8.0
    %v1617 = vmul.f32 %v1605, 8.0
    %v1618 = vmul.f32 %v1606, 8.0
    %v1619 = vmul.f32 %v1607, 8.0
    %v1620 = vmul.f32 %v1608, %v1596
    %v1621 = vmul.f32 %v1609, %v1597
    %v1622 = vmul.f32 %v1610, %v1598
    %v1623 = vmul.f32 %v1611, %v1599
    %v1624 = vmul.f32 %v1612, %v1600
    %v1625 = vmul.f32 %v1613, %v1601
    %v1626 = vmul.f32 %v1614, %v1602
    %v1627 = vmul.f32 %v1615, %v1603
    %v1628 = vmul.f32 %v1616, %v1604
    %v1629 = vmul.f32 %v1617, %v1605
    %v1630 = vmul.f32 %v1618, %v1606
    %v1631 = vmul.f32 %v1619, %v1607
    %v1632 = vsub.f32 %v1529, %v1620
    %v1633 = vsub.f32 %v1535, %v1621
    %v1634 = vsub.f32 %v1541, %v1622
    %v1635 = vsub.f32 %v1547, %v1623
    %v1636 = vsub.f32 %v1553, %v1624
    %v1637 = vsub.f32 %v1559, %v1625
    %v1638 = vsub.f32 %v1565, %v1626
    %v1639 = vsub.f32 %v1571, %v1627
    %v1640 = vsub.f32 %v1577, %v1628
    %v1641 = vsub.f32 %v1583, %v1629
    %v1642 = vsub.f32 %v1589, %v1630
    %v1643 = vsub.f32 %v1595, %v1631
    %v1644 = vmul.f32 %v1632, 0.14285715
    %v1645 = vmul.f32 %v1633, 0.14285715
    %v1646 = vmul.f32 %v1634, 0.14285715
    %v1647 = vmul.f32 %v1635, 0.14285715
    %v1648 = vmul.f32 %v1636, 0.14285715
    %v1649 = vmul.f32 %v1637, 0.14285715
    %v1650 = vmul.f32 %v1638, 0.14285715
    %v1651 = vmul.f32 %v1639, 0.14285715
    %v1652 = vmul.f32 %v1640, 0.14285715
    %v1653 = vmul.f32 %v1641, 0.14285715
    %v1654 = vmul.f32 %v1642, 0.14285715
    %v1655 = vmul.f32 %v1643, 0.14285715
    %v1656 = vmax.f32 %v1644, 0.0
    %v1657 = vmax.f32 %v1645, 0.0
    %v1658 = vmax.f32 %v1646, 0.0
    %v1659 = vmax.f32 %v1647, 0.0
    %v1660 = vmax.f32 %v1648, 0.0
    %v1661 = vmax.f32 %v1649, 0.0
    %v1662 = vmax.f32 %v1650, 0.0
    %v1663 = vmax.f32 %v1651, 0.0
    %v1664 = vmax.f32 %v1652, 0.0
    %v1665 = vmax.f32 %v1653, 0.0
    %v1666 = vmax.f32 %v1654, 0.0
    %v1667 = vmax.f32 %v1655, 0.0
    %v1668 = vrsqrt.pop %v1656
    %v1669 = vmul.f32 %v1656, %v1668
    %vm1670 = vcmp.eq.f32.partialorder %v1656, inf
    %v1671 = vsel %vm1670, %v1656, %v1669
    %vm1672 = vcmp.eq.f32.partialorder %v1656, 0.0
    %v1673 = vand.u32 %v1656, 2147483648
    %v1674 = vsel %vm1672, %v1673, %v1671
    %v1675 = vrsqrt.pop %v1657
    %v1676 = vmul.f32 %v1657, %v1675
    %vm1677 = vcmp.eq.f32.partialorder %v1657, inf
    %v1678 = vsel %vm1677, %v1657, %v1676
    %vm1679 = vcmp.eq.f32.partialorder %v1657, 0.0
    %v1680 = vand.u32 %v1657, 2147483648
    %v1681 = vsel %vm1679, %v1680, %v1678
    %v1682 = vrsqrt.pop %v1658
    %v1683 = vmul.f32 %v1658, %v1682
    %vm1684 = vcmp.eq.f32.partialorder %v1658, inf
    %v1685 = vsel %vm1684, %v1658, %v1683
    %vm1686 = vcmp.eq.f32.partialorder %v1658, 0.0
    %v1687 = vand.u32 %v1658, 2147483648
    %v1688 = vsel %vm1686, %v1687, %v1685
    %v1689 = vrsqrt.pop %v1659
    %v1690 = vmul.f32 %v1659, %v1689
    %vm1691 = vcmp.eq.f32.partialorder %v1659, inf
    %v1692 = vsel %vm1691, %v1659, %v1690
    %vm1693 = vcmp.eq.f32.partialorder %v1659, 0.0
    %v1694 = vand.u32 %v1659, 2147483648
    %v1695 = vsel %vm1693, %v1694, %v1692
    %v1696 = vrsqrt.pop %v1660
    %v1697 = vmul.f32 %v1660, %v1696
    %vm1698 = vcmp.eq.f32.partialorder %v1660, inf
    %v1699 = vsel %vm1698, %v1660, %v1697
    %vm1700 = vcmp.eq.f32.partialorder %v1660, 0.0
    %v1701 = vand.u32 %v1660, 2147483648
    %v1702 = vsel %vm1700, %v1701, %v1699
    %v1703 = vrsqrt.pop %v1661
    %v1704 = vmul.f32 %v1661, %v1703
    %vm1705 = vcmp.eq.f32.partialorder %v1661, inf
    %v1706 = vsel %vm1705, %v1661, %v1704
    %vm1707 = vcmp.eq.f32.partialorder %v1661, 0.0
    %v1708 = vand.u32 %v1661, 2147483648
    %v1709 = vsel %vm1707, %v1708, %v1706
    %v1710 = vrsqrt.pop %v1662
    %v1711 = vmul.f32 %v1662, %v1710
    %vm1712 = vcmp.eq.f32.partialorder %v1662, inf
    %v1713 = vsel %vm1712, %v1662, %v1711
    %vm1714 = vcmp.eq.f32.partialorder %v1662, 0.0
    %v1715 = vand.u32 %v1662, 2147483648
    %v1716 = vsel %vm1714, %v1715, %v1713
    %v1717 = vrsqrt.pop %v1663
    %v1718 = vmul.f32 %v1663, %v1717
    %vm1719 = vcmp.eq.f32.partialorder %v1663, inf
    %v1720 = vsel %vm1719, %v1663, %v1718
    %vm1721 = vcmp.eq.f32.partialorder %v1663, 0.0
    %v1722 = vand.u32 %v1663, 2147483648
    %v1723 = vsel %vm1721, %v1722, %v1720
    %v1724 = vrsqrt.pop %v1664
    %v1725 = vmul.f32 %v1664, %v1724
    %vm1726 = vcmp.eq.f32.partialorder %v1664, inf
    %v1727 = vsel %vm1726, %v1664, %v1725
    %vm1728 = vcmp.eq.f32.partialorder %v1664, 0.0
    %v1729 = vand.u32 %v1664, 2147483648
    %v1730 = vsel %vm1728, %v1729, %v1727
    %v1731 = vrsqrt.pop %v1665
    %v1732 = vmul.f32 %v1665, %v1731
    %vm1733 = vcmp.eq.f32.partialorder %v1665, inf
    %v1734 = vsel %vm1733, %v1665, %v1732
    %vm1735 = vcmp.eq.f32.partialorder %v1665, 0.0
    %v1736 = vand.u32 %v1665, 2147483648
    %v1737 = vsel %vm1735, %v1736, %v1734
    %v1738 = vrsqrt.pop %v1666
    %v1739 = vmul.f32 %v1666, %v1738
    %vm1740 = vcmp.eq.f32.partialorder %v1666, inf
    %v1741 = vsel %vm1740, %v1666, %v1739
    %vm1742 = vcmp.eq.f32.partialorder %v1666, 0.0
    %v1743 = vand.u32 %v1666, 2147483648
    %v1744 = vsel %vm1742, %v1743, %v1741
    %v1745 = vrsqrt.pop %v1667
    %v1746 = vmul.f32 %v1667, %v1745
    %vm1747 = vcmp.eq.f32.partialorder %v1667, inf
    %v1748 = vsel %vm1747, %v1667, %v1746
    %vm1749 = vcmp.eq.f32.partialorder %v1667, 0.0
    %v1750 = vand.u32 %v1667, 2147483648
    %v1751 = vsel %vm1749, %v1750, %v1748
    %v1752 = vsub.f32 %v1674, %v479
    %v1753 = vsub.f32 %v1681, %v483
    %v1754 = vsub.f32 %v1688, %v487
    %v1755 = vsub.f32 %v1695, %v491
    %v1756 = vsub.f32 %v1702, %v495
    %v1757 = vsub.f32 %v1709, %v499
    %v1758 = vsub.f32 %v1716, %v503
    %v1759 = vsub.f32 %v1723, %v507
    %v1760 = vsub.f32 %v1730, %v511
    %v1761 = vsub.f32 %v1737, %v515
    %v1762 = vsub.f32 %v1744, %v519
    %v1763 = vsub.f32 %v1751, %v523
    %v1764 = vmul.f32 %v1752, %v1752
    %v1765 = vmul.f32 %v1753, %v1753
    %v1766 = vmul.f32 %v1754, %v1754
    %v1767 = vmul.f32 %v1755, %v1755
    %v1768 = vmul.f32 %v1756, %v1756
    %v1769 = vmul.f32 %v1757, %v1757
    %v1770 = vmul.f32 %v1758, %v1758
    %v1771 = vmul.f32 %v1759, %v1759
    %v1772 = vmul.f32 %v1760, %v1760
    %v1773 = vmul.f32 %v1761, %v1761
    %v1774 = vmul.f32 %v1762, %v1762
    %v1775 = vmul.f32 %v1763, %v1763
    %v1776 = vsel %vm560, %v1764, 0.0
    %v1777 = vsel %vm560, %v1765, 0.0
    %v1778 = vadd.f32 %v1776, %v1777
    %v1779 = vsel %vm560, %v1766, 0.0
    %v1780 = vadd.f32 %v1778, %v1779
    %v1781 = vsel %vm560, %v1767, 0.0
    %v1782 = vadd.f32 %v1780, %v1781
    %v1783 = vsel %vm560, %v1768, 0.0
    %v1784 = vadd.f32 %v1782, %v1783
    %v1785 = vsel %vm560, %v1769, 0.0
    %v1786 = vadd.f32 %v1784, %v1785
    %v1787 = vsel %vm560, %v1770, 0.0
    %v1788 = vadd.f32 %v1786, %v1787
    %v1789 = vsel %vm560, %v1771, 0.0
    %v1790 = vadd.f32 %v1788, %v1789
    %v1791 = vsel %vm560, %v1772, 0.0
    %v1792 = vadd.f32 %v1790, %v1791
    %v1793 = vsel %vm560, %v1773, 0.0
    %v1794 = vadd.f32 %v1792, %v1793
    %v1795 = vsel %vm560, %v1774, 0.0
    %v1796 = vadd.f32 %v1794, %v1795
    %v1797 = vsel %vm560, %v1775, 0.0
    %v1798 = vadd.f32 %v1796, %v1797
    %1799 = vadd.xlane.f32.xlu0 %v1798
    %v1800 = vpop.xlane.xlu0 %1799
    %v1801 = vrot.slane %v1800, 4
    %v1802 = vadd.f32 %v1800, %v1801
    %v1803 = vrot.slane %v1802, 2
    %v1804 = vadd.f32 %v1802, %v1803
    %v1805 = vrot.slane %v1804, 1
    %v1806 = vadd.f32 %v1804, %v1805
    %s1807 = vtos %v1806
    %v1808 = vsub.f32 %v1596, %v598
    %v1809 = vsub.f32 %v1597, %v602
    %v1810 = vsub.f32 %v1598, %v606
    %v1811 = vsub.f32 %v1599, %v610
    %v1812 = vsub.f32 %v1600, %v614
    %v1813 = vsub.f32 %v1601, %v618
    %v1814 = vsub.f32 %v1602, %v622
    %v1815 = vsub.f32 %v1603, %v626
    %v1816 = vsub.f32 %v1604, %v630
    %v1817 = vsub.f32 %v1605, %v634
    %v1818 = vsub.f32 %v1606, %v638
    %v1819 = vsub.f32 %v1607, %v642
    %v1820 = vmul.f32 %v1808, %v1808
    %v1821 = vmul.f32 %v1809, %v1809
    %v1822 = vmul.f32 %v1810, %v1810
    %v1823 = vmul.f32 %v1811, %v1811
    %v1824 = vmul.f32 %v1812, %v1812
    %v1825 = vmul.f32 %v1813, %v1813
    %v1826 = vmul.f32 %v1814, %v1814
    %v1827 = vmul.f32 %v1815, %v1815
    %v1828 = vmul.f32 %v1816, %v1816
    %v1829 = vmul.f32 %v1817, %v1817
    %v1830 = vmul.f32 %v1818, %v1818
    %v1831 = vmul.f32 %v1819, %v1819
    %v1832 = vsel %vm560, %v1820, 0.0
    %v1833 = vsel %vm560, %v1821, 0.0
    %v1834 = vadd.f32 %v1832, %v1833
    %v1835 = vsel %vm560, %v1822, 0.0
    %v1836 = vadd.f32 %v1834, %v1835
    %v1837 = vsel %vm560, %v1823, 0.0
    %v1838 = vadd.f32 %v1836, %v1837
    %v1839 = vsel %vm560, %v1824, 0.0
    %v1840 = vadd.f32 %v1838, %v1839
    %v1841 = vsel %vm560, %v1825, 0.0
    %v1842 = vadd.f32 %v1840, %v1841
    %v1843 = vsel %vm560, %v1826, 0.0
    %v1844 = vadd.f32 %v1842, %v1843
    %v1845 = vsel %vm560, %v1827, 0.0
    %v1846 = vadd.f32 %v1844, %v1845
    %v1847 = vsel %vm560, %v1828, 0.0
    %v1848 = vadd.f32 %v1846, %v1847
    %v1849 = vsel %vm560, %v1829, 0.0
    %v1850 = vadd.f32 %v1848, %v1849
    %v1851 = vsel %vm560, %v1830, 0.0
    %v1852 = vadd.f32 %v1850, %v1851
    %v1853 = vsel %vm560, %v1831, 0.0
    %v1854 = vadd.f32 %v1852, %v1853
    %1855 = vadd.xlane.f32.xlu0 %v1854
    %v1856 = vpop.xlane.xlu0 %1855
    %v1857 = vrot.slane %v1856, 4
    %v1858 = vadd.f32 %v1856, %v1857
    %v1859 = vrot.slane %v1858, 2
    %v1860 = vadd.f32 %v1858, %v1859
    %v1861 = vrot.slane %v1860, 1
    %v1862 = vadd.f32 %v1860, %v1861
    %s1863 = vtos %v1862
    %s1864 = sadd.f32 %s1807, %s1863
    %s1865 = smul.f32 %s1864, 0.4
    %s1866 = smul.f32 %s1865, 0.125
    %1867 = vst [vmem:[#allocation2 + $0x60] sm:$0xff] %v1434
    %1868 = vst [vmem:[#allocation2 + $0x68] sm:$0xff] %v1435
    %1869 = vst [vmem:[#allocation2 + $0x70] sm:$0xff] %v1436
    %1870 = vst [vmem:[#allocation2 + $0x78] sm:$0xff] %v1437
    %1871 = vst [vmem:[#allocation2 + $0x80] sm:$0xff] %v1438
    %1872 = vst [vmem:[#allocation2 + $0x88] sm:$0xff] %v1439
    %v1879 = vcombine.low %v1602, %v1603
    %v1880 = vcombine.low %v1604, %v1605
    %v1881 = vcombine.low %v1606, %v1607
    %v1883 = vunpack.c.l.s4 1966171168
    %v1884 = vunpack.c.0.s8 %v1883
    %v1885 = vlaneseq
    %v1886 = vshrl.u32 %v1885, 7
    %v1887 = vsub.s32 %v1884, %v1886
    %v1888 = vrot.slane %v1879, %v1887
    %v1890 = vunpack.c.l.s4 1966171168
    %v1891 = vunpack.c.0.s8 %v1890
    %v1892 = vlaneseq
    %v1893 = vshrl.u32 %v1892, 7
    %v1894 = vsub.s32 %v1891, %v1893
    %v1895 = vrot.slane %v1880, %v1894
    %v1897 = vunpack.c.l.s4 1966171168
    %v1898 = vunpack.c.0.s8 %v1897
    %v1899 = vlaneseq
    %v1900 = vshrl.u32 %v1899, 7
    %v1901 = vsub.s32 %v1898, %v1900
    %v1902 = vrot.slane %v1881, %v1901
    %v1903 = vcombine.low %v1888, %v1895
    %v1905 = vunpack.c.l.s4 1966171168
    %v1906 = vunpack.c.0.s8 %v1905
    %v1907 = vlaneseq
    %v1908 = vshrl.u32 %v1907, 7
    %v1909 = vsub.s32 %v1906, %v1908
    %v1910 = vrot.slane %v1903, %v1909
    %v1912 = vunpack.c.l.s4 1966171168
    %v1913 = vunpack.c.0.s8 %v1912
    %v1914 = vlaneseq
    %v1915 = vshrl.u32 %v1914, 7
    %v1916 = vsub.s32 %v1913, %v1915
    %v1917 = vrot.slane %v1902, %v1916
    %v1918 = vcombine.low %v1910, %v1917
    %s1920 = scalar_lea.vmem [#allocation9], 2
    %1921 = vst.msk [vmem:[%s1920] ss:$8 sm:$0xf] %vm770, %v1918
    %1922 = vst.msk [vmem:[%s1920] ss:$8 sm:$0x30] %vm770, %v1918
    %s1923 = scalar_lea.vmem [#allocation6], 3
    %v1924 = vld [vmem:[%s1923] ss:$8 sm:$0xf]
    %v1925 = vld [vmem:[%s1923] ss:$8 sm:$0xf0]
    %v1926 = vor.u32 %v1924, %v1925
    %s1927 = scalar_lea.vmem [#allocation6], 67
    %v1928 = vld [vmem:[%s1927] ss:$8 sm:$0xf]
    %v1931 = vlaneseq
    %v1932 = vshrl.u32 %v1931, 7
    %v1933 = vsub.s32 0, %v1932
    %v1934 = vrot.slane %v1926, %v1933
    %v1935 = vlaneseq
    %v1936 = vshrl.u32 %v1935, 7
    %v1937 = vsub.s32 1, %v1936
    %v1938 = vrot.slane %v1926, %v1937
    %v1939 = vlaneseq
    %v1940 = vshrl.u32 %v1939, 7
    %v1941 = vsub.s32 2, %v1940
    %v1942 = vrot.slane %v1926, %v1941
    %v1943 = vlaneseq
    %v1944 = vshrl.u32 %v1943, 7
    %v1945 = vsub.s32 3, %v1944
    %v1946 = vrot.slane %v1926, %v1945
    %v1947 = vlaneseq
    %v1948 = vshrl.u32 %v1947, 7
    %v1949 = vsub.s32 4, %v1948
    %v1950 = vrot.slane %v1926, %v1949
    %v1951 = vlaneseq
    %v1952 = vshrl.u32 %v1951, 7
    %v1953 = vsub.s32 5, %v1952
    %v1954 = vrot.slane %v1926, %v1953
    %v1955 = vlaneseq
    %v1956 = vshrl.u32 %v1955, 7
    %v1957 = vsub.s32 6, %v1956
    %v1958 = vrot.slane %v1926, %v1957
    %v1959 = vlaneseq
    %v1960 = vshrl.u32 %v1959, 7
    %v1961 = vsub.s32 7, %v1960
    %v1962 = vrot.slane %v1926, %v1961
    %v1963 = vlaneseq
    %v1964 = vshrl.u32 %v1963, 7
    %v1965 = vsub.s32 0, %v1964
    %v1966 = vrot.slane %v1928, %v1965
    %v1967 = vlaneseq
    %v1968 = vshrl.u32 %v1967, 7
    %v1969 = vsub.s32 1, %v1968
    %v1970 = vrot.slane %v1928, %v1969
    %v1971 = vlaneseq
    %v1972 = vshrl.u32 %v1971, 7
    %v1973 = vsub.s32 2, %v1972
    %v1974 = vrot.slane %v1928, %v1973
    %v1975 = vlaneseq
    %v1976 = vshrl.u32 %v1975, 7
    %v1977 = vsub.s32 3, %v1976
    %v1978 = vrot.slane %v1928, %v1977
    %v1991 = vadd.f32 %v55, %v1934
    %v1992 = vadd.f32 %v56, %v1938
    %v1993 = vadd.f32 %v57, %v1942
    %v1994 = vadd.f32 %v58, %v1946
    %v1995 = vadd.f32 %v59, %v1950
    %v1996 = vadd.f32 %v60, %v1954
    %v1997 = vadd.f32 %v61, %v1958
    %v1998 = vadd.f32 %v62, %v1962
    %v1999 = vadd.f32 %v63, %v1966
    %v2000 = vadd.f32 %v64, %v1970
    %v2001 = vadd.f32 %v65, %v1974
    %v2002 = vadd.f32 %v66, %v1978
    %v2003 = vtanh.pop %v1991
    %v2004 = vtanh.pop %v1992
    %v2005 = vtanh.pop %v1993
    %v2006 = vtanh.pop %v1994
    %v2007 = vtanh.pop %v1995
    %v2008 = vtanh.pop %v1996
    %v2009 = vtanh.pop %v1997
    %v2010 = vtanh.pop %v1998
    %v2011 = vtanh.pop %v1999
    %v2012 = vtanh.pop %v2000
    %v2013 = vtanh.pop %v2001
    %v2014 = vtanh.pop %v2002
    %v2015 = vrot.slane %v2003, 4
    %v2016 = vadd.f32 %v2003, %v2015
    %v2017 = vrot.slane %v2016, 2
    %v2018 = vadd.f32 %v2016, %v2017
    %v2019 = vrot.slane %v2018, 1
    %v2020 = vadd.f32 %v2018, %v2019
    %v2021 = vrot.slane %v2004, 4
    %v2022 = vadd.f32 %v2004, %v2021
    %v2023 = vrot.slane %v2022, 2
    %v2024 = vadd.f32 %v2022, %v2023
    %v2025 = vrot.slane %v2024, 1
    %v2026 = vadd.f32 %v2024, %v2025
    %v2027 = vrot.slane %v2005, 4
    %v2028 = vadd.f32 %v2005, %v2027
    %v2029 = vrot.slane %v2028, 2
    %v2030 = vadd.f32 %v2028, %v2029
    %v2031 = vrot.slane %v2030, 1
    %v2032 = vadd.f32 %v2030, %v2031
    %v2033 = vrot.slane %v2006, 4
    %v2034 = vadd.f32 %v2006, %v2033
    %v2035 = vrot.slane %v2034, 2
    %v2036 = vadd.f32 %v2034, %v2035
    %v2037 = vrot.slane %v2036, 1
    %v2038 = vadd.f32 %v2036, %v2037
    %v2039 = vrot.slane %v2007, 4
    %v2040 = vadd.f32 %v2007, %v2039
    %v2041 = vrot.slane %v2040, 2
    %v2042 = vadd.f32 %v2040, %v2041
    %v2043 = vrot.slane %v2042, 1
    %v2044 = vadd.f32 %v2042, %v2043
    %v2045 = vrot.slane %v2008, 4
    %v2046 = vadd.f32 %v2008, %v2045
    %v2047 = vrot.slane %v2046, 2
    %v2048 = vadd.f32 %v2046, %v2047
    %v2049 = vrot.slane %v2048, 1
    %v2050 = vadd.f32 %v2048, %v2049
    %v2051 = vrot.slane %v2009, 4
    %v2052 = vadd.f32 %v2009, %v2051
    %v2053 = vrot.slane %v2052, 2
    %v2054 = vadd.f32 %v2052, %v2053
    %v2055 = vrot.slane %v2054, 1
    %v2056 = vadd.f32 %v2054, %v2055
    %v2057 = vrot.slane %v2010, 4
    %v2058 = vadd.f32 %v2010, %v2057
    %v2059 = vrot.slane %v2058, 2
    %v2060 = vadd.f32 %v2058, %v2059
    %v2061 = vrot.slane %v2060, 1
    %v2062 = vadd.f32 %v2060, %v2061
    %v2063 = vrot.slane %v2011, 4
    %v2064 = vadd.f32 %v2011, %v2063
    %v2065 = vrot.slane %v2064, 2
    %v2066 = vadd.f32 %v2064, %v2065
    %v2067 = vrot.slane %v2066, 1
    %v2068 = vadd.f32 %v2066, %v2067
    %v2069 = vrot.slane %v2012, 4
    %v2070 = vadd.f32 %v2012, %v2069
    %v2071 = vrot.slane %v2070, 2
    %v2072 = vadd.f32 %v2070, %v2071
    %v2073 = vrot.slane %v2072, 1
    %v2074 = vadd.f32 %v2072, %v2073
    %v2075 = vrot.slane %v2013, 4
    %v2076 = vadd.f32 %v2013, %v2075
    %v2077 = vrot.slane %v2076, 2
    %v2078 = vadd.f32 %v2076, %v2077
    %v2079 = vrot.slane %v2078, 1
    %v2080 = vadd.f32 %v2078, %v2079
    %v2081 = vrot.slane %v2014, 4
    %v2082 = vadd.f32 %v2014, %v2081
    %v2083 = vrot.slane %v2082, 2
    %v2084 = vadd.f32 %v2082, %v2083
    %v2085 = vrot.slane %v2084, 1
    %v2086 = vadd.f32 %v2084, %v2085
    %v2087 = vmul.f32 %v2003, %v2003
    %v2088 = vmul.f32 %v2004, %v2004
    %v2089 = vmul.f32 %v2005, %v2005
    %v2090 = vmul.f32 %v2006, %v2006
    %v2091 = vmul.f32 %v2007, %v2007
    %v2092 = vmul.f32 %v2008, %v2008
    %v2093 = vmul.f32 %v2009, %v2009
    %v2094 = vmul.f32 %v2010, %v2010
    %v2095 = vmul.f32 %v2011, %v2011
    %v2096 = vmul.f32 %v2012, %v2012
    %v2097 = vmul.f32 %v2013, %v2013
    %v2098 = vmul.f32 %v2014, %v2014
    %v2099 = vrot.slane %v2087, 4
    %v2100 = vadd.f32 %v2087, %v2099
    %v2101 = vrot.slane %v2100, 2
    %v2102 = vadd.f32 %v2100, %v2101
    %v2103 = vrot.slane %v2102, 1
    %v2104 = vadd.f32 %v2102, %v2103
    %v2105 = vrot.slane %v2088, 4
    %v2106 = vadd.f32 %v2088, %v2105
    %v2107 = vrot.slane %v2106, 2
    %v2108 = vadd.f32 %v2106, %v2107
    %v2109 = vrot.slane %v2108, 1
    %v2110 = vadd.f32 %v2108, %v2109
    %v2111 = vrot.slane %v2089, 4
    %v2112 = vadd.f32 %v2089, %v2111
    %v2113 = vrot.slane %v2112, 2
    %v2114 = vadd.f32 %v2112, %v2113
    %v2115 = vrot.slane %v2114, 1
    %v2116 = vadd.f32 %v2114, %v2115
    %v2117 = vrot.slane %v2090, 4
    %v2118 = vadd.f32 %v2090, %v2117
    %v2119 = vrot.slane %v2118, 2
    %v2120 = vadd.f32 %v2118, %v2119
    %v2121 = vrot.slane %v2120, 1
    %v2122 = vadd.f32 %v2120, %v2121
    %v2123 = vrot.slane %v2091, 4
    %v2124 = vadd.f32 %v2091, %v2123
    %v2125 = vrot.slane %v2124, 2
    %v2126 = vadd.f32 %v2124, %v2125
    %v2127 = vrot.slane %v2126, 1
    %v2128 = vadd.f32 %v2126, %v2127
    %v2129 = vrot.slane %v2092, 4
    %v2130 = vadd.f32 %v2092, %v2129
    %v2131 = vrot.slane %v2130, 2
    %v2132 = vadd.f32 %v2130, %v2131
    %v2133 = vrot.slane %v2132, 1
    %v2134 = vadd.f32 %v2132, %v2133
    %v2135 = vrot.slane %v2093, 4
    %v2136 = vadd.f32 %v2093, %v2135
    %v2137 = vrot.slane %v2136, 2
    %v2138 = vadd.f32 %v2136, %v2137
    %v2139 = vrot.slane %v2138, 1
    %v2140 = vadd.f32 %v2138, %v2139
    %v2141 = vrot.slane %v2094, 4
    %v2142 = vadd.f32 %v2094, %v2141
    %v2143 = vrot.slane %v2142, 2
    %v2144 = vadd.f32 %v2142, %v2143
    %v2145 = vrot.slane %v2144, 1
    %v2146 = vadd.f32 %v2144, %v2145
    %v2147 = vrot.slane %v2095, 4
    %v2148 = vadd.f32 %v2095, %v2147
    %v2149 = vrot.slane %v2148, 2
    %v2150 = vadd.f32 %v2148, %v2149
    %v2151 = vrot.slane %v2150, 1
    %v2152 = vadd.f32 %v2150, %v2151
    %v2153 = vrot.slane %v2096, 4
    %v2154 = vadd.f32 %v2096, %v2153
    %v2155 = vrot.slane %v2154, 2
    %v2156 = vadd.f32 %v2154, %v2155
    %v2157 = vrot.slane %v2156, 1
    %v2158 = vadd.f32 %v2156, %v2157
    %v2159 = vrot.slane %v2097, 4
    %v2160 = vadd.f32 %v2097, %v2159
    %v2161 = vrot.slane %v2160, 2
    %v2162 = vadd.f32 %v2160, %v2161
    %v2163 = vrot.slane %v2162, 1
    %v2164 = vadd.f32 %v2162, %v2163
    %v2165 = vrot.slane %v2098, 4
    %v2166 = vadd.f32 %v2098, %v2165
    %v2167 = vrot.slane %v2166, 2
    %v2168 = vadd.f32 %v2166, %v2167
    %v2169 = vrot.slane %v2168, 1
    %v2170 = vadd.f32 %v2168, %v2169
    %v2171 = vmul.f32 %v2020, 0.125
    %v2172 = vmul.f32 %v2026, 0.125
    %v2173 = vmul.f32 %v2032, 0.125
    %v2174 = vmul.f32 %v2038, 0.125
    %v2175 = vmul.f32 %v2044, 0.125
    %v2176 = vmul.f32 %v2050, 0.125
    %v2177 = vmul.f32 %v2056, 0.125
    %v2178 = vmul.f32 %v2062, 0.125
    %v2179 = vmul.f32 %v2068, 0.125
    %v2180 = vmul.f32 %v2074, 0.125
    %v2181 = vmul.f32 %v2080, 0.125
    %v2182 = vmul.f32 %v2086, 0.125
    %v2183 = vmul.f32 %v2171, 8.0
    %v2184 = vmul.f32 %v2172, 8.0
    %v2185 = vmul.f32 %v2173, 8.0
    %v2186 = vmul.f32 %v2174, 8.0
    %v2187 = vmul.f32 %v2175, 8.0
    %v2188 = vmul.f32 %v2176, 8.0
    %v2189 = vmul.f32 %v2177, 8.0
    %v2190 = vmul.f32 %v2178, 8.0
    %v2191 = vmul.f32 %v2179, 8.0
    %v2192 = vmul.f32 %v2180, 8.0
    %v2193 = vmul.f32 %v2181, 8.0
    %v2194 = vmul.f32 %v2182, 8.0
    %v2195 = vmul.f32 %v2183, %v2171
    %v2196 = vmul.f32 %v2184, %v2172
    %v2197 = vmul.f32 %v2185, %v2173
    %v2198 = vmul.f32 %v2186, %v2174
    %v2199 = vmul.f32 %v2187, %v2175
    %v2200 = vmul.f32 %v2188, %v2176
    %v2201 = vmul.f32 %v2189, %v2177
    %v2202 = vmul.f32 %v2190, %v2178
    %v2203 = vmul.f32 %v2191, %v2179
    %v2204 = vmul.f32 %v2192, %v2180
    %v2205 = vmul.f32 %v2193, %v2181
    %v2206 = vmul.f32 %v2194, %v2182
    %v2207 = vsub.f32 %v2104, %v2195
    %v2208 = vsub.f32 %v2110, %v2196
    %v2209 = vsub.f32 %v2116, %v2197
    %v2210 = vsub.f32 %v2122, %v2198
    %v2211 = vsub.f32 %v2128, %v2199
    %v2212 = vsub.f32 %v2134, %v2200
    %v2213 = vsub.f32 %v2140, %v2201
    %v2214 = vsub.f32 %v2146, %v2202
    %v2215 = vsub.f32 %v2152, %v2203
    %v2216 = vsub.f32 %v2158, %v2204
    %v2217 = vsub.f32 %v2164, %v2205
    %v2218 = vsub.f32 %v2170, %v2206
    %v2219 = vmul.f32 %v2207, 0.14285715
    %v2220 = vmul.f32 %v2208, 0.14285715
    %v2221 = vmul.f32 %v2209, 0.14285715
    %v2222 = vmul.f32 %v2210, 0.14285715
    %v2223 = vmul.f32 %v2211, 0.14285715
    %v2224 = vmul.f32 %v2212, 0.14285715
    %v2225 = vmul.f32 %v2213, 0.14285715
    %v2226 = vmul.f32 %v2214, 0.14285715
    %v2227 = vmul.f32 %v2215, 0.14285715
    %v2228 = vmul.f32 %v2216, 0.14285715
    %v2229 = vmul.f32 %v2217, 0.14285715
    %v2230 = vmul.f32 %v2218, 0.14285715
    %v2231 = vmax.f32 %v2219, 0.0
    %v2232 = vmax.f32 %v2220, 0.0
    %v2233 = vmax.f32 %v2221, 0.0
    %v2234 = vmax.f32 %v2222, 0.0
    %v2235 = vmax.f32 %v2223, 0.0
    %v2236 = vmax.f32 %v2224, 0.0
    %v2237 = vmax.f32 %v2225, 0.0
    %v2238 = vmax.f32 %v2226, 0.0
    %v2239 = vmax.f32 %v2227, 0.0
    %v2240 = vmax.f32 %v2228, 0.0
    %v2241 = vmax.f32 %v2229, 0.0
    %v2242 = vmax.f32 %v2230, 0.0
    %v2243 = vrsqrt.pop %v2231
    %v2244 = vmul.f32 %v2231, %v2243
    %vm2245 = vcmp.eq.f32.partialorder %v2231, inf
    %v2246 = vsel %vm2245, %v2231, %v2244
    %vm2247 = vcmp.eq.f32.partialorder %v2231, 0.0
    %v2248 = vand.u32 %v2231, 2147483648
    %v2249 = vsel %vm2247, %v2248, %v2246
    %v2250 = vrsqrt.pop %v2232
    %v2251 = vmul.f32 %v2232, %v2250
    %vm2252 = vcmp.eq.f32.partialorder %v2232, inf
    %v2253 = vsel %vm2252, %v2232, %v2251
    %vm2254 = vcmp.eq.f32.partialorder %v2232, 0.0
    %v2255 = vand.u32 %v2232, 2147483648
    %v2256 = vsel %vm2254, %v2255, %v2253
    %v2257 = vrsqrt.pop %v2233
    %v2258 = vmul.f32 %v2233, %v2257
    %vm2259 = vcmp.eq.f32.partialorder %v2233, inf
    %v2260 = vsel %vm2259, %v2233, %v2258
    %vm2261 = vcmp.eq.f32.partialorder %v2233, 0.0
    %v2262 = vand.u32 %v2233, 2147483648
    %v2263 = vsel %vm2261, %v2262, %v2260
    %v2264 = vrsqrt.pop %v2234
    %v2265 = vmul.f32 %v2234, %v2264
    %vm2266 = vcmp.eq.f32.partialorder %v2234, inf
    %v2267 = vsel %vm2266, %v2234, %v2265
    %vm2268 = vcmp.eq.f32.partialorder %v2234, 0.0
    %v2269 = vand.u32 %v2234, 2147483648
    %v2270 = vsel %vm2268, %v2269, %v2267
    %v2271 = vrsqrt.pop %v2235
    %v2272 = vmul.f32 %v2235, %v2271
    %vm2273 = vcmp.eq.f32.partialorder %v2235, inf
    %v2274 = vsel %vm2273, %v2235, %v2272
    %vm2275 = vcmp.eq.f32.partialorder %v2235, 0.0
    %v2276 = vand.u32 %v2235, 2147483648
    %v2277 = vsel %vm2275, %v2276, %v2274
    %v2278 = vrsqrt.pop %v2236
    %v2279 = vmul.f32 %v2236, %v2278
    %vm2280 = vcmp.eq.f32.partialorder %v2236, inf
    %v2281 = vsel %vm2280, %v2236, %v2279
    %vm2282 = vcmp.eq.f32.partialorder %v2236, 0.0
    %v2283 = vand.u32 %v2236, 2147483648
    %v2284 = vsel %vm2282, %v2283, %v2281
    %v2285 = vrsqrt.pop %v2237
    %v2286 = vmul.f32 %v2237, %v2285
    %vm2287 = vcmp.eq.f32.partialorder %v2237, inf
    %v2288 = vsel %vm2287, %v2237, %v2286
    %vm2289 = vcmp.eq.f32.partialorder %v2237, 0.0
    %v2290 = vand.u32 %v2237, 2147483648
    %v2291 = vsel %vm2289, %v2290, %v2288
    %v2292 = vrsqrt.pop %v2238
    %v2293 = vmul.f32 %v2238, %v2292
    %vm2294 = vcmp.eq.f32.partialorder %v2238, inf
    %v2295 = vsel %vm2294, %v2238, %v2293
    %vm2296 = vcmp.eq.f32.partialorder %v2238, 0.0
    %v2297 = vand.u32 %v2238, 2147483648
    %v2298 = vsel %vm2296, %v2297, %v2295
    %v2299 = vrsqrt.pop %v2239
    %v2300 = vmul.f32 %v2239, %v2299
    %vm2301 = vcmp.eq.f32.partialorder %v2239, inf
    %v2302 = vsel %vm2301, %v2239, %v2300
    %vm2303 = vcmp.eq.f32.partialorder %v2239, 0.0
    %v2304 = vand.u32 %v2239, 2147483648
    %v2305 = vsel %vm2303, %v2304, %v2302
    %v2306 = vrsqrt.pop %v2240
    %v2307 = vmul.f32 %v2240, %v2306
    %vm2308 = vcmp.eq.f32.partialorder %v2240, inf
    %v2309 = vsel %vm2308, %v2240, %v2307
    %vm2310 = vcmp.eq.f32.partialorder %v2240, 0.0
    %v2311 = vand.u32 %v2240, 2147483648
    %v2312 = vsel %vm2310, %v2311, %v2309
    %v2313 = vrsqrt.pop %v2241
    %v2314 = vmul.f32 %v2241, %v2313
    %vm2315 = vcmp.eq.f32.partialorder %v2241, inf
    %v2316 = vsel %vm2315, %v2241, %v2314
    %vm2317 = vcmp.eq.f32.partialorder %v2241, 0.0
    %v2318 = vand.u32 %v2241, 2147483648
    %v2319 = vsel %vm2317, %v2318, %v2316
    %v2320 = vrsqrt.pop %v2242
    %v2321 = vmul.f32 %v2242, %v2320
    %vm2322 = vcmp.eq.f32.partialorder %v2242, inf
    %v2323 = vsel %vm2322, %v2242, %v2321
    %vm2324 = vcmp.eq.f32.partialorder %v2242, 0.0
    %v2325 = vand.u32 %v2242, 2147483648
    %v2326 = vsel %vm2324, %v2325, %v2323
    %v2327 = vsub.f32 %v2249, %v479
    %v2328 = vsub.f32 %v2256, %v483
    %v2329 = vsub.f32 %v2263, %v487
    %v2330 = vsub.f32 %v2270, %v491
    %v2331 = vsub.f32 %v2277, %v495
    %v2332 = vsub.f32 %v2284, %v499
    %v2333 = vsub.f32 %v2291, %v503
    %v2334 = vsub.f32 %v2298, %v507
    %v2335 = vsub.f32 %v2305, %v511
    %v2336 = vsub.f32 %v2312, %v515
    %v2337 = vsub.f32 %v2319, %v519
    %v2338 = vsub.f32 %v2326, %v523
    %v2339 = vmul.f32 %v2327, %v2327
    %v2340 = vmul.f32 %v2328, %v2328
    %v2341 = vmul.f32 %v2329, %v2329
    %v2342 = vmul.f32 %v2330, %v2330
    %v2343 = vmul.f32 %v2331, %v2331
    %v2344 = vmul.f32 %v2332, %v2332
    %v2345 = vmul.f32 %v2333, %v2333
    %v2346 = vmul.f32 %v2334, %v2334
    %v2347 = vmul.f32 %v2335, %v2335
    %v2348 = vmul.f32 %v2336, %v2336
    %v2349 = vmul.f32 %v2337, %v2337
    %v2350 = vmul.f32 %v2338, %v2338
    %v2351 = vsel %vm560, %v2339, 0.0
    %v2352 = vsel %vm560, %v2340, 0.0
    %v2353 = vadd.f32 %v2351, %v2352
    %v2354 = vsel %vm560, %v2341, 0.0
    %v2355 = vadd.f32 %v2353, %v2354
    %v2356 = vsel %vm560, %v2342, 0.0
    %v2357 = vadd.f32 %v2355, %v2356
    %v2358 = vsel %vm560, %v2343, 0.0
    %v2359 = vadd.f32 %v2357, %v2358
    %v2360 = vsel %vm560, %v2344, 0.0
    %v2361 = vadd.f32 %v2359, %v2360
    %v2362 = vsel %vm560, %v2345, 0.0
    %v2363 = vadd.f32 %v2361, %v2362
    %v2364 = vsel %vm560, %v2346, 0.0
    %v2365 = vadd.f32 %v2363, %v2364
    %v2366 = vsel %vm560, %v2347, 0.0
    %v2367 = vadd.f32 %v2365, %v2366
    %v2368 = vsel %vm560, %v2348, 0.0
    %v2369 = vadd.f32 %v2367, %v2368
    %v2370 = vsel %vm560, %v2349, 0.0
    %v2371 = vadd.f32 %v2369, %v2370
    %v2372 = vsel %vm560, %v2350, 0.0
    %v2373 = vadd.f32 %v2371, %v2372
    %2374 = vadd.xlane.f32.xlu0 %v2373
    %v2375 = vpop.xlane.xlu0 %2374
    %v2376 = vrot.slane %v2375, 4
    %v2377 = vadd.f32 %v2375, %v2376
    %v2378 = vrot.slane %v2377, 2
    %v2379 = vadd.f32 %v2377, %v2378
    %v2380 = vrot.slane %v2379, 1
    %v2381 = vadd.f32 %v2379, %v2380
    %s2382 = vtos %v2381
    %v2383 = vsub.f32 %v2171, %v598
    %v2384 = vsub.f32 %v2172, %v602
    %v2385 = vsub.f32 %v2173, %v606
    %v2386 = vsub.f32 %v2174, %v610
    %v2387 = vsub.f32 %v2175, %v614
    %v2388 = vsub.f32 %v2176, %v618
    %v2389 = vsub.f32 %v2177, %v622
    %v2390 = vsub.f32 %v2178, %v626
    %v2391 = vsub.f32 %v2179, %v630
    %v2392 = vsub.f32 %v2180, %v634
    %v2393 = vsub.f32 %v2181, %v638
    %v2394 = vsub.f32 %v2182, %v642
    %v2395 = vmul.f32 %v2383, %v2383
    %v2396 = vmul.f32 %v2384, %v2384
    %v2397 = vmul.f32 %v2385, %v2385
    %v2398 = vmul.f32 %v2386, %v2386
    %v2399 = vmul.f32 %v2387, %v2387
    %v2400 = vmul.f32 %v2388, %v2388
    %v2401 = vmul.f32 %v2389, %v2389
    %v2402 = vmul.f32 %v2390, %v2390
    %v2403 = vmul.f32 %v2391, %v2391
    %v2404 = vmul.f32 %v2392, %v2392
    %v2405 = vmul.f32 %v2393, %v2393
    %v2406 = vmul.f32 %v2394, %v2394
    %v2407 = vsel %vm560, %v2395, 0.0
    %v2408 = vsel %vm560, %v2396, 0.0
    %v2409 = vadd.f32 %v2407, %v2408
    %v2410 = vsel %vm560, %v2397, 0.0
    %v2411 = vadd.f32 %v2409, %v2410
    %v2412 = vsel %vm560, %v2398, 0.0
    %v2413 = vadd.f32 %v2411, %v2412
    %v2414 = vsel %vm560, %v2399, 0.0
    %v2415 = vadd.f32 %v2413, %v2414
    %v2416 = vsel %vm560, %v2400, 0.0
    %v2417 = vadd.f32 %v2415, %v2416
    %v2418 = vsel %vm560, %v2401, 0.0
    %v2419 = vadd.f32 %v2417, %v2418
    %v2420 = vsel %vm560, %v2402, 0.0
    %v2421 = vadd.f32 %v2419, %v2420
    %v2422 = vsel %vm560, %v2403, 0.0
    %v2423 = vadd.f32 %v2421, %v2422
    %v2424 = vsel %vm560, %v2404, 0.0
    %v2425 = vadd.f32 %v2423, %v2424
    %v2426 = vsel %vm560, %v2405, 0.0
    %v2427 = vadd.f32 %v2425, %v2426
    %v2428 = vsel %vm560, %v2406, 0.0
    %v2429 = vadd.f32 %v2427, %v2428
    %2430 = vadd.xlane.f32.xlu0 %v2429
    %v2431 = vpop.xlane.xlu0 %2430
    %v2432 = vrot.slane %v2431, 4
    %v2433 = vadd.f32 %v2431, %v2432
    %v2434 = vrot.slane %v2433, 2
    %v2435 = vadd.f32 %v2433, %v2434
    %v2436 = vrot.slane %v2435, 1
    %v2437 = vadd.f32 %v2435, %v2436
    %s2438 = vtos %v2437
    %s2439 = sadd.f32 %s2382, %s2438
    %s2440 = smul.f32 %s2439, 0.4
    %s2441 = smul.f32 %s2440, 0.125
    %2442 = vst [vmem:[#allocation2 + $0x90] sm:$0xff] %v2009
    %2443 = vst [vmem:[#allocation2 + $0x98] sm:$0xff] %v2010
    %2444 = vst [vmem:[#allocation2 + $0xa0] sm:$0xff] %v2011
    %2445 = vst [vmem:[#allocation2 + $0xa8] sm:$0xff] %v2012
    %2446 = vst [vmem:[#allocation2 + $0xb0] sm:$0xff] %v2013
    %2447 = vst [vmem:[#allocation2 + $0xb8] sm:$0xff] %v2014
    %v2454 = vcombine.low %v2177, %v2178
    %v2455 = vcombine.low %v2179, %v2180
    %v2456 = vcombine.low %v2181, %v2182
    %v2458 = vunpack.c.l.s4 1966171168
    %v2459 = vunpack.c.0.s8 %v2458
    %v2460 = vlaneseq
    %v2461 = vshrl.u32 %v2460, 7
    %v2462 = vsub.s32 %v2459, %v2461
    %v2463 = vrot.slane %v2454, %v2462
    %v2465 = vunpack.c.l.s4 1966171168
    %v2466 = vunpack.c.0.s8 %v2465
    %v2467 = vlaneseq
    %v2468 = vshrl.u32 %v2467, 7
    %v2469 = vsub.s32 %v2466, %v2468
    %v2470 = vrot.slane %v2455, %v2469
    %v2472 = vunpack.c.l.s4 1966171168
    %v2473 = vunpack.c.0.s8 %v2472
    %v2474 = vlaneseq
    %v2475 = vshrl.u32 %v2474, 7
    %v2476 = vsub.s32 %v2473, %v2475
    %v2477 = vrot.slane %v2456, %v2476
    %v2478 = vcombine.low %v2463, %v2470
    %v2480 = vunpack.c.l.s4 1966171168
    %v2481 = vunpack.c.0.s8 %v2480
    %v2482 = vlaneseq
    %v2483 = vshrl.u32 %v2482, 7
    %v2484 = vsub.s32 %v2481, %v2483
    %v2485 = vrot.slane %v2478, %v2484
    %v2487 = vunpack.c.l.s4 1966171168
    %v2488 = vunpack.c.0.s8 %v2487
    %v2489 = vlaneseq
    %v2490 = vshrl.u32 %v2489, 7
    %v2491 = vsub.s32 %v2488, %v2490
    %v2492 = vrot.slane %v2477, %v2491
    %v2493 = vcombine.low %v2485, %v2492
    %s2495 = scalar_lea.vmem [#allocation9], 3
    %2496 = vst.msk [vmem:[%s2495] ss:$8 sm:$0xf] %vm770, %v2493
    %2497 = vst.msk [vmem:[%s2495] ss:$8 sm:$0x30] %vm770, %v2493
    %s2498 = scalar_lea.vmem [#allocation6], 4
    %v2499 = vld [vmem:[%s2498] ss:$8 sm:$0xf]
    %v2500 = vld [vmem:[%s2498] ss:$8 sm:$0xf0]
    %v2501 = vor.u32 %v2499, %v2500
    %s2502 = scalar_lea.vmem [#allocation6], 68
    %v2503 = vld [vmem:[%s2502] ss:$8 sm:$0xf]
    %v2506 = vlaneseq
    %v2507 = vshrl.u32 %v2506, 7
    %v2508 = vsub.s32 0, %v2507
    %v2509 = vrot.slane %v2501, %v2508
    %v2510 = vlaneseq
    %v2511 = vshrl.u32 %v2510, 7
    %v2512 = vsub.s32 1, %v2511
    %v2513 = vrot.slane %v2501, %v2512
    %v2514 = vlaneseq
    %v2515 = vshrl.u32 %v2514, 7
    %v2516 = vsub.s32 2, %v2515
    %v2517 = vrot.slane %v2501, %v2516
    %v2518 = vlaneseq
    %v2519 = vshrl.u32 %v2518, 7
    %v2520 = vsub.s32 3, %v2519
    %v2521 = vrot.slane %v2501, %v2520
    %v2522 = vlaneseq
    %v2523 = vshrl.u32 %v2522, 7
    %v2524 = vsub.s32 4, %v2523
    %v2525 = vrot.slane %v2501, %v2524
    %v2526 = vlaneseq
    %v2527 = vshrl.u32 %v2526, 7
    %v2528 = vsub.s32 5, %v2527
    %v2529 = vrot.slane %v2501, %v2528
    %v2530 = vlaneseq
    %v2531 = vshrl.u32 %v2530, 7
    %v2532 = vsub.s32 6, %v2531
    %v2533 = vrot.slane %v2501, %v2532
    %v2534 = vlaneseq
    %v2535 = vshrl.u32 %v2534, 7
    %v2536 = vsub.s32 7, %v2535
    %v2537 = vrot.slane %v2501, %v2536
    %v2538 = vlaneseq
    %v2539 = vshrl.u32 %v2538, 7
    %v2540 = vsub.s32 0, %v2539
    %v2541 = vrot.slane %v2503, %v2540
    %v2542 = vlaneseq
    %v2543 = vshrl.u32 %v2542, 7
    %v2544 = vsub.s32 1, %v2543
    %v2545 = vrot.slane %v2503, %v2544
    %v2546 = vlaneseq
    %v2547 = vshrl.u32 %v2546, 7
    %v2548 = vsub.s32 2, %v2547
    %v2549 = vrot.slane %v2503, %v2548
    %v2550 = vlaneseq
    %v2551 = vshrl.u32 %v2550, 7
    %v2552 = vsub.s32 3, %v2551
    %v2553 = vrot.slane %v2503, %v2552
    %v2566 = vadd.f32 %v55, %v2509
    %v2567 = vadd.f32 %v56, %v2513
    %v2568 = vadd.f32 %v57, %v2517
    %v2569 = vadd.f32 %v58, %v2521
    %v2570 = vadd.f32 %v59, %v2525
    %v2571 = vadd.f32 %v60, %v2529
    %v2572 = vadd.f32 %v61, %v2533
    %v2573 = vadd.f32 %v62, %v2537
    %v2574 = vadd.f32 %v63, %v2541
    %v2575 = vadd.f32 %v64, %v2545
    %v2576 = vadd.f32 %v65, %v2549
    %v2577 = vadd.f32 %v66, %v2553
    %v2578 = vtanh.pop %v2566
    %v2579 = vtanh.pop %v2567
    %v2580 = vtanh.pop %v2568
    %v2581 = vtanh.pop %v2569
    %v2582 = vtanh.pop %v2570
    %v2583 = vtanh.pop %v2571
    %v2584 = vtanh.pop %v2572
    %v2585 = vtanh.pop %v2573
    %v2586 = vtanh.pop %v2574
    %v2587 = vtanh.pop %v2575
    %v2588 = vtanh.pop %v2576
    %v2589 = vtanh.pop %v2577
    %v2590 = vrot.slane %v2578, 4
    %v2591 = vadd.f32 %v2578, %v2590
    %v2592 = vrot.slane %v2591, 2
    %v2593 = vadd.f32 %v2591, %v2592
    %v2594 = vrot.slane %v2593, 1
    %v2595 = vadd.f32 %v2593, %v2594
    %v2596 = vrot.slane %v2579, 4
    %v2597 = vadd.f32 %v2579, %v2596
    %v2598 = vrot.slane %v2597, 2
    %v2599 = vadd.f32 %v2597, %v2598
    %v2600 = vrot.slane %v2599, 1
    %v2601 = vadd.f32 %v2599, %v2600
    %v2602 = vrot.slane %v2580, 4
    %v2603 = vadd.f32 %v2580, %v2602
    %v2604 = vrot.slane %v2603, 2
    %v2605 = vadd.f32 %v2603, %v2604
    %v2606 = vrot.slane %v2605, 1
    %v2607 = vadd.f32 %v2605, %v2606
    %v2608 = vrot.slane %v2581, 4
    %v2609 = vadd.f32 %v2581, %v2608
    %v2610 = vrot.slane %v2609, 2
    %v2611 = vadd.f32 %v2609, %v2610
    %v2612 = vrot.slane %v2611, 1
    %v2613 = vadd.f32 %v2611, %v2612
    %v2614 = vrot.slane %v2582, 4
    %v2615 = vadd.f32 %v2582, %v2614
    %v2616 = vrot.slane %v2615, 2
    %v2617 = vadd.f32 %v2615, %v2616
    %v2618 = vrot.slane %v2617, 1
    %v2619 = vadd.f32 %v2617, %v2618
    %v2620 = vrot.slane %v2583, 4
    %v2621 = vadd.f32 %v2583, %v2620
    %v2622 = vrot.slane %v2621, 2
    %v2623 = vadd.f32 %v2621, %v2622
    %v2624 = vrot.slane %v2623, 1
    %v2625 = vadd.f32 %v2623, %v2624
    %v2626 = vrot.slane %v2584, 4
    %v2627 = vadd.f32 %v2584, %v2626
    %v2628 = vrot.slane %v2627, 2
    %v2629 = vadd.f32 %v2627, %v2628
    %v2630 = vrot.slane %v2629, 1
    %v2631 = vadd.f32 %v2629, %v2630
    %v2632 = vrot.slane %v2585, 4
    %v2633 = vadd.f32 %v2585, %v2632
    %v2634 = vrot.slane %v2633, 2
    %v2635 = vadd.f32 %v2633, %v2634
    %v2636 = vrot.slane %v2635, 1
    %v2637 = vadd.f32 %v2635, %v2636
    %v2638 = vrot.slane %v2586, 4
    %v2639 = vadd.f32 %v2586, %v2638
    %v2640 = vrot.slane %v2639, 2
    %v2641 = vadd.f32 %v2639, %v2640
    %v2642 = vrot.slane %v2641, 1
    %v2643 = vadd.f32 %v2641, %v2642
    %v2644 = vrot.slane %v2587, 4
    %v2645 = vadd.f32 %v2587, %v2644
    %v2646 = vrot.slane %v2645, 2
    %v2647 = vadd.f32 %v2645, %v2646
    %v2648 = vrot.slane %v2647, 1
    %v2649 = vadd.f32 %v2647, %v2648
    %v2650 = vrot.slane %v2588, 4
    %v2651 = vadd.f32 %v2588, %v2650
    %v2652 = vrot.slane %v2651, 2
    %v2653 = vadd.f32 %v2651, %v2652
    %v2654 = vrot.slane %v2653, 1
    %v2655 = vadd.f32 %v2653, %v2654
    %v2656 = vrot.slane %v2589, 4
    %v2657 = vadd.f32 %v2589, %v2656
    %v2658 = vrot.slane %v2657, 2
    %v2659 = vadd.f32 %v2657, %v2658
    %v2660 = vrot.slane %v2659, 1
    %v2661 = vadd.f32 %v2659, %v2660
    %v2662 = vmul.f32 %v2578, %v2578
    %v2663 = vmul.f32 %v2579, %v2579
    %v2664 = vmul.f32 %v2580, %v2580
    %v2665 = vmul.f32 %v2581, %v2581
    %v2666 = vmul.f32 %v2582, %v2582
    %v2667 = vmul.f32 %v2583, %v2583
    %v2668 = vmul.f32 %v2584, %v2584
    %v2669 = vmul.f32 %v2585, %v2585
    %v2670 = vmul.f32 %v2586, %v2586
    %v2671 = vmul.f32 %v2587, %v2587
    %v2672 = vmul.f32 %v2588, %v2588
    %v2673 = vmul.f32 %v2589, %v2589
    %v2674 = vrot.slane %v2662, 4
    %v2675 = vadd.f32 %v2662, %v2674
    %v2676 = vrot.slane %v2675, 2
    %v2677 = vadd.f32 %v2675, %v2676
    %v2678 = vrot.slane %v2677, 1
    %v2679 = vadd.f32 %v2677, %v2678
    %v2680 = vrot.slane %v2663, 4
    %v2681 = vadd.f32 %v2663, %v2680
    %v2682 = vrot.slane %v2681, 2
    %v2683 = vadd.f32 %v2681, %v2682
    %v2684 = vrot.slane %v2683, 1
    %v2685 = vadd.f32 %v2683, %v2684
    %v2686 = vrot.slane %v2664, 4
    %v2687 = vadd.f32 %v2664, %v2686
    %v2688 = vrot.slane %v2687, 2
    %v2689 = vadd.f32 %v2687, %v2688
    %v2690 = vrot.slane %v2689, 1
    %v2691 = vadd.f32 %v2689, %v2690
    %v2692 = vrot.slane %v2665, 4
    %v2693 = vadd.f32 %v2665, %v2692
    %v2694 = vrot.slane %v2693, 2
    %v2695 = vadd.f32 %v2693, %v2694
    %v2696 = vrot.slane %v2695, 1
    %v2697 = vadd.f32 %v2695, %v2696
    %v2698 = vrot.slane %v2666, 4
    %v2699 = vadd.f32 %v2666, %v2698
    %v2700 = vrot.slane %v2699, 2
    %v2701 = vadd.f32 %v2699, %v2700
    %v2702 = vrot.slane %v2701, 1
    %v2703 = vadd.f32 %v2701, %v2702
    %v2704 = vrot.slane %v2667, 4
    %v2705 = vadd.f32 %v2667, %v2704
    %v2706 = vrot.slane %v2705, 2
    %v2707 = vadd.f32 %v2705, %v2706
    %v2708 = vrot.slane %v2707, 1
    %v2709 = vadd.f32 %v2707, %v2708
    %v2710 = vrot.slane %v2668, 4
    %v2711 = vadd.f32 %v2668, %v2710
    %v2712 = vrot.slane %v2711, 2
    %v2713 = vadd.f32 %v2711, %v2712
    %v2714 = vrot.slane %v2713, 1
    %v2715 = vadd.f32 %v2713, %v2714
    %v2716 = vrot.slane %v2669, 4
    %v2717 = vadd.f32 %v2669, %v2716
    %v2718 = vrot.slane %v2717, 2
    %v2719 = vadd.f32 %v2717, %v2718
    %v2720 = vrot.slane %v2719, 1
    %v2721 = vadd.f32 %v2719, %v2720
    %v2722 = vrot.slane %v2670, 4
    %v2723 = vadd.f32 %v2670, %v2722
    %v2724 = vrot.slane %v2723, 2
    %v2725 = vadd.f32 %v2723, %v2724
    %v2726 = vrot.slane %v2725, 1
    %v2727 = vadd.f32 %v2725, %v2726
    %v2728 = vrot.slane %v2671, 4
    %v2729 = vadd.f32 %v2671, %v2728
    %v2730 = vrot.slane %v2729, 2
    %v2731 = vadd.f32 %v2729, %v2730
    %v2732 = vrot.slane %v2731, 1
    %v2733 = vadd.f32 %v2731, %v2732
    %v2734 = vrot.slane %v2672, 4
    %v2735 = vadd.f32 %v2672, %v2734
    %v2736 = vrot.slane %v2735, 2
    %v2737 = vadd.f32 %v2735, %v2736
    %v2738 = vrot.slane %v2737, 1
    %v2739 = vadd.f32 %v2737, %v2738
    %v2740 = vrot.slane %v2673, 4
    %v2741 = vadd.f32 %v2673, %v2740
    %v2742 = vrot.slane %v2741, 2
    %v2743 = vadd.f32 %v2741, %v2742
    %v2744 = vrot.slane %v2743, 1
    %v2745 = vadd.f32 %v2743, %v2744
    %v2746 = vmul.f32 %v2595, 0.125
    %v2747 = vmul.f32 %v2601, 0.125
    %v2748 = vmul.f32 %v2607, 0.125
    %v2749 = vmul.f32 %v2613, 0.125
    %v2750 = vmul.f32 %v2619, 0.125
    %v2751 = vmul.f32 %v2625, 0.125
    %v2752 = vmul.f32 %v2631, 0.125
    %v2753 = vmul.f32 %v2637, 0.125
    %v2754 = vmul.f32 %v2643, 0.125
    %v2755 = vmul.f32 %v2649, 0.125
    %v2756 = vmul.f32 %v2655, 0.125
    %v2757 = vmul.f32 %v2661, 0.125
    %v2758 = vmul.f32 %v2746, 8.0
    %v2759 = vmul.f32 %v2747, 8.0
    %v2760 = vmul.f32 %v2748, 8.0
    %v2761 = vmul.f32 %v2749, 8.0
    %v2762 = vmul.f32 %v2750, 8.0
    %v2763 = vmul.f32 %v2751, 8.0
    %v2764 = vmul.f32 %v2752, 8.0
    %v2765 = vmul.f32 %v2753, 8.0
    %v2766 = vmul.f32 %v2754, 8.0
    %v2767 = vmul.f32 %v2755, 8.0
    %v2768 = vmul.f32 %v2756, 8.0
    %v2769 = vmul.f32 %v2757, 8.0
    %v2770 = vmul.f32 %v2758, %v2746
    %v2771 = vmul.f32 %v2759, %v2747
    %v2772 = vmul.f32 %v2760, %v2748
    %v2773 = vmul.f32 %v2761, %v2749
    %v2774 = vmul.f32 %v2762, %v2750
    %v2775 = vmul.f32 %v2763, %v2751
    %v2776 = vmul.f32 %v2764, %v2752
    %v2777 = vmul.f32 %v2765, %v2753
    %v2778 = vmul.f32 %v2766, %v2754
    %v2779 = vmul.f32 %v2767, %v2755
    %v2780 = vmul.f32 %v2768, %v2756
    %v2781 = vmul.f32 %v2769, %v2757
    %v2782 = vsub.f32 %v2679, %v2770
    %v2783 = vsub.f32 %v2685, %v2771
    %v2784 = vsub.f32 %v2691, %v2772
    %v2785 = vsub.f32 %v2697, %v2773
    %v2786 = vsub.f32 %v2703, %v2774
    %v2787 = vsub.f32 %v2709, %v2775
    %v2788 = vsub.f32 %v2715, %v2776
    %v2789 = vsub.f32 %v2721, %v2777
    %v2790 = vsub.f32 %v2727, %v2778
    %v2791 = vsub.f32 %v2733, %v2779
    %v2792 = vsub.f32 %v2739, %v2780
    %v2793 = vsub.f32 %v2745, %v2781
    %v2794 = vmul.f32 %v2782, 0.14285715
    %v2795 = vmul.f32 %v2783, 0.14285715
    %v2796 = vmul.f32 %v2784, 0.14285715
    %v2797 = vmul.f32 %v2785, 0.14285715
    %v2798 = vmul.f32 %v2786, 0.14285715
    %v2799 = vmul.f32 %v2787, 0.14285715
    %v2800 = vmul.f32 %v2788, 0.14285715
    %v2801 = vmul.f32 %v2789, 0.14285715
    %v2802 = vmul.f32 %v2790, 0.14285715
    %v2803 = vmul.f32 %v2791, 0.14285715
    %v2804 = vmul.f32 %v2792, 0.14285715
    %v2805 = vmul.f32 %v2793, 0.14285715
    %v2806 = vmax.f32 %v2794, 0.0
    %v2807 = vmax.f32 %v2795, 0.0
    %v2808 = vmax.f32 %v2796, 0.0
    %v2809 = vmax.f32 %v2797, 0.0
    %v2810 = vmax.f32 %v2798, 0.0
    %v2811 = vmax.f32 %v2799, 0.0
    %v2812 = vmax.f32 %v2800, 0.0
    %v2813 = vmax.f32 %v2801, 0.0
    %v2814 = vmax.f32 %v2802, 0.0
    %v2815 = vmax.f32 %v2803, 0.0
    %v2816 = vmax.f32 %v2804, 0.0
    %v2817 = vmax.f32 %v2805, 0.0
    %v2818 = vrsqrt.pop %v2806
    %v2819 = vmul.f32 %v2806, %v2818
    %vm2820 = vcmp.eq.f32.partialorder %v2806, inf
    %v2821 = vsel %vm2820, %v2806, %v2819
    %vm2822 = vcmp.eq.f32.partialorder %v2806, 0.0
    %v2823 = vand.u32 %v2806, 2147483648
    %v2824 = vsel %vm2822, %v2823, %v2821
    %v2825 = vrsqrt.pop %v2807
    %v2826 = vmul.f32 %v2807, %v2825
    %vm2827 = vcmp.eq.f32.partialorder %v2807, inf
    %v2828 = vsel %vm2827, %v2807, %v2826
    %vm2829 = vcmp.eq.f32.partialorder %v2807, 0.0
    %v2830 = vand.u32 %v2807, 2147483648
    %v2831 = vsel %vm2829, %v2830, %v2828
    %v2832 = vrsqrt.pop %v2808
    %v2833 = vmul.f32 %v2808, %v2832
    %vm2834 = vcmp.eq.f32.partialorder %v2808, inf
    %v2835 = vsel %vm2834, %v2808, %v2833
    %vm2836 = vcmp.eq.f32.partialorder %v2808, 0.0
    %v2837 = vand.u32 %v2808, 2147483648
    %v2838 = vsel %vm2836, %v2837, %v2835
    %v2839 = vrsqrt.pop %v2809
    %v2840 = vmul.f32 %v2809, %v2839
    %vm2841 = vcmp.eq.f32.partialorder %v2809, inf
    %v2842 = vsel %vm2841, %v2809, %v2840
    %vm2843 = vcmp.eq.f32.partialorder %v2809, 0.0
    %v2844 = vand.u32 %v2809, 2147483648
    %v2845 = vsel %vm2843, %v2844, %v2842
    %v2846 = vrsqrt.pop %v2810
    %v2847 = vmul.f32 %v2810, %v2846
    %vm2848 = vcmp.eq.f32.partialorder %v2810, inf
    %v2849 = vsel %vm2848, %v2810, %v2847
    %vm2850 = vcmp.eq.f32.partialorder %v2810, 0.0
    %v2851 = vand.u32 %v2810, 2147483648
    %v2852 = vsel %vm2850, %v2851, %v2849
    %v2853 = vrsqrt.pop %v2811
    %v2854 = vmul.f32 %v2811, %v2853
    %vm2855 = vcmp.eq.f32.partialorder %v2811, inf
    %v2856 = vsel %vm2855, %v2811, %v2854
    %vm2857 = vcmp.eq.f32.partialorder %v2811, 0.0
    %v2858 = vand.u32 %v2811, 2147483648
    %v2859 = vsel %vm2857, %v2858, %v2856
    %v2860 = vrsqrt.pop %v2812
    %v2861 = vmul.f32 %v2812, %v2860
    %vm2862 = vcmp.eq.f32.partialorder %v2812, inf
    %v2863 = vsel %vm2862, %v2812, %v2861
    %vm2864 = vcmp.eq.f32.partialorder %v2812, 0.0
    %v2865 = vand.u32 %v2812, 2147483648
    %v2866 = vsel %vm2864, %v2865, %v2863
    %v2867 = vrsqrt.pop %v2813
    %v2868 = vmul.f32 %v2813, %v2867
    %vm2869 = vcmp.eq.f32.partialorder %v2813, inf
    %v2870 = vsel %vm2869, %v2813, %v2868
    %vm2871 = vcmp.eq.f32.partialorder %v2813, 0.0
    %v2872 = vand.u32 %v2813, 2147483648
    %v2873 = vsel %vm2871, %v2872, %v2870
    %v2874 = vrsqrt.pop %v2814
    %v2875 = vmul.f32 %v2814, %v2874
    %vm2876 = vcmp.eq.f32.partialorder %v2814, inf
    %v2877 = vsel %vm2876, %v2814, %v2875
    %vm2878 = vcmp.eq.f32.partialorder %v2814, 0.0
    %v2879 = vand.u32 %v2814, 2147483648
    %v2880 = vsel %vm2878, %v2879, %v2877
    %v2881 = vrsqrt.pop %v2815
    %v2882 = vmul.f32 %v2815, %v2881
    %vm2883 = vcmp.eq.f32.partialorder %v2815, inf
    %v2884 = vsel %vm2883, %v2815, %v2882
    %vm2885 = vcmp.eq.f32.partialorder %v2815, 0.0
    %v2886 = vand.u32 %v2815, 2147483648
    %v2887 = vsel %vm2885, %v2886, %v2884
    %v2888 = vrsqrt.pop %v2816
    %v2889 = vmul.f32 %v2816, %v2888
    %vm2890 = vcmp.eq.f32.partialorder %v2816, inf
    %v2891 = vsel %vm2890, %v2816, %v2889
    %vm2892 = vcmp.eq.f32.partialorder %v2816, 0.0
    %v2893 = vand.u32 %v2816, 2147483648
    %v2894 = vsel %vm2892, %v2893, %v2891
    %v2895 = vrsqrt.pop %v2817
    %v2896 = vmul.f32 %v2817, %v2895
    %vm2897 = vcmp.eq.f32.partialorder %v2817, inf
    %v2898 = vsel %vm2897, %v2817, %v2896
    %vm2899 = vcmp.eq.f32.partialorder %v2817, 0.0
    %v2900 = vand.u32 %v2817, 2147483648
    %v2901 = vsel %vm2899, %v2900, %v2898
    %v2902 = vsub.f32 %v2824, %v479
    %v2903 = vsub.f32 %v2831, %v483
    %v2904 = vsub.f32 %v2838, %v487
    %v2905 = vsub.f32 %v2845, %v491
    %v2906 = vsub.f32 %v2852, %v495
    %v2907 = vsub.f32 %v2859, %v499
    %v2908 = vsub.f32 %v2866, %v503
    %v2909 = vsub.f32 %v2873, %v507
    %v2910 = vsub.f32 %v2880, %v511
    %v2911 = vsub.f32 %v2887, %v515
    %v2912 = vsub.f32 %v2894, %v519
    %v2913 = vsub.f32 %v2901, %v523
    %v2914 = vmul.f32 %v2902, %v2902
    %v2915 = vmul.f32 %v2903, %v2903
    %v2916 = vmul.f32 %v2904, %v2904
    %v2917 = vmul.f32 %v2905, %v2905
    %v2918 = vmul.f32 %v2906, %v2906
    %v2919 = vmul.f32 %v2907, %v2907
    %v2920 = vmul.f32 %v2908, %v2908
    %v2921 = vmul.f32 %v2909, %v2909
    %v2922 = vmul.f32 %v2910, %v2910
    %v2923 = vmul.f32 %v2911, %v2911
    %v2924 = vmul.f32 %v2912, %v2912
    %v2925 = vmul.f32 %v2913, %v2913
    %v2926 = vsel %vm560, %v2914, 0.0
    %v2927 = vsel %vm560, %v2915, 0.0
    %v2928 = vadd.f32 %v2926, %v2927
    %v2929 = vsel %vm560, %v2916, 0.0
    %v2930 = vadd.f32 %v2928, %v2929
    %v2931 = vsel %vm560, %v2917, 0.0
    %v2932 = vadd.f32 %v2930, %v2931
    %v2933 = vsel %vm560, %v2918, 0.0
    %v2934 = vadd.f32 %v2932, %v2933
    %v2935 = vsel %vm560, %v2919, 0.0
    %v2936 = vadd.f32 %v2934, %v2935
    %v2937 = vsel %vm560, %v2920, 0.0
    %v2938 = vadd.f32 %v2936, %v2937
    %v2939 = vsel %vm560, %v2921, 0.0
    %v2940 = vadd.f32 %v2938, %v2939
    %v2941 = vsel %vm560, %v2922, 0.0
    %v2942 = vadd.f32 %v2940, %v2941
    %v2943 = vsel %vm560, %v2923, 0.0
    %v2944 = vadd.f32 %v2942, %v2943
    %v2945 = vsel %vm560, %v2924, 0.0
    %v2946 = vadd.f32 %v2944, %v2945
    %v2947 = vsel %vm560, %v2925, 0.0
    %v2948 = vadd.f32 %v2946, %v2947
    %2949 = vadd.xlane.f32.xlu0 %v2948
    %v2950 = vpop.xlane.xlu0 %2949
    %v2951 = vrot.slane %v2950, 4
    %v2952 = vadd.f32 %v2950, %v2951
    %v2953 = vrot.slane %v2952, 2
    %v2954 = vadd.f32 %v2952, %v2953
    %v2955 = vrot.slane %v2954, 1
    %v2956 = vadd.f32 %v2954, %v2955
    %s2957 = vtos %v2956
    %v2958 = vsub.f32 %v2746, %v598
    %v2959 = vsub.f32 %v2747, %v602
    %v2960 = vsub.f32 %v2748, %v606
    %v2961 = vsub.f32 %v2749, %v610
    %v2962 = vsub.f32 %v2750, %v614
    %v2963 = vsub.f32 %v2751, %v618
    %v2964 = vsub.f32 %v2752, %v622
    %v2965 = vsub.f32 %v2753, %v626
    %v2966 = vsub.f32 %v2754, %v630
    %v2967 = vsub.f32 %v2755, %v634
    %v2968 = vsub.f32 %v2756, %v638
    %v2969 = vsub.f32 %v2757, %v642
    %v2970 = vmul.f32 %v2958, %v2958
    %v2971 = vmul.f32 %v2959, %v2959
    %v2972 = vmul.f32 %v2960, %v2960
    %v2973 = vmul.f32 %v2961, %v2961
    %v2974 = vmul.f32 %v2962, %v2962
    %v2975 = vmul.f32 %v2963, %v2963
    %v2976 = vmul.f32 %v2964, %v2964
    %v2977 = vmul.f32 %v2965, %v2965
    %v2978 = vmul.f32 %v2966, %v2966
    %v2979 = vmul.f32 %v2967, %v2967
    %v2980 = vmul.f32 %v2968, %v2968
    %v2981 = vmul.f32 %v2969, %v2969
    %v2982 = vsel %vm560, %v2970, 0.0
    %v2983 = vsel %vm560, %v2971, 0.0
    %v2984 = vadd.f32 %v2982, %v2983
    %v2985 = vsel %vm560, %v2972, 0.0
    %v2986 = vadd.f32 %v2984, %v2985
    %v2987 = vsel %vm560, %v2973, 0.0
    %v2988 = vadd.f32 %v2986, %v2987
    %v2989 = vsel %vm560, %v2974, 0.0
    %v2990 = vadd.f32 %v2988, %v2989
    %v2991 = vsel %vm560, %v2975, 0.0
    %v2992 = vadd.f32 %v2990, %v2991
    %v2993 = vsel %vm560, %v2976, 0.0
    %v2994 = vadd.f32 %v2992, %v2993
    %v2995 = vsel %vm560, %v2977, 0.0
    %v2996 = vadd.f32 %v2994, %v2995
    %v2997 = vsel %vm560, %v2978, 0.0
    %v2998 = vadd.f32 %v2996, %v2997
    %v2999 = vsel %vm560, %v2979, 0.0
    %v3000 = vadd.f32 %v2998, %v2999
    %v3001 = vsel %vm560, %v2980, 0.0
    %v3002 = vadd.f32 %v3000, %v3001
    %v3003 = vsel %vm560, %v2981, 0.0
    %v3004 = vadd.f32 %v3002, %v3003
    %3005 = vadd.xlane.f32.xlu0 %v3004
    %v3006 = vpop.xlane.xlu0 %3005
    %v3007 = vrot.slane %v3006, 4
    %v3008 = vadd.f32 %v3006, %v3007
    %v3009 = vrot.slane %v3008, 2
    %v3010 = vadd.f32 %v3008, %v3009
    %v3011 = vrot.slane %v3010, 1
    %v3012 = vadd.f32 %v3010, %v3011
    %s3013 = vtos %v3012
    %s3014 = sadd.f32 %s2957, %s3013
    %s3015 = smul.f32 %s3014, 0.4
    %s3016 = smul.f32 %s3015, 0.125
    %3017 = vst [vmem:[#allocation2 + $0xc0] sm:$0xff] %v2584
    %3018 = vst [vmem:[#allocation2 + $0xc8] sm:$0xff] %v2585
    %3019 = vst [vmem:[#allocation2 + $0xd0] sm:$0xff] %v2586
    %3020 = vst [vmem:[#allocation2 + $0xd8] sm:$0xff] %v2587
    %3021 = vst [vmem:[#allocation2 + $0xe0] sm:$0xff] %v2588
    %3022 = vst [vmem:[#allocation2 + $0xe8] sm:$0xff] %v2589
    %v3029 = vcombine.low %v2752, %v2753
    %v3030 = vcombine.low %v2754, %v2755
    %v3031 = vcombine.low %v2756, %v2757
    %v3033 = vunpack.c.l.s4 1966171168
    %v3034 = vunpack.c.0.s8 %v3033
    %v3035 = vlaneseq
    %v3036 = vshrl.u32 %v3035, 7
    %v3037 = vsub.s32 %v3034, %v3036
    %v3038 = vrot.slane %v3029, %v3037
    %v3040 = vunpack.c.l.s4 1966171168
    %v3041 = vunpack.c.0.s8 %v3040
    %v3042 = vlaneseq
    %v3043 = vshrl.u32 %v3042, 7
    %v3044 = vsub.s32 %v3041, %v3043
    %v3045 = vrot.slane %v3030, %v3044
    %v3047 = vunpack.c.l.s4 1966171168
    %v3048 = vunpack.c.0.s8 %v3047
    %v3049 = vlaneseq
    %v3050 = vshrl.u32 %v3049, 7
    %v3051 = vsub.s32 %v3048, %v3050
    %v3052 = vrot.slane %v3031, %v3051
    %v3053 = vcombine.low %v3038, %v3045
    %v3055 = vunpack.c.l.s4 1966171168
    %v3056 = vunpack.c.0.s8 %v3055
    %v3057 = vlaneseq
    %v3058 = vshrl.u32 %v3057, 7
    %v3059 = vsub.s32 %v3056, %v3058
    %v3060 = vrot.slane %v3053, %v3059
    %v3062 = vunpack.c.l.s4 1966171168
    %v3063 = vunpack.c.0.s8 %v3062
    %v3064 = vlaneseq
    %v3065 = vshrl.u32 %v3064, 7
    %v3066 = vsub.s32 %v3063, %v3065
    %v3067 = vrot.slane %v3052, %v3066
    %v3068 = vcombine.low %v3060, %v3067
    %s3070 = scalar_lea.vmem [#allocation9], 4
    %3071 = vst.msk [vmem:[%s3070] ss:$8 sm:$0xf] %vm770, %v3068
    %3072 = vst.msk [vmem:[%s3070] ss:$8 sm:$0x30] %vm770, %v3068
    %v3073 = vld [vmem:[#allocation2] sm:$0xff]
    %v3074 = vld [vmem:[#allocation2 + $0x8] sm:$0xff]
    %v3075 = vld [vmem:[#allocation2 + $0x10] sm:$0xff]
    %v3076 = vld [vmem:[#allocation2 + $0x18] sm:$0xff]
    %v3077 = vld [vmem:[#allocation2 + $0x20] sm:$0xff]
    %v3078 = vld [vmem:[#allocation2 + $0x28] sm:$0xff]
    %v3079 = vld [vmem:[#allocation2 + $0x30] sm:$0xff]
    %v3080 = vld [vmem:[#allocation2 + $0x38] sm:$0xff]
    %v3081 = vld [vmem:[#allocation2 + $0x40] sm:$0xff]
    %v3082 = vld [vmem:[#allocation2 + $0x48] sm:$0xff]
    %v3083 = vld [vmem:[#allocation2 + $0x50] sm:$0xff]
    %v3084 = vld [vmem:[#allocation2 + $0x58] sm:$0xff]
    %v3085 = vld [vmem:[#allocation2 + $0x60] sm:$0xff]
    %v3086 = vld [vmem:[#allocation2 + $0x68] sm:$0xff]
    %v3087 = vld [vmem:[#allocation2 + $0x70] sm:$0xff]
    %v3088 = vld [vmem:[#allocation2 + $0x78] sm:$0xff]
    %v3089 = vld [vmem:[#allocation2 + $0x80] sm:$0xff]
    %v3090 = vld [vmem:[#allocation2 + $0x88] sm:$0xff]
    %v3091 = vld [vmem:[#allocation2 + $0x90] sm:$0xff]
    %v3092 = vld [vmem:[#allocation2 + $0x98] sm:$0xff]
    %v3093 = vld [vmem:[#allocation2 + $0xa0] sm:$0xff]
    %v3094 = vld [vmem:[#allocation2 + $0xa8] sm:$0xff]
    %v3095 = vld [vmem:[#allocation2 + $0xb0] sm:$0xff]
    %v3096 = vld [vmem:[#allocation2 + $0xb8] sm:$0xff]
    %v3097 = vld [vmem:[#allocation2 + $0xc0] sm:$0xff]
    %v3098 = vld [vmem:[#allocation2 + $0xc8] sm:$0xff]
    %v3099 = vld [vmem:[#allocation2 + $0xd0] sm:$0xff]
    %v3100 = vld [vmem:[#allocation2 + $0xd8] sm:$0xff]
    %v3101 = vld [vmem:[#allocation2 + $0xe0] sm:$0xff]
    %v3102 = vld [vmem:[#allocation2 + $0xe8] sm:$0xff]
    %v3103 = vld [vmem:[%s4] sm:$0xff]
    %v3104 = vld [vmem:[%s4 + $0x8] sm:$0xff]
    %v3105 = vld [vmem:[%s4 + $0x10] sm:$0xff]
    %v3106 = vld [vmem:[%s4 + $0x18] sm:$0xff]
    %v3107 = vld [vmem:[%s4 + $0x20] sm:$0xff]
    %v3108 = vld [vmem:[%s4 + $0x28] sm:$0xff]
    %v3109 = vld [vmem:[%s4 + $0x30] sm:$0xff]
    %v3110 = vld [vmem:[%s4 + $0x38] sm:$0xff]
    %v3111 = vld [vmem:[%s4 + $0x40] sm:$0xff]
    %v3112 = vld [vmem:[%s4 + $0x48] sm:$0xff]
    %v3113 = vld [vmem:[%s4 + $0x50] sm:$0xff]
    %v3114 = vld [vmem:[%s4 + $0x58] sm:$0xff]
    %v3115 = vld [vmem:[%s4 + $0x60] sm:$0xff]
    %v3116 = vld [vmem:[%s4 + $0x68] sm:$0xff]
    %v3117 = vld [vmem:[%s4 + $0x70] sm:$0xff]
    %v3118 = vld [vmem:[%s4 + $0x78] sm:$0xff]
    %v3119 = vld [vmem:[%s4 + $0x80] sm:$0xff]
    %v3120 = vld [vmem:[%s4 + $0x88] sm:$0xff]
    %v3121 = vld [vmem:[%s4 + $0x90] sm:$0xff]
    %v3122 = vld [vmem:[%s4 + $0x98] sm:$0xff]
    %v3123 = vld [vmem:[%s4 + $0xa0] sm:$0xff]
    %v3124 = vld [vmem:[%s4 + $0xa8] sm:$0xff]
    %v3125 = vld [vmem:[%s4 + $0xb0] sm:$0xff]
    %v3126 = vld [vmem:[%s4 + $0xb8] sm:$0xff]
    %v3127 = vld [vmem:[%s4 + $0xc0] sm:$0xff]
    %v3128 = vld [vmem:[%s4 + $0xc8] sm:$0xff]
    %v3129 = vld [vmem:[%s4 + $0xd0] sm:$0xff]
    %v3130 = vld [vmem:[%s4 + $0xd8] sm:$0xff]
    %v3131 = vld [vmem:[%s4 + $0xe0] sm:$0xff]
    %v3132 = vld [vmem:[%s4 + $0xe8] sm:$0xff]
    %v3133 = vld [vmem:[%s4 + $0xf0] sm:$0xff]
    %v3134 = vld [vmem:[%s4 + $0xf8] sm:$0xff]
    %v3135 = vld [vmem:[%s4 + $0x100] sm:$0xff]
    %v3136 = vld [vmem:[%s4 + $0x108] sm:$0xff]
    %v3137 = vld [vmem:[%s4 + $0x110] sm:$0xff]
    %v3138 = vld [vmem:[%s4 + $0x118] sm:$0xff]
    %v3139 = vld [vmem:[%s4 + $0x120] sm:$0xff]
    %v3140 = vld [vmem:[%s4 + $0x128] sm:$0xff]
    %v3141 = vld [vmem:[%s4 + $0x130] sm:$0xff]
    %v3142 = vld [vmem:[%s4 + $0x138] sm:$0xff]
    %v3143 = vld [vmem:[%s4 + $0x140] sm:$0xff]
    %v3144 = vld [vmem:[%s4 + $0x148] sm:$0xff]
    %v3145 = vld [vmem:[%s4 + $0x150] sm:$0xff]
    %v3146 = vld [vmem:[%s4 + $0x158] sm:$0xff]
    %v3147 = vld [vmem:[%s4 + $0x160] sm:$0xff]
    %v3148 = vld [vmem:[%s4 + $0x168] sm:$0xff]
    %v3149 = vld [vmem:[%s4 + $0x170] sm:$0xff]
    %v3150 = vld [vmem:[%s4 + $0x178] sm:$0xff]
    %v3151 = vld [vmem:[%s4 + $0x180] sm:$0xff]
    %v3152 = vld [vmem:[%s4 + $0x188] sm:$0xff]
    %v3153 = vld [vmem:[%s4 + $0x190] sm:$0xff]
    %v3154 = vld [vmem:[%s4 + $0x198] sm:$0xff]
    %v3155 = vld [vmem:[%s4 + $0x1a0] sm:$0xff]
    %v3156 = vld [vmem:[%s4 + $0x1a8] sm:$0xff]
    %v3157 = vld [vmem:[%s4 + $0x1b0] sm:$0xff]
    %v3158 = vld [vmem:[%s4 + $0x1b8] sm:$0xff]
    %v3159 = vld [vmem:[%s4 + $0x1c0] sm:$0xff]
    %v3160 = vld [vmem:[%s4 + $0x1c8] sm:$0xff]
    %v3161 = vld [vmem:[%s4 + $0x1d0] sm:$0xff]
    %v3162 = vld [vmem:[%s4 + $0x1d8] sm:$0xff]
    %v3163 = vld [vmem:[%s4 + $0x1e0] sm:$0xff]
    %v3164 = vld [vmem:[%s4 + $0x1e8] sm:$0xff]
    %v3165 = vld [vmem:[%s4 + $0x1f0] sm:$0xff]
    %v3166 = vld [vmem:[%s4 + $0x1f8] sm:$0xff]
    %v3167 = vld [vmem:[%s4 + $0x200] sm:$0xff]
    %v3168 = vld [vmem:[%s4 + $0x208] sm:$0xff]
    %v3169 = vld [vmem:[%s4 + $0x210] sm:$0xff]
    %v3170 = vld [vmem:[%s4 + $0x218] sm:$0xff]
    %v3171 = vld [vmem:[%s4 + $0x220] sm:$0xff]
    %v3172 = vld [vmem:[%s4 + $0x228] sm:$0xff]
    %v3173 = vld [vmem:[%s4 + $0x230] sm:$0xff]
    %v3174 = vld [vmem:[%s4 + $0x238] sm:$0xff]
    %v3175 = vld [vmem:[%s4 + $0x240] sm:$0xff]
    %v3176 = vld [vmem:[%s4 + $0x248] sm:$0xff]
    %v3177 = vld [vmem:[%s4 + $0x250] sm:$0xff]
    %v3178 = vld [vmem:[%s4 + $0x258] sm:$0xff]
    %v3179 = vld [vmem:[%s4 + $0x260] sm:$0xff]
    %v3180 = vld [vmem:[%s4 + $0x268] sm:$0xff]
    %v3181 = vld [vmem:[%s4 + $0x270] sm:$0xff]
    %v3182 = vld [vmem:[%s4 + $0x278] sm:$0xff]
    %v3183 = vld [vmem:[%s4 + $0x280] sm:$0xff]
    %v3184 = vld [vmem:[%s4 + $0x288] sm:$0xff]
    %v3185 = vld [vmem:[%s4 + $0x290] sm:$0xff]
    %v3186 = vld [vmem:[%s4 + $0x298] sm:$0xff]
    %v3187 = vld [vmem:[%s4 + $0x2a0] sm:$0xff]
    %v3188 = vld [vmem:[%s4 + $0x2a8] sm:$0xff]
    %v3189 = vld [vmem:[%s4 + $0x2b0] sm:$0xff]
    %v3190 = vld [vmem:[%s4 + $0x2b8] sm:$0xff]
    %v3191 = vld [vmem:[%s4 + $0x2c0] sm:$0xff]
    %v3192 = vld [vmem:[%s4 + $0x2c8] sm:$0xff]
    %v3193 = vld [vmem:[%s4 + $0x2d0] sm:$0xff]
    %v3194 = vld [vmem:[%s4 + $0x2d8] sm:$0xff]
    %v3195 = vld [vmem:[%s4 + $0x2e0] sm:$0xff]
    %v3196 = vld [vmem:[%s4 + $0x2e8] sm:$0xff]
    %v3197 = vld [vmem:[%s4 + $0x2f0] sm:$0xff]
    %v3198 = vld [vmem:[%s4 + $0x2f8] sm:$0xff]
    %v3199 = vld [vmem:[%s5] sm:$0x1]
    %v3201 = vlaneseq
    %v3202 = vshrl.u32 %v3201, 7
    %v3203 = vsub.s32 0, %v3202
    %v3204 = vrot.slane %v3199, %v3203
    %3206 = vmatprep.subr.mxu0 0.0
    %3207 = vmatpush1.msra.mxu0 %v3118
    %3208 = vmatprep.subr.mxu0 0.0
    %3209 = vmatpush1.msra.mxu0 %v3117
    %3210 = vmatprep.subr.mxu0 0.0
    %3211 = vmatpush1.msra.mxu0 %v3116
    %3212 = vmatprep.subr.mxu0 0.0
    %3213 = vmatpush1.msra.mxu0 %v3115
    %3214 = vmatprep.subr.mxu0 0.0
    %3215 = vmatpush1.msra.mxu0 %v3114
    %3216 = vmatprep.subr.mxu0 0.0
    %3217 = vmatpush1.msra.mxu0 %v3113
    %3218 = vmatprep.subr.mxu0 0.0
    %3219 = vmatpush1.msra.mxu0 %v3112
    %3220 = vmatprep.subr.mxu0 0.0
    %3221 = vmatpush1.msra.mxu0 %v3111
    %3222 = vmatprep.subr.mxu0 0.0
    %3223 = vmatpush1.msra.mxu0 %v3110
    %3224 = vmatprep.subr.mxu0 0.0
    %3225 = vmatpush1.msra.mxu0 %v3109
    %3226 = vmatprep.subr.mxu0 0.0
    %3227 = vmatpush1.msra.mxu0 %v3108
    %3228 = vmatprep.subr.mxu0 0.0
    %3229 = vmatpush1.msra.mxu0 %v3107
    %3230 = vmatprep.subr.mxu0 0.0
    %3231 = vmatpush1.msra.mxu0 %v3106
    %3232 = vmatprep.subr.mxu0 0.0
    %3233 = vmatpush1.msra.mxu0 %v3105
    %3234 = vmatprep.subr.mxu0 0.0
    %3235 = vmatpush1.msra.mxu0 %v3104
    %3236 = vmatprep.subr.mxu0 0.0
    %3237 = vmatpush1.msra.mxu0 %v3103
    %3238 = vmatprep.subr.mxu0 0.0
    %3239 = vmatpush2.msra.mxu0 %v3134
    %3240 = vmatprep.subr.mxu0 0.0
    %3241 = vmatpush2.msra.mxu0 %v3133
    %3242 = vmatprep.subr.mxu0 0.0
    %3243 = vmatpush2.msra.mxu0 %v3132
    %3244 = vmatprep.subr.mxu0 0.0
    %3245 = vmatpush2.msra.mxu0 %v3131
    %3246 = vmatprep.subr.mxu0 0.0
    %3247 = vmatpush2.msra.mxu0 %v3130
    %3248 = vmatprep.subr.mxu0 0.0
    %3249 = vmatpush2.msra.mxu0 %v3129
    %3250 = vmatprep.subr.mxu0 0.0
    %3251 = vmatpush2.msra.mxu0 %v3128
    %3252 = vmatprep.subr.mxu0 0.0
    %3253 = vmatpush2.msra.mxu0 %v3127
    %3254 = vmatprep.subr.mxu0 0.0
    %3255 = vmatpush2.msra.mxu0 %v3126
    %3256 = vmatprep.subr.mxu0 0.0
    %3257 = vmatpush2.msra.mxu0 %v3125
    %3258 = vmatprep.subr.mxu0 0.0
    %3259 = vmatpush2.msra.mxu0 %v3124
    %3260 = vmatprep.subr.mxu0 0.0
    %3261 = vmatpush2.msra.mxu0 %v3123
    %3262 = vmatprep.subr.mxu0 0.0
    %3263 = vmatpush2.msra.mxu0 %v3122
    %3264 = vmatprep.subr.mxu0 0.0
    %3265 = vmatpush2.msra.mxu0 %v3121
    %3266 = vmatprep.subr.mxu0 0.0
    %3267 = vmatpush2.msra.mxu0 %v3120
    %3268 = vmatprep.subr.mxu0 0.0
    %3269 = vmatpush2.msra.mxu0 %v3119
    %3270 = vmatprep.mubr.f32.mxu0 %v3074
    %3271 = vmatmul.mubr.f32.gmra.mxu0 %v3073
    %v3272 = vpop.f32.mrf.mxu0
    %v3273 = vadd.f32 %v3204, %v3272
    %v3274 = vpop.f32.mrf.mxu0
    %3275 = vmatprep.mubr.f32.mxu0 %v3080
    %3276 = vmatmul.mubr.f32.gmra.mxu0 %v3079
    %v3277 = vpop.f32.mrf.mxu0
    %v3278 = vadd.f32 %v3204, %v3277
    %v3279 = vpop.f32.mrf.mxu0
    %3280 = vmatprep.mubr.f32.mxu0 %v3086
    %3281 = vmatmul.mubr.f32.gmra.mxu0 %v3085
    %v3282 = vpop.f32.mrf.mxu0
    %v3283 = vadd.f32 %v3204, %v3282
    %v3284 = vpop.f32.mrf.mxu0
    %3285 = vmatprep.mubr.f32.mxu0 %v3092
    %3286 = vmatmul.mubr.f32.gmra.mxu0 %v3091
    %v3287 = vpop.f32.mrf.mxu0
    %v3288 = vadd.f32 %v3204, %v3287
    %v3289 = vpop.f32.mrf.mxu0
    %3290 = vmatprep.mubr.f32.mxu0 %v3098
    %3291 = vmatmul.mubr.f32.gmra.mxu0 %v3097
    %v3292 = vpop.f32.mrf.mxu0
    %v3293 = vadd.f32 %v3204, %v3292
    %v3294 = vpop.f32.mrf.mxu0
    %3295 = vdwg.mxu0
    %3296 = vmatprep.subr.mxu0 0.0
    %3297 = vmatpush1.msra.mxu0 %v3150
    %3298 = vmatprep.subr.mxu0 0.0
    %3299 = vmatpush1.msra.mxu0 %v3149
    %3300 = vmatprep.subr.mxu0 0.0
    %3301 = vmatpush1.msra.mxu0 %v3148
    %3302 = vmatprep.subr.mxu0 0.0
    %3303 = vmatpush1.msra.mxu0 %v3147
    %3304 = vmatprep.subr.mxu0 0.0
    %3305 = vmatpush1.msra.mxu0 %v3146
    %3306 = vmatprep.subr.mxu0 0.0
    %3307 = vmatpush1.msra.mxu0 %v3145
    %3308 = vmatprep.subr.mxu0 0.0
    %3309 = vmatpush1.msra.mxu0 %v3144
    %3310 = vmatprep.subr.mxu0 0.0
    %3311 = vmatpush1.msra.mxu0 %v3143
    %3312 = vmatprep.subr.mxu0 0.0
    %3313 = vmatpush1.msra.mxu0 %v3142
    %3314 = vmatprep.subr.mxu0 0.0
    %3315 = vmatpush1.msra.mxu0 %v3141
    %3316 = vmatprep.subr.mxu0 0.0
    %3317 = vmatpush1.msra.mxu0 %v3140
    %3318 = vmatprep.subr.mxu0 0.0
    %3319 = vmatpush1.msra.mxu0 %v3139
    %3320 = vmatprep.subr.mxu0 0.0
    %3321 = vmatpush1.msra.mxu0 %v3138
    %3322 = vmatprep.subr.mxu0 0.0
    %3323 = vmatpush1.msra.mxu0 %v3137
    %3324 = vmatprep.subr.mxu0 0.0
    %3325 = vmatpush1.msra.mxu0 %v3136
    %3326 = vmatprep.subr.mxu0 0.0
    %3327 = vmatpush1.msra.mxu0 %v3135
    %3328 = vmatprep.subr.mxu0 0.0
    %3329 = vmatpush2.msra.mxu0 %v3166
    %3330 = vmatprep.subr.mxu0 0.0
    %3331 = vmatpush2.msra.mxu0 %v3165
    %3332 = vmatprep.subr.mxu0 0.0
    %3333 = vmatpush2.msra.mxu0 %v3164
    %3334 = vmatprep.subr.mxu0 0.0
    %3335 = vmatpush2.msra.mxu0 %v3163
    %3336 = vmatprep.subr.mxu0 0.0
    %3337 = vmatpush2.msra.mxu0 %v3162
    %3338 = vmatprep.subr.mxu0 0.0
    %3339 = vmatpush2.msra.mxu0 %v3161
    %3340 = vmatprep.subr.mxu0 0.0
    %3341 = vmatpush2.msra.mxu0 %v3160
    %3342 = vmatprep.subr.mxu0 0.0
    %3343 = vmatpush2.msra.mxu0 %v3159
    %3344 = vmatprep.subr.mxu0 0.0
    %3345 = vmatpush2.msra.mxu0 %v3158
    %3346 = vmatprep.subr.mxu0 0.0
    %3347 = vmatpush2.msra.mxu0 %v3157
    %3348 = vmatprep.subr.mxu0 0.0
    %3349 = vmatpush2.msra.mxu0 %v3156
    %3350 = vmatprep.subr.mxu0 0.0
    %3351 = vmatpush2.msra.mxu0 %v3155
    %3352 = vmatprep.subr.mxu0 0.0
    %3353 = vmatpush2.msra.mxu0 %v3154
    %3354 = vmatprep.subr.mxu0 0.0
    %3355 = vmatpush2.msra.mxu0 %v3153
    %3356 = vmatprep.subr.mxu0 0.0
    %3357 = vmatpush2.msra.mxu0 %v3152
    %3358 = vmatprep.subr.mxu0 0.0
    %3359 = vmatpush2.msra.mxu0 %v3151
    %3360 = vmatprep.mubr.f32.mxu0 %v3076
    %3361 = vmatmul.mubr.f32.gmra.mxu0 %v3075
    %v3362 = vpop.f32.mrf.mxu0
    %v3363 = vadd.f32 %v3273, %v3362
    %v3364 = vpop.f32.mrf.mxu0
    %3365 = vmatprep.mubr.f32.mxu0 %v3082
    %3366 = vmatmul.mubr.f32.gmra.mxu0 %v3081
    %v3367 = vpop.f32.mrf.mxu0
    %v3368 = vadd.f32 %v3278, %v3367
    %v3369 = vpop.f32.mrf.mxu0
    %3370 = vmatprep.mubr.f32.mxu0 %v3088
    %3371 = vmatmul.mubr.f32.gmra.mxu0 %v3087
    %v3372 = vpop.f32.mrf.mxu0
    %v3373 = vadd.f32 %v3283, %v3372
    %v3374 = vpop.f32.mrf.mxu0
    %3375 = vmatprep.mubr.f32.mxu0 %v3094
    %3376 = vmatmul.mubr.f32.gmra.mxu0 %v3093
    %v3377 = vpop.f32.mrf.mxu0
    %v3378 = vadd.f32 %v3288, %v3377
    %v3379 = vpop.f32.mrf.mxu0
    %3380 = vmatprep.mubr.f32.mxu0 %v3100
    %3381 = vmatmul.mubr.f32.gmra.mxu0 %v3099
    %v3382 = vpop.f32.mrf.mxu0
    %v3383 = vadd.f32 %v3293, %v3382
    %v3384 = vpop.f32.mrf.mxu0
    %3385 = vdwg.mxu0
    %3386 = vmatprep.subr.mxu0 0.0
    %3387 = vmatpush1.msra.mxu0 %v3182
    %3388 = vmatprep.subr.mxu0 0.0
    %3389 = vmatpush1.msra.mxu0 %v3181
    %3390 = vmatprep.subr.mxu0 0.0
    %3391 = vmatpush1.msra.mxu0 %v3180
    %3392 = vmatprep.subr.mxu0 0.0
    %3393 = vmatpush1.msra.mxu0 %v3179
    %3394 = vmatprep.subr.mxu0 0.0
    %3395 = vmatpush1.msra.mxu0 %v3178
    %3396 = vmatprep.subr.mxu0 0.0
    %3397 = vmatpush1.msra.mxu0 %v3177
    %3398 = vmatprep.subr.mxu0 0.0
    %3399 = vmatpush1.msra.mxu0 %v3176
    %3400 = vmatprep.subr.mxu0 0.0
    %3401 = vmatpush1.msra.mxu0 %v3175
    %3402 = vmatprep.subr.mxu0 0.0
    %3403 = vmatpush1.msra.mxu0 %v3174
    %3404 = vmatprep.subr.mxu0 0.0
    %3405 = vmatpush1.msra.mxu0 %v3173
    %3406 = vmatprep.subr.mxu0 0.0
    %3407 = vmatpush1.msra.mxu0 %v3172
    %3408 = vmatprep.subr.mxu0 0.0
    %3409 = vmatpush1.msra.mxu0 %v3171
    %3410 = vmatprep.subr.mxu0 0.0
    %3411 = vmatpush1.msra.mxu0 %v3170
    %3412 = vmatprep.subr.mxu0 0.0
    %3413 = vmatpush1.msra.mxu0 %v3169
    %3414 = vmatprep.subr.mxu0 0.0
    %3415 = vmatpush1.msra.mxu0 %v3168
    %3416 = vmatprep.subr.mxu0 0.0
    %3417 = vmatpush1.msra.mxu0 %v3167
    %3418 = vmatprep.subr.mxu0 0.0
    %3419 = vmatpush2.msra.mxu0 %v3198
    %3420 = vmatprep.subr.mxu0 0.0
    %3421 = vmatpush2.msra.mxu0 %v3197
    %3422 = vmatprep.subr.mxu0 0.0
    %3423 = vmatpush2.msra.mxu0 %v3196
    %3424 = vmatprep.subr.mxu0 0.0
    %3425 = vmatpush2.msra.mxu0 %v3195
    %3426 = vmatprep.subr.mxu0 0.0
    %3427 = vmatpush2.msra.mxu0 %v3194
    %3428 = vmatprep.subr.mxu0 0.0
    %3429 = vmatpush2.msra.mxu0 %v3193
    %3430 = vmatprep.subr.mxu0 0.0
    %3431 = vmatpush2.msra.mxu0 %v3192
    %3432 = vmatprep.subr.mxu0 0.0
    %3433 = vmatpush2.msra.mxu0 %v3191
    %3434 = vmatprep.subr.mxu0 0.0
    %3435 = vmatpush2.msra.mxu0 %v3190
    %3436 = vmatprep.subr.mxu0 0.0
    %3437 = vmatpush2.msra.mxu0 %v3189
    %3438 = vmatprep.subr.mxu0 0.0
    %3439 = vmatpush2.msra.mxu0 %v3188
    %3440 = vmatprep.subr.mxu0 0.0
    %3441 = vmatpush2.msra.mxu0 %v3187
    %3442 = vmatprep.subr.mxu0 0.0
    %3443 = vmatpush2.msra.mxu0 %v3186
    %3444 = vmatprep.subr.mxu0 0.0
    %3445 = vmatpush2.msra.mxu0 %v3185
    %3446 = vmatprep.subr.mxu0 0.0
    %3447 = vmatpush2.msra.mxu0 %v3184
    %3448 = vmatprep.subr.mxu0 0.0
    %3449 = vmatpush2.msra.mxu0 %v3183
    %3450 = vmatprep.mubr.f32.mxu0 %v3078
    %3451 = vmatmul.mubr.f32.gmra.mxu0 %v3077
    %v3452 = vpop.f32.mrf.mxu0
    %v3453 = vadd.f32 %v3363, %v3452
    %v3454 = vpop.f32.mrf.mxu0
    %3455 = vmatprep.mubr.f32.mxu0 %v3084
    %3456 = vmatmul.mubr.f32.gmra.mxu0 %v3083
    %v3457 = vpop.f32.mrf.mxu0
    %v3458 = vadd.f32 %v3368, %v3457
    %v3459 = vpop.f32.mrf.mxu0
    %3460 = vmatprep.mubr.f32.mxu0 %v3090
    %3461 = vmatmul.mubr.f32.gmra.mxu0 %v3089
    %v3462 = vpop.f32.mrf.mxu0
    %v3463 = vadd.f32 %v3373, %v3462
    %v3464 = vpop.f32.mrf.mxu0
    %3465 = vmatprep.mubr.f32.mxu0 %v3096
    %3466 = vmatmul.mubr.f32.gmra.mxu0 %v3095
    %v3467 = vpop.f32.mrf.mxu0
    %v3468 = vadd.f32 %v3378, %v3467
    %v3469 = vpop.f32.mrf.mxu0
    %3470 = vmatprep.mubr.f32.mxu0 %v3102
    %3471 = vmatmul.mubr.f32.gmra.mxu0 %v3101
    %v3472 = vpop.f32.mrf.mxu0
    %v3473 = vadd.f32 %v3383, %v3472
    %v3474 = vpop.f32.mrf.mxu0
    %3475 = vdwg.mxu0
    %3476 = vmax.xlane.f32.xlu0 %v3453
    %v3477 = vpop.xlane.xlu0 %3476
    %3478 = vmax.xlane.f32.xlu0 %v3458
    %v3479 = vpop.xlane.xlu0 %3478
    %3480 = vmax.xlane.f32.xlu0 %v3463
    %v3481 = vpop.xlane.xlu0 %3480
    %3482 = vmax.xlane.f32.xlu0 %v3468
    %v3483 = vpop.xlane.xlu0 %3482
    %3484 = vmax.xlane.f32.xlu0 %v3473
    %v3485 = vpop.xlane.xlu0 %3484
    %v3486 = vsub.f32 %v3453, %v3477
    %v3487 = vsub.f32 %v3458, %v3479
    %v3488 = vsub.f32 %v3463, %v3481
    %v3489 = vsub.f32 %v3468, %v3483
    %v3490 = vsub.f32 %v3473, %v3485
    %v3491 = vmul.f32 %v3486, 1.442695
    %v3492 = vpow.pop %v3491
    %v3493 = vmul.f32 %v3487, 1.442695
    %v3494 = vpow.pop %v3493
    %v3495 = vmul.f32 %v3488, 1.442695
    %v3496 = vpow.pop %v3495
    %v3497 = vmul.f32 %v3489, 1.442695
    %v3498 = vpow.pop %v3497
    %v3499 = vmul.f32 %v3490, 1.442695
    %v3500 = vpow.pop %v3499
    %3501 = vadd.xlane.f32.xlu0 %v3492
    %v3502 = vpop.xlane.xlu0 %3501
    %3503 = vadd.xlane.f32.xlu0 %v3494
    %v3504 = vpop.xlane.xlu0 %3503
    %3505 = vadd.xlane.f32.xlu0 %v3496
    %v3506 = vpop.xlane.xlu0 %3505
    %3507 = vadd.xlane.f32.xlu0 %v3498
    %v3508 = vpop.xlane.xlu0 %3507
    %3509 = vadd.xlane.f32.xlu0 %v3500
    %v3510 = vpop.xlane.xlu0 %3509
    %v3511 = vlog2.pop %v3502
    %v3512 = vmul.f32 %v3511, 0.6931472
    %v3513 = vlog2.pop %v3504
    %v3514 = vmul.f32 %v3513, 0.6931472
    %v3515 = vlog2.pop %v3506
    %v3516 = vmul.f32 %v3515, 0.6931472
    %v3517 = vlog2.pop %v3508
    %v3518 = vmul.f32 %v3517, 0.6931472
    %v3519 = vlog2.pop %v3510
    %v3520 = vmul.f32 %v3519, 0.6931472
    %v3521 = vmul.f32 %v3492, %v3486
    %v3522 = vmul.f32 %v3494, %v3487
    %v3523 = vmul.f32 %v3496, %v3488
    %v3524 = vmul.f32 %v3498, %v3489
    %v3525 = vmul.f32 %v3500, %v3490
    %3526 = vadd.xlane.f32.xlu0 %v3521
    %v3527 = vpop.xlane.xlu0 %3526
    %3528 = vadd.xlane.f32.xlu0 %v3522
    %v3529 = vpop.xlane.xlu0 %3528
    %3530 = vadd.xlane.f32.xlu0 %v3523
    %v3531 = vpop.xlane.xlu0 %3530
    %3532 = vadd.xlane.f32.xlu0 %v3524
    %v3533 = vpop.xlane.xlu0 %3532
    %3534 = vadd.xlane.f32.xlu0 %v3525
    %v3535 = vpop.xlane.xlu0 %3534
    %v3536 = vrcp.pop %v3502
    %v3537 = vmul.f32 %v3527, %v3536
    %v3538 = vrcp.pop %v3504
    %v3539 = vmul.f32 %v3529, %v3538
    %v3540 = vrcp.pop %v3506
    %v3541 = vmul.f32 %v3531, %v3540
    %v3542 = vrcp.pop %v3508
    %v3543 = vmul.f32 %v3533, %v3542
    %v3544 = vrcp.pop %v3510
    %v3545 = vmul.f32 %v3535, %v3544
    %v3546 = vsub.f32 %v3512, %v3537
    %v3547 = vsub.f32 %v3514, %v3539
    %v3548 = vsub.f32 %v3516, %v3541
    %v3549 = vsub.f32 %v3518, %v3543
    %v3550 = vsub.f32 %v3520, %v3545
    %vm3551 = vcmask 7168
    %v3552 = vsel %vm3551, %v3546, 0.0
    %3553 = vadd.xlane.f32.xlu0 %v3552
    %v3554 = vpop.xlane.xlu0 %3553
    %v3555 = vrot.slane %v3554, 4
    %v3556 = vadd.f32 %v3554, %v3555
    %v3557 = vrot.slane %v3556, 2
    %v3558 = vadd.f32 %v3556, %v3557
    %v3559 = vrot.slane %v3558, 1
    %v3560 = vadd.f32 %v3558, %v3559
    %s3561 = vtos %v3560
    %s3562 = sadd.f32 %s713, %s3561
    %v3563 = vstv %s3562
    %vm3564 = vcmask 0
    %3565 = vst.msk [vmem:[%s9] sm:$0x1] %vm3564, %v3563
    %v3566 = vsel %vm3551, %v3547, 0.0
    %3567 = vadd.xlane.f32.xlu0 %v3566
    %v3568 = vpop.xlane.xlu0 %3567
    %v3569 = vrot.slane %v3568, 4
    %v3570 = vadd.f32 %v3568, %v3569
    %v3571 = vrot.slane %v3570, 2
    %v3572 = vadd.f32 %v3570, %v3571
    %v3573 = vrot.slane %v3572, 1
    %v3574 = vadd.f32 %v3572, %v3573
    %s3575 = vtos %v3574
    %s3576 = sadd.f32 %s1291, %s3575
    %v3577 = vstv %s3576
    %3578 = vst.msk [vmem:[%s9 + $0x1] sm:$0x1] %vm3564, %v3577
    %v3579 = vsel %vm3551, %v3548, 0.0
    %3580 = vadd.xlane.f32.xlu0 %v3579
    %v3581 = vpop.xlane.xlu0 %3580
    %v3582 = vrot.slane %v3581, 4
    %v3583 = vadd.f32 %v3581, %v3582
    %v3584 = vrot.slane %v3583, 2
    %v3585 = vadd.f32 %v3583, %v3584
    %v3586 = vrot.slane %v3585, 1
    %v3587 = vadd.f32 %v3585, %v3586
    %s3588 = vtos %v3587
    %s3589 = sadd.f32 %s1866, %s3588
    %v3590 = vstv %s3589
    %3591 = vst.msk [vmem:[%s9 + $0x2] sm:$0x1] %vm3564, %v3590
    %v3592 = vsel %vm3551, %v3549, 0.0
    %3593 = vadd.xlane.f32.xlu0 %v3592
    %v3594 = vpop.xlane.xlu0 %3593
    %v3595 = vrot.slane %v3594, 4
    %v3596 = vadd.f32 %v3594, %v3595
    %v3597 = vrot.slane %v3596, 2
    %v3598 = vadd.f32 %v3596, %v3597
    %v3599 = vrot.slane %v3598, 1
    %v3600 = vadd.f32 %v3598, %v3599
    %s3601 = vtos %v3600
    %s3602 = sadd.f32 %s2441, %s3601
    %v3603 = vstv %s3602
    %3604 = vst.msk [vmem:[%s9 + $0x3] sm:$0x1] %vm3564, %v3603
    %v3605 = vsel %vm3551, %v3550, 0.0
    %3606 = vadd.xlane.f32.xlu0 %v3605
    %v3607 = vpop.xlane.xlu0 %3606
    %v3608 = vrot.slane %v3607, 4
    %v3609 = vadd.f32 %v3607, %v3608
    %v3610 = vrot.slane %v3609, 2
    %v3611 = vadd.f32 %v3609, %v3610
    %v3612 = vrot.slane %v3611, 1
    %v3613 = vadd.f32 %v3611, %v3612
    %s3614 = vtos %v3613
    %s3615 = sadd.f32 %s3016, %s3614
    %v3616 = vstv %s3615
    %3617 = vst.msk [vmem:[%s9 + $0x4] sm:$0x1] %vm3564, %v3616
    %v3618 = vld [vmem:[%s6] sm:$0x1]
    %v3620 = vlaneseq
    %v3621 = vshrl.u32 %v3620, 7
    %v3622 = vsub.s32 0, %v3621
    %v3623 = vrot.slane %v3618, %v3622
    %v3625 = vadd.f32 %v3453, %v3623
    %v3626 = vadd.f32 %v3458, %v3623
    %v3627 = vadd.f32 %v3463, %v3623
    %v3628 = vadd.f32 %v3468, %v3623
    %v3629 = vadd.f32 %v3473, %v3623
    %3630 = vst [vmem:[#allocation8] sm:$0xff] %v3625
    %3631 = vst [vmem:[#allocation8 + $0x8] sm:$0xff] %v3626
    %3632 = vst [vmem:[#allocation8 + $0x10] sm:$0xff] %v3627
    %3633 = vst [vmem:[#allocation8 + $0x18] sm:$0xff] %v3628
    %3634 = vst [vmem:[#allocation8 + $0x20] sm:$0xff] %v3629
    // Predicated region
    $region38: #{foa_loss_pallas.1} parent=1 // pred_check
      _
    $region39: #{foa_loss_pallas.1} parent=1 // pred_check_branch
      %3636 = sbr.rel (0) target = $region41
    $region40: #{foa_loss_pallas.1} parent=1 // pred_region
      %s3638 = ssub.s32 640, 640
      %3639 = vsyncadd [#allocation5], %s3638
      %s3640 = sshll.u32 [#allocation8], 4
      %s3641 = int_to_ptr.vmem [resolvable:$true] %s3640
      %3646 = dma.vmem_to_hbm [thread:$0]  %s3641, 640, %s7, [#allocation5], 128, 128, 8
    $region41: #{foa_loss_pallas.1} parent=1 // pred_fallthru
      _
    // Predicated region
    $region42: #{foa_loss_pallas.1} parent=1 // pred_check
      _
    $region43: #{foa_loss_pallas.1} parent=1 // pred_check_branch
      %3648 = sbr.rel (0) target = $region45
    $region44: #{foa_loss_pallas.1} parent=1 // pred_region
      %s3650 = ssub.s32 768, 768
      %3651 = vsyncadd [#allocation10], %s3650
      %s3653 = sshll.u32 [#allocation9], 4
      %s3654 = int_to_ptr.vmem [resolvable:$true] %s3653
      %3656 = dma.vmem_to_hbm [thread:$0]  %s3654, 768, %s8, [#allocation10]
    $region45: #{foa_loss_pallas.1} parent=1 // pred_fallthru
      _
    // Predicated region
    $region46: #{foa_loss_pallas.1} parent=1 // pred_check
      _
    $region47: #{foa_loss_pallas.1} parent=1 // pred_check_branch
      %3658 = sbr.rel (0) target = $region49
    $region48: #{foa_loss_pallas.1} parent=1 // pred_region
      _
    $region49: #{foa_loss_pallas.1} parent=1 // pred_fallthru
      _
    // Predicated region
    $region50: #{foa_loss_pallas.1} parent=1 // pred_check
      _
    $region51: #{foa_loss_pallas.1} parent=1 // pred_check_branch
      %3660 = sbr.rel (0) target = $region53
    $region52: #{foa_loss_pallas.1} parent=1 // pred_region
      %3661 = dma.done [#allocation5], 640
    $region53: #{foa_loss_pallas.1} parent=1 // pred_fallthru
      _
    // Predicated region
    $region54: #{foa_loss_pallas.1} parent=1 // pred_check
      _
    $region55: #{foa_loss_pallas.1} parent=1 // pred_check_branch
      %3663 = sbr.rel (0) target = $region57
    $region56: #{foa_loss_pallas.1} parent=1 // pred_region
      %3664 = dma.done [#allocation10], 768
    $region57: #{foa_loss_pallas.1} parent=1 // pred_fallthru
      _
    // Predicated region
    $region58: #{foa_loss_pallas.1} parent=1 // pred_check
      _
    $region59: #{foa_loss_pallas.1} parent=1 // pred_check_branch
      %3666 = sbr.rel (0) target = $region61
    $region60: #{foa_loss_pallas.1} parent=1 // pred_region
      _
    $region61: #{foa_loss_pallas.1} parent=1 // pred_fallthru
      _
    %3667 = vsyncpa [#allocation4], 1
    %3668 = vsyncpa [#allocation7], 1
    %3669 = vsyncpa [#allocation5], 1
    %3670 = vsyncpa [#allocation10], 1

</llo_original>
